<compile_context>
chip_gen: v7x
topology: tpu7x:2x2x1
jax: 0.10.0
libtpu: 0.0.40
codegen_flags: <defaults>
</compile_context>

<pallas_src>
import jax
import jax.numpy as jnp
from jax import lax
from jax.experimental import pallas as pl
from jax.experimental.pallas import tpu as pltpu

N = 23  # hard-coded by the module (parameters are (23, 23, 23))

# Static leading-axis chunks: 8 + 8 + 7 = 23 rows.
_CHUNKS = ((0, 8), (8, 8), (16, 7))


def mygat2_kernel(adj_ref, data_ref, dataT_ref, w1t_ref, w2_ref, out_ref):
    """Fully fused MyGAT2 forward.

    adj   : (N, N)      adjacency (diagonal forced to 1 in-kernel)
    data  : (N, N)      data[i, m]
    dataT : (N, N)      dataT[i, m] = data[m, i]
    w1t   : (N, N, N)   w1t[k, i, m] = W1[i, k, m]   (axes 0,1 swapped in XLA)
    w2    : (N, N, N)   W2[i, k, m]
    out   : (N, N)      out[r, c] = 0.5 * (x1[r, c] + x2[r, c])
    """
    # adj[i][i] = 1, then "kept" entries are adj_eff != 0.
    row = lax.broadcasted_iota(jnp.int32, (N, N), 0)
    col = lax.broadcasted_iota(jnp.int32, (N, N), 1)
    keep = jnp.logical_or(row == col, adj_ref[...] != 0.0)   # (N, N), indexed (i, j)

    data = data_ref[...]     # (N, N)
    dataT = dataT_ref[...]   # (N, N)

    # Process the output 8/8/7 rows at a time; each chunk touches only a
    # (sz, N, N) slab of each weight tensor, so both big tensors are never
    # live at once (<= ~25 vregs of W data per tensor per chunk).
    for c0, sz in _CHUNKS:
        # ---- tensor 1: x1[k, i] = sum_m att1[i, k, m] * data[m, i] --------
        # With w1t[k, i, m] = W1[i, k, m], chunk rows are output rows k.
        w1c = w1t_ref[pl.ds(c0, sz)]                          # (sz, N, N)
        mv1 = jnp.min(w1c, axis=-1, keepdims=True)            # min over m
        mv1 = jnp.where(mv1 > 0.0, 0.0, mv1)
        a1 = w1c - mv1
        # att1[:, i, j] = 0 where adj[i, j] == 0  ->  mask indexed (k, m) here.
        a1 = jnp.where(keep[c0:c0 + sz, :][:, None, :], a1, 0.0)
        z1 = jnp.sum(a1, axis=-1)                             # (sz, N) row sums
        num1 = jnp.sum(a1 * dataT[None, :, :], axis=-1)       # (sz, N) = x1 rows (unnormalized)
        s1 = num1 / z1                                        # normalize after the sum

        # ---- tensor 2: x2[i, k] = sum_m att2[i, k, m] * data[i, m] --------
        # Chunk rows are output rows i.
        w2c = w2_ref[pl.ds(c0, sz)]                           # (sz, N, N)
        mv2 = jnp.min(w2c, axis=-1, keepdims=True)
        mv2 = jnp.where(mv2 > 0.0, 0.0, mv2)
        a2 = w2c - mv2
        # att2[:, i, j] = 0 where adj[i, j] == 0  ->  mask indexed (k, m) here.
        a2 = jnp.where(keep[None, :, :], a2, 0.0)
        z2 = jnp.sum(a2, axis=-1)                             # (sz, N)
        num2 = jnp.sum(a2 * data[c0:c0 + sz, :][:, None, :], axis=-1)
        s2 = num2 / z2                                        # (sz, N) = x2 rows

        # x = (x1 + x2) / 2, written once per chunk of output rows.
        out_ref[pl.ds(c0, sz), :] = 0.5 * (s1 + s2)


@jax.jit
def mygat2_forward(flow_x, adj, W1, W2):
    # data = data['flow_x'].squeeze(-1).squeeze(0)  -> (23, 23)
    data = flow_x[0, :, :, 0].astype(jnp.float32)
    dataT = jnp.transpose(data)
    # Swap the first two axes of W1 in XLA so the kernel needs no transposes:
    # w1t[k, i, m] = W1[i, k, m]  (48 KB copy, fused into the input DMA path).
    W1t = jnp.swapaxes(W1, 0, 1)

    vmem = pl.BlockSpec(memory_space=pltpu.MemorySpace.VMEM)
    x = pl.pallas_call(
        mygat2_kernel,
        out_shape=jax.ShapeDtypeStruct((N, N), jnp.float32),
        in_specs=[vmem, vmem, vmem, vmem, vmem],
        out_specs=vmem,
    )(adj.astype(jnp.float32), data, dataT, W1t, W2)

    # x.unsqueeze(0).unsqueeze(-1)
    return x[None, :, :, None]                                # (1, 23, 23, 1)


def mygat2_reference(flow_x, adj, W1, W2):
    """Pure-JAX reference of the PyTorch MyGAT2.forward."""
    data = flow_x[0, :, :, 0].astype(jnp.float32)
    idx = jnp.arange(N)
    adj_eff = adj.at[idx, idx].set(1.0)
    mask = adj_eff == 0.0

    def norm(W):
        mv = jnp.min(W, axis=-1, keepdims=True)
        mv = jnp.where(mv > 0.0, 0.0, mv)
        att = jnp.where(mask[None, :, :], 0.0, W - mv)
        return att / jnp.sum(att, axis=-1, keepdims=True)

    att1 = norm(W1)
    att2 = norm(W2)
    # x1 = cat([att1[i] @ data[:, i] for i], dim=1)        -> x1[k, i]
    x1 = jnp.einsum('ikm,mi->ki', att1, data)
    # x2 = cat([att2[i] @ data.t()[:, i] for i], dim=1).t() -> x2[i, k]
    x2 = jnp.einsum('ikm,im->ik', att2, data)
    x = 0.5 * (x1 + x2)
    return x[None, :, :, None]


if __name__ == "__main__":
    key = jax.random.PRNGKey(0)
    k_w1, k_w2, k_x, k_adj = jax.random.split(key, 4)

    # Parameter-shaped inputs (the module hard-codes 23 nodes).
    W1 = jax.random.uniform(k_w1, (N, N, N), jnp.float32, minval=-1.0, maxval=1.0)
    W2 = jax.random.uniform(k_w2, (N, N, N), jnp.float32, minval=-1.0, maxval=1.0)
    # data['flow_x'] : (1, 23, 23, 1)  (leading batch and trailing dim squeezed)
    flow_x = jax.random.uniform(k_x, (1, N, N, 1), jnp.float32)
    adj = (jax.random.uniform(k_adj, (N, N)) > 0.5).astype(jnp.float32)

    out = jax.block_until_ready(mygat2_forward(flow_x, adj, W1, W2))
    ref = mygat2_reference(flow_x, adj, W1, W2)

    assert out.shape == (1, N, N, 1), out.shape
    assert jnp.allclose(out, ref, atol=1e-3, rtol=1e-3), float(jnp.max(jnp.abs(out - ref)))
    print("KERNEL_OK")
</pallas_src>

<mosaic_0001>
module attributes {stable_mosaic.version = 11 : i64} {
  func.func @mygat2_kernel(%arg0: memref<23x23xf32, #tpu.memory_space<vmem>>, %arg1: memref<23x23xf32, #tpu.memory_space<vmem>>, %arg2: memref<23x23xf32, #tpu.memory_space<vmem>>, %arg3: memref<23x23x23xf32, #tpu.memory_space<vmem>>, %arg4: memref<23x23x23xf32, #tpu.memory_space<vmem>>, %arg5: memref<23x23xf32, #tpu.memory_space<vmem>>) attributes {dimension_semantics = [], scalar_prefetch = 0 : i64, scratch_operands = 0 : i64, tpu.core_type = #tpu.core_type<tc>} {
    %0 = tpu.iota {dimensions = array<i32: 0>} : vector<23x23xi32>
    %1 = tpu.iota {dimensions = array<i32: 1>} : vector<23x23xi32>
    %2 = arith.cmpi eq, %0, %1 : vector<23x23xi32>
    %c0 = arith.constant 0 : index
    %c0_0 = arith.constant 0 : index
    %3 = vector.load %arg0[%c0, %c0_0] : memref<23x23xf32, #tpu.memory_space<vmem>>, vector<23x23xf32>
    %cst = arith.constant 0.000000e+00 : f32
    %4 = vector.broadcast %cst : f32 to vector<23x23xf32>
    %5 = arith.cmpf one, %3, %4 : vector<23x23xf32>
    %6 = arith.ori %2, %5 : vector<23x23xi1>
    %c0_1 = arith.constant 0 : index
    %c0_2 = arith.constant 0 : index
    %7 = vector.load %arg1[%c0_1, %c0_2] : memref<23x23xf32, #tpu.memory_space<vmem>>, vector<23x23xf32>
    %c0_3 = arith.constant 0 : index
    %c0_4 = arith.constant 0 : index
    %8 = vector.load %arg2[%c0_3, %c0_4] : memref<23x23xf32, #tpu.memory_space<vmem>>, vector<23x23xf32>
    %c0_5 = arith.constant 0 : index
    %c0_6 = arith.constant 0 : index
    %c0_7 = arith.constant 0 : index
    %9 = vector.load %arg3[%c0_5, %c0_6, %c0_7] : memref<23x23x23xf32, #tpu.memory_space<vmem>>, vector<8x23x23xf32>
    %cst_8 = arith.constant dense<0x7F800000> : vector<8x23xf32>
    %10 = vector.multi_reduction <minimumf>, %9, %cst_8 [2] : vector<8x23x23xf32> to vector<8x23xf32>
    %11 = vector.shape_cast %10 : vector<8x23xf32> to vector<8x23x1xf32>
    %cst_9 = arith.constant 0.000000e+00 : f32
    %12 = vector.broadcast %cst_9 : f32 to vector<8x23x1xf32>
    %13 = arith.cmpf ogt, %11, %12 : vector<8x23x1xf32>
    %cst_10 = arith.constant 0.000000e+00 : f32
    %14 = vector.broadcast %cst_10 : f32 to vector<8x23x1xf32>
    %15 = arith.select %13, %14, %11 : vector<8x23x1xi1>, vector<8x23x1xf32>
    %16 = vector.broadcast %15 : vector<8x23x1xf32> to vector<8x23x23xf32>
    %17 = arith.subf %9, %16 : vector<8x23x23xf32>
    %18 = vector.extract_strided_slice %6 {offsets = [0, 0], sizes = [8, 23], strides = [1, 1]} : vector<23x23xi1> to vector<8x23xi1>
    %19 = vector.shape_cast %18 : vector<8x23xi1> to vector<8x1x23xi1>
    %cst_11 = arith.constant 0.000000e+00 : f32
    %20 = vector.shape_cast %19 : vector<8x1x23xi1> to vector<8x1x23xi1>
    %21 = vector.broadcast %20 : vector<8x1x23xi1> to vector<8x23x23xi1>
    %22 = vector.broadcast %cst_11 : f32 to vector<8x23x23xf32>
    %23 = arith.select %21, %17, %22 : vector<8x23x23xi1>, vector<8x23x23xf32>
    %cst_12 = arith.constant dense<0.000000e+00> : vector<8x23xf32>
    %24 = vector.multi_reduction <add>, %23, %cst_12 [2] : vector<8x23x23xf32> to vector<8x23xf32>
    %25 = vector.shape_cast %8 : vector<23x23xf32> to vector<1x23x23xf32>
    %26 = vector.broadcast %25 : vector<1x23x23xf32> to vector<8x23x23xf32>
    %27 = arith.mulf %23, %26 : vector<8x23x23xf32>
    %cst_13 = arith.constant dense<0.000000e+00> : vector<8x23xf32>
    %28 = vector.multi_reduction <add>, %27, %cst_13 [2] : vector<8x23x23xf32> to vector<8x23xf32>
    %29 = arith.divf %28, %24 : vector<8x23xf32>
    %c0_14 = arith.constant 0 : index
    %c0_15 = arith.constant 0 : index
    %c0_16 = arith.constant 0 : index
    %30 = vector.load %arg4[%c0_14, %c0_15, %c0_16] : memref<23x23x23xf32, #tpu.memory_space<vmem>>, vector<8x23x23xf32>
    %cst_17 = arith.constant dense<0x7F800000> : vector<8x23xf32>
    %31 = vector.multi_reduction <minimumf>, %30, %cst_17 [2] : vector<8x23x23xf32> to vector<8x23xf32>
    %32 = vector.shape_cast %31 : vector<8x23xf32> to vector<8x23x1xf32>
    %cst_18 = arith.constant 0.000000e+00 : f32
    %33 = vector.broadcast %cst_18 : f32 to vector<8x23x1xf32>
    %34 = arith.cmpf ogt, %32, %33 : vector<8x23x1xf32>
    %cst_19 = arith.constant 0.000000e+00 : f32
    %35 = vector.broadcast %cst_19 : f32 to vector<8x23x1xf32>
    %36 = arith.select %34, %35, %32 : vector<8x23x1xi1>, vector<8x23x1xf32>
    %37 = vector.broadcast %36 : vector<8x23x1xf32> to vector<8x23x23xf32>
    %38 = arith.subf %30, %37 : vector<8x23x23xf32>
    %39 = vector.shape_cast %6 : vector<23x23xi1> to vector<1x23x23xi1>
    %cst_20 = arith.constant 0.000000e+00 : f32
    %40 = vector.shape_cast %39 : vector<1x23x23xi1> to vector<1x23x23xi1>
    %41 = vector.broadcast %40 : vector<1x23x23xi1> to vector<8x23x23xi1>
    %42 = vector.broadcast %cst_20 : f32 to vector<8x23x23xf32>
    %43 = arith.select %41, %38, %42 : vector<8x23x23xi1>, vector<8x23x23xf32>
    %cst_21 = arith.constant dense<0.000000e+00> : vector<8x23xf32>
    %44 = vector.multi_reduction <add>, %43, %cst_21 [2] : vector<8x23x23xf32> to vector<8x23xf32>
    %45 = vector.extract_strided_slice %7 {offsets = [0, 0], sizes = [8, 23], strides = [1, 1]} : vector<23x23xf32> to vector<8x23xf32>
    %46 = vector.shape_cast %45 : vector<8x23xf32> to vector<8x1x23xf32>
    %47 = vector.broadcast %46 : vector<8x1x23xf32> to vector<8x23x23xf32>
    %48 = arith.mulf %43, %47 : vector<8x23x23xf32>
    %cst_22 = arith.constant dense<0.000000e+00> : vector<8x23xf32>
    %49 = vector.multi_reduction <add>, %48, %cst_22 [2] : vector<8x23x23xf32> to vector<8x23xf32>
    %50 = arith.divf %49, %44 : vector<8x23xf32>
    %51 = arith.addf %29, %50 : vector<8x23xf32>
    %cst_23 = arith.constant 5.000000e-01 : f32
    %52 = vector.broadcast %cst_23 : f32 to vector<8x23xf32>
    %53 = arith.mulf %52, %51 : vector<8x23xf32>
    %c0_24 = arith.constant 0 : index
    %c0_25 = arith.constant 0 : index
    %54 = vector.load %arg5[%c0_24, %c0_25] : memref<23x23xf32, #tpu.memory_space<vmem>>, vector<8x23xf32>
    tpu.vector_store %arg5[%c0_24, %c0_25], %53 {strides = array<i32>} : memref<23x23xf32, #tpu.memory_space<vmem>>, vector<8x23xf32>,
    %c8 = arith.constant 8 : index
    %c0_26 = arith.constant 0 : index
    %c0_27 = arith.constant 0 : index
    %55 = vector.load %arg3[%c8, %c0_26, %c0_27] : memref<23x23x23xf32, #tpu.memory_space<vmem>>, vector<8x23x23xf32>
    %cst_28 = arith.constant dense<0x7F800000> : vector<8x23xf32>
    %56 = vector.multi_reduction <minimumf>, %55, %cst_28 [2] : vector<8x23x23xf32> to vector<8x23xf32>
    %57 = vector.shape_cast %56 : vector<8x23xf32> to vector<8x23x1xf32>
    %cst_29 = arith.constant 0.000000e+00 : f32
    %58 = vector.broadcast %cst_29 : f32 to vector<8x23x1xf32>
    %59 = arith.cmpf ogt, %57, %58 : vector<8x23x1xf32>
    %cst_30 = arith.constant 0.000000e+00 : f32
    %60 = vector.broadcast %cst_30 : f32 to vector<8x23x1xf32>
    %61 = arith.select %59, %60, %57 : vector<8x23x1xi1>, vector<8x23x1xf32>
    %62 = vector.broadcast %61 : vector<8x23x1xf32> to vector<8x23x23xf32>
    %63 = arith.subf %55, %62 : vector<8x23x23xf32>
    %64 = vector.extract_strided_slice %6 {offsets = [8, 0], sizes = [8, 23], strides = [1, 1]} : vector<23x23xi1> to vector<8x23xi1>
    %65 = vector.shape_cast %64 : vector<8x23xi1> to vector<8x1x23xi1>
    %cst_31 = arith.constant 0.000000e+00 : f32
    %66 = vector.shape_cast %65 : vector<8x1x23xi1> to vector<8x1x23xi1>
    %67 = vector.broadcast %66 : vector<8x1x23xi1> to vector<8x23x23xi1>
    %68 = vector.broadcast %cst_31 : f32 to vector<8x23x23xf32>
    %69 = arith.select %67, %63, %68 : vector<8x23x23xi1>, vector<8x23x23xf32>
    %cst_32 = arith.constant dense<0.000000e+00> : vector<8x23xf32>
    %70 = vector.multi_reduction <add>, %69, %cst_32 [2] : vector<8x23x23xf32> to vector<8x23xf32>
    %71 = vector.shape_cast %8 : vector<23x23xf32> to vector<1x23x23xf32>
    %72 = vector.broadcast %71 : vector<1x23x23xf32> to vector<8x23x23xf32>
    %73 = arith.mulf %69, %72 : vector<8x23x23xf32>
    %cst_33 = arith.constant dense<0.000000e+00> : vector<8x23xf32>
    %74 = vector.multi_reduction <add>, %73, %cst_33 [2] : vector<8x23x23xf32> to vector<8x23xf32>
    %75 = arith.divf %74, %70 : vector<8x23xf32>
    %c8_34 = arith.constant 8 : index
    %c0_35 = arith.constant 0 : index
    %c0_36 = arith.constant 0 : index
    %76 = vector.load %arg4[%c8_34, %c0_35, %c0_36] : memref<23x23x23xf32, #tpu.memory_space<vmem>>, vector<8x23x23xf32>
    %cst_37 = arith.constant dense<0x7F800000> : vector<8x23xf32>
    %77 = vector.multi_reduction <minimumf>, %76, %cst_37 [2] : vector<8x23x23xf32> to vector<8x23xf32>
    %78 = vector.shape_cast %77 : vector<8x23xf32> to vector<8x23x1xf32>
    %cst_38 = arith.constant 0.000000e+00 : f32
    %79 = vector.broadcast %cst_38 : f32 to vector<8x23x1xf32>
    %80 = arith.cmpf ogt, %78, %79 : vector<8x23x1xf32>
    %cst_39 = arith.constant 0.000000e+00 : f32
    %81 = vector.broadcast %cst_39 : f32 to vector<8x23x1xf32>
    %82 = arith.select %80, %81, %78 : vector<8x23x1xi1>, vector<8x23x1xf32>
    %83 = vector.broadcast %82 : vector<8x23x1xf32> to vector<8x23x23xf32>
    %84 = arith.subf %76, %83 : vector<8x23x23xf32>
    %85 = vector.shape_cast %6 : vector<23x23xi1> to vector<1x23x23xi1>
    %cst_40 = arith.constant 0.000000e+00 : f32
    %86 = vector.shape_cast %85 : vector<1x23x23xi1> to vector<1x23x23xi1>
    %87 = vector.broadcast %86 : vector<1x23x23xi1> to vector<8x23x23xi1>
    %88 = vector.broadcast %cst_40 : f32 to vector<8x23x23xf32>
    %89 = arith.select %87, %84, %88 : vector<8x23x23xi1>, vector<8x23x23xf32>
    %cst_41 = arith.constant dense<0.000000e+00> : vector<8x23xf32>
    %90 = vector.multi_reduction <add>, %89, %cst_41 [2] : vector<8x23x23xf32> to vector<8x23xf32>
    %91 = vector.extract_strided_slice %7 {offsets = [8, 0], sizes = [8, 23], strides = [1, 1]} : vector<23x23xf32> to vector<8x23xf32>
    %92 = vector.shape_cast %91 : vector<8x23xf32> to vector<8x1x23xf32>
    %93 = vector.broadcast %92 : vector<8x1x23xf32> to vector<8x23x23xf32>
    %94 = arith.mulf %89, %93 : vector<8x23x23xf32>
    %cst_42 = arith.constant dense<0.000000e+00> : vector<8x23xf32>
    %95 = vector.multi_reduction <add>, %94, %cst_42 [2] : vector<8x23x23xf32> to vector<8x23xf32>
    %96 = arith.divf %95, %90 : vector<8x23xf32>
    %97 = arith.addf %75, %96 : vector<8x23xf32>
    %cst_43 = arith.constant 5.000000e-01 : f32
    %98 = vector.broadcast %cst_43 : f32 to vector<8x23xf32>
    %99 = arith.mulf %98, %97 : vector<8x23xf32>
    %c8_44 = arith.constant 8 : index
    %c0_45 = arith.constant 0 : index
    %100 = vector.load %arg5[%c8_44, %c0_45] : memref<23x23xf32, #tpu.memory_space<vmem>>, vector<8x23xf32>
    tpu.vector_store %arg5[%c8_44, %c0_45], %99 {strides = array<i32>} : memref<23x23xf32, #tpu.memory_space<vmem>>, vector<8x23xf32>,
    %c16 = arith.constant 16 : index
    %c0_46 = arith.constant 0 : index
    %c0_47 = arith.constant 0 : index
    %101 = vector.load %arg3[%c16, %c0_46, %c0_47] : memref<23x23x23xf32, #tpu.memory_space<vmem>>, vector<7x23x23xf32>
    %cst_48 = arith.constant dense<0x7F800000> : vector<7x23xf32>
    %102 = vector.multi_reduction <minimumf>, %101, %cst_48 [2] : vector<7x23x23xf32> to vector<7x23xf32>
    %103 = vector.shape_cast %102 : vector<7x23xf32> to vector<7x23x1xf32>
    %cst_49 = arith.constant 0.000000e+00 : f32
    %104 = vector.broadcast %cst_49 : f32 to vector<7x23x1xf32>
    %105 = arith.cmpf ogt, %103, %104 : vector<7x23x1xf32>
    %cst_50 = arith.constant 0.000000e+00 : f32
    %106 = vector.broadcast %cst_50 : f32 to vector<7x23x1xf32>
    %107 = arith.select %105, %106, %103 : vector<7x23x1xi1>, vector<7x23x1xf32>
    %108 = vector.broadcast %107 : vector<7x23x1xf32> to vector<7x23x23xf32>
    %109 = arith.subf %101, %108 : vector<7x23x23xf32>
    %110 = vector.extract_strided_slice %6 {offsets = [16, 0], sizes = [7, 23], strides = [1, 1]} : vector<23x23xi1> to vector<7x23xi1>
    %111 = vector.shape_cast %110 : vector<7x23xi1> to vector<7x1x23xi1>
    %cst_51 = arith.constant 0.000000e+00 : f32
    %112 = vector.shape_cast %111 : vector<7x1x23xi1> to vector<7x1x23xi1>
    %113 = vector.broadcast %112 : vector<7x1x23xi1> to vector<7x23x23xi1>
    %114 = vector.broadcast %cst_51 : f32 to vector<7x23x23xf32>
    %115 = arith.select %113, %109, %114 : vector<7x23x23xi1>, vector<7x23x23xf32>
    %cst_52 = arith.constant dense<0.000000e+00> : vector<7x23xf32>
    %116 = vector.multi_reduction <add>, %115, %cst_52 [2] : vector<7x23x23xf32> to vector<7x23xf32>
    %117 = vector.shape_cast %8 : vector<23x23xf32> to vector<1x23x23xf32>
    %118 = vector.broadcast %117 : vector<1x23x23xf32> to vector<7x23x23xf32>
    %119 = arith.mulf %115, %118 : vector<7x23x23xf32>
    %cst_53 = arith.constant dense<0.000000e+00> : vector<7x23xf32>
    %120 = vector.multi_reduction <add>, %119, %cst_53 [2] : vector<7x23x23xf32> to vector<7x23xf32>
    %121 = arith.divf %120, %116 : vector<7x23xf32>
    %c16_54 = arith.constant 16 : index
    %c0_55 = arith.constant 0 : index
    %c0_56 = arith.constant 0 : index
    %122 = vector.load %arg4[%c16_54, %c0_55, %c0_56] : memref<23x23x23xf32, #tpu.memory_space<vmem>>, vector<7x23x23xf32>
    %cst_57 = arith.constant dense<0x7F800000> : vector<7x23xf32>
    %123 = vector.multi_reduction <minimumf>, %122, %cst_57 [2] : vector<7x23x23xf32> to vector<7x23xf32>
    %124 = vector.shape_cast %123 : vector<7x23xf32> to vector<7x23x1xf32>
    %cst_58 = arith.constant 0.000000e+00 : f32
    %125 = vector.broadcast %cst_58 : f32 to vector<7x23x1xf32>
    %126 = arith.cmpf ogt, %124, %125 : vector<7x23x1xf32>
    %cst_59 = arith.constant 0.000000e+00 : f32
    %127 = vector.broadcast %cst_59 : f32 to vector<7x23x1xf32>
    %128 = arith.select %126, %127, %124 : vector<7x23x1xi1>, vector<7x23x1xf32>
    %129 = vector.broadcast %128 : vector<7x23x1xf32> to vector<7x23x23xf32>
    %130 = arith.subf %122, %129 : vector<7x23x23xf32>
    %131 = vector.shape_cast %6 : vector<23x23xi1> to vector<1x23x23xi1>
    %cst_60 = arith.constant 0.000000e+00 : f32
    %132 = vector.shape_cast %131 : vector<1x23x23xi1> to vector<1x23x23xi1>
    %133 = vector.broadcast %132 : vector<1x23x23xi1> to vector<7x23x23xi1>
    %134 = vector.broadcast %cst_60 : f32 to vector<7x23x23xf32>
    %135 = arith.select %133, %130, %134 : vector<7x23x23xi1>, vector<7x23x23xf32>
    %cst_61 = arith.constant dense<0.000000e+00> : vector<7x23xf32>
    %136 = vector.multi_reduction <add>, %135, %cst_61 [2] : vector<7x23x23xf32> to vector<7x23xf32>
    %137 = vector.extract_strided_slice %7 {offsets = [16, 0], sizes = [7, 23], strides = [1, 1]} : vector<23x23xf32> to vector<7x23xf32>
    %138 = vector.shape_cast %137 : vector<7x23xf32> to vector<7x1x23xf32>
    %139 = vector.broadcast %138 : vector<7x1x23xf32> to vector<7x23x23xf32>
    %140 = arith.mulf %135, %139 : vector<7x23x23xf32>
    %cst_62 = arith.constant dense<0.000000e+00> : vector<7x23xf32>
    %141 = vector.multi_reduction <add>, %140, %cst_62 [2] : vector<7x23x23xf32> to vector<7x23xf32>
    %142 = arith.divf %141, %136 : vector<7x23xf32>
    %143 = arith.addf %121, %142 : vector<7x23xf32>
    %cst_63 = arith.constant 5.000000e-01 : f32
    %144 = vector.broadcast %cst_63 : f32 to vector<7x23xf32>
    %145 = arith.mulf %144, %143 : vector<7x23xf32>
    %c16_64 = arith.constant 16 : index
    %c0_65 = arith.constant 0 : index
    %146 = vector.load %arg5[%c16_64, %c0_65] : memref<23x23xf32, #tpu.memory_space<vmem>>, vector<7x23xf32>
    tpu.vector_store %arg5[%c16_64, %c0_65], %145 {strides = array<i32>} : memref<23x23xf32, #tpu.memory_space<vmem>>, vector<7x23xf32>,
    return
  }
}

</mosaic_0001>

<llo_original>
// kernel: mygat2_forward.1
$region0: #{mygat2_forward.1}
  #allocation0 [shape = 'u32[]', space=smem, size = 0x4, offset = 0x4, fixed_abs, tag = 'smem constant byte address 0x4 - core index']
  #allocation1 [shape = 'u32[144,128]{1,0:T(1,128)}', space=vmem, size = 0x12000, scoped, tag = 'internal scratch']
  %s0 = inlined_call_operand.vmem [shape: f32[23,23], index: 0, kind: input, shape index: {}]
  %s1 = inlined_call_operand.vmem [shape: f32[23,23], index: 1, kind: input, shape index: {}]
  %s2 = inlined_call_operand.vmem [shape: f32[23,23], index: 2, kind: input, shape index: {}]
  %s3 = inlined_call_operand.vmem [shape: f32[23,23,23], index: 3, kind: input, shape index: {}]
  %s4 = inlined_call_operand.vmem [shape: f32[23,23,23], index: 4, kind: input, shape index: {}]
  %s5 = inlined_call_operand.vmem [shape: f32[23,23], index: 5, kind: output, shape index: {}]
  %s6 = sld [smem:[#allocation0]]
  $region30: #{mygat2_forward.1} parent=0
    _
  %s8 = ssub.s32 1, %s6
  %s9 = scalar_select 0, %s8, %s6
  // Predicated region
  $region2: #{mygat2_forward.1} parent=0 // pred_check
    _
  $region3: #{mygat2_forward.1} parent=0 // pred_check_branch
    %11 = sbr.rel (0) target = $region5
  $region4: #{mygat2_forward.1} parent=0 // pred_region
    _
  $region5: #{mygat2_forward.1} parent=0 // pred_fallthru
    _
  // Predicated region
  $region6: #{mygat2_forward.1} parent=0 // pred_check
    _
  $region7: #{mygat2_forward.1} parent=0 // pred_check_branch
    %13 = sbr.rel (0) target = $region9
  $region8: #{mygat2_forward.1} parent=0 // pred_region
    _
  $region9: #{mygat2_forward.1} parent=0 // pred_fallthru
    _
  // Predicated region
  $region10: #{mygat2_forward.1} parent=0 // pred_check
    _
  $region11: #{mygat2_forward.1} parent=0 // pred_check_branch
    %15 = sbr.rel (0) target = $region13
  $region12: #{mygat2_forward.1} parent=0 // pred_region
    _
  $region13: #{mygat2_forward.1} parent=0 // pred_fallthru
    _
  // Predicated region
  $region14: #{mygat2_forward.1} parent=0 // pred_check
    _
  $region15: #{mygat2_forward.1} parent=0 // pred_check_branch
    %17 = sbr.rel (0) target = $region17
  $region16: #{mygat2_forward.1} parent=0 // pred_region
    _
  $region17: #{mygat2_forward.1} parent=0 // pred_fallthru
    _
  // Predicated region
  $region18: #{mygat2_forward.1} parent=0 // pred_check
    _
  $region19: #{mygat2_forward.1} parent=0 // pred_check_branch
    %19 = sbr.rel (0) target = $region21
  $region20: #{mygat2_forward.1} parent=0 // pred_region
    _
  $region21: #{mygat2_forward.1} parent=0 // pred_fallthru
    _
  %v20 = vlaneseq
  %v21 = vshrl.u32 %v20, 7
  %v22 = vadd.s32 %v21, 8
  %v23 = vadd.s32 %v21, 16
  %v24 = vlaneseq
  %v25 = vand.u32 %v24, 127
  %vm26 = vcmp.eq.s32.totalorder %v21, %v25
  %vm27 = vcmp.eq.s32.totalorder %v22, %v25
  %vm28 = vcmp.eq.s32.totalorder %v23, %v25
  %v29 = vld [vmem:[%s0] sm:$0xff]
  %v30 = vld [vmem:[%s0 + $0x8] sm:$0xff]
  %v31 = vld [vmem:[%s0 + $0x10] sm:$0x7f]
  %vm32 = vcmp.ne.f32.partialorder %v29, 0.0
  %vm33 = vcmp.ne.f32.partialorder %v30, 0.0
  %vm34 = vcmp.ne.f32.partialorder %v31, 0.0
  %vm35 = vmor %vm26, %vm32
  %vm36 = vmor %vm27, %vm33
  %vm37 = vmor %vm28, %vm34
  %v38 = vld [vmem:[%s1] sm:$0xff]
  %v39 = vld [vmem:[%s1 + $0x8] sm:$0xff]
  %v40 = vld [vmem:[%s1 + $0x10] sm:$0x7f]
  %v41 = vld [vmem:[%s2] sm:$0xff]
  %v42 = vld [vmem:[%s2 + $0x8] sm:$0xff]
  %v43 = vld [vmem:[%s2 + $0x10] sm:$0x7f]
  %v44 = vld [vmem:[%s3] sm:$0xff]
  %v45 = vld [vmem:[%s3 + $0x8] sm:$0xff]
  %v46 = vld [vmem:[%s3 + $0x10] sm:$0x7f]
  %v47 = vld [vmem:[%s3 + $0x18] sm:$0xff]
  %v48 = vld [vmem:[%s3 + $0x20] sm:$0xff]
  %v49 = vld [vmem:[%s3 + $0x28] sm:$0x7f]
  %v50 = vld [vmem:[%s3 + $0x30] sm:$0xff]
  %v51 = vld [vmem:[%s3 + $0x38] sm:$0xff]
  %v52 = vld [vmem:[%s3 + $0x40] sm:$0x7f]
  %v53 = vld [vmem:[%s3 + $0x48] sm:$0xff]
  %v54 = vld [vmem:[%s3 + $0x50] sm:$0xff]
  %v55 = vld [vmem:[%s3 + $0x58] sm:$0x7f]
  %v56 = vld [vmem:[%s3 + $0x60] sm:$0xff]
  %v57 = vld [vmem:[%s3 + $0x68] sm:$0xff]
  %v58 = vld [vmem:[%s3 + $0x70] sm:$0x7f]
  %v59 = vld [vmem:[%s3 + $0x78] sm:$0xff]
  %v60 = vld [vmem:[%s3 + $0x80] sm:$0xff]
  %v61 = vld [vmem:[%s3 + $0x88] sm:$0x7f]
  %v62 = vld [vmem:[%s3 + $0x90] sm:$0xff]
  %v63 = vld [vmem:[%s3 + $0x98] sm:$0xff]
  %v64 = vld [vmem:[%s3 + $0xa0] sm:$0x7f]
  %v65 = vld [vmem:[%s3 + $0xa8] sm:$0xff]
  %v66 = vld [vmem:[%s3 + $0xb0] sm:$0xff]
  %v67 = vld [vmem:[%s3 + $0xb8] sm:$0x7f]
  %vm68 = vcmask 187392
  %v69 = vsel %vm68, %v44, inf
  %70 = vmin.xlane.f32.xlu0 %v69
  %v71 = vpop.xlane.xlu0 %70
  %v72 = vsel %vm68, %v45, inf
  %73 = vmin.xlane.f32.xlu0 %v72
  %v74 = vpop.xlane.xlu0 %73
  %vm75 = vcmask 186368
  %v76 = vsel %vm75, %v46, inf
  %77 = vmin.xlane.f32.xlu0 %v76
  %v78 = vpop.xlane.xlu0 %77
  %v79 = vsel %vm68, %v47, inf
  %80 = vmin.xlane.f32.xlu0 %v79
  %v81 = vpop.xlane.xlu0 %80
  %v82 = vsel %vm68, %v48, inf
  %83 = vmin.xlane.f32.xlu0 %v82
  %v84 = vpop.xlane.xlu0 %83
  %v85 = vsel %vm75, %v49, inf
  %86 = vmin.xlane.f32.xlu0 %v85
  %v87 = vpop.xlane.xlu0 %86
  %v88 = vsel %vm68, %v50, inf
  %89 = vmin.xlane.f32.xlu0 %v88
  %v90 = vpop.xlane.xlu0 %89
  %v91 = vsel %vm68, %v51, inf
  %92 = vmin.xlane.f32.xlu0 %v91
  %v93 = vpop.xlane.xlu0 %92
  %v94 = vsel %vm75, %v52, inf
  %95 = vmin.xlane.f32.xlu0 %v94
  %v96 = vpop.xlane.xlu0 %95
  %v97 = vsel %vm68, %v53, inf
  %98 = vmin.xlane.f32.xlu0 %v97
  %v99 = vpop.xlane.xlu0 %98
  %v100 = vsel %vm68, %v54, inf
  %101 = vmin.xlane.f32.xlu0 %v100
  %v102 = vpop.xlane.xlu0 %101
  %v103 = vsel %vm75, %v55, inf
  %104 = vmin.xlane.f32.xlu0 %v103
  %v105 = vpop.xlane.xlu0 %104
  %v106 = vsel %vm68, %v56, inf
  %107 = vmin.xlane.f32.xlu0 %v106
  %v108 = vpop.xlane.xlu0 %107
  %v109 = vsel %vm68, %v57, inf
  %110 = vmin.xlane.f32.xlu0 %v109
  %v111 = vpop.xlane.xlu0 %110
  %v112 = vsel %vm75, %v58, inf
  %113 = vmin.xlane.f32.xlu0 %v112
  %v114 = vpop.xlane.xlu0 %113
  %v115 = vsel %vm68, %v59, inf
  %116 = vmin.xlane.f32.xlu0 %v115
  %v117 = vpop.xlane.xlu0 %116
  %v118 = vsel %vm68, %v60, inf
  %119 = vmin.xlane.f32.xlu0 %v118
  %v120 = vpop.xlane.xlu0 %119
  %v121 = vsel %vm75, %v61, inf
  %122 = vmin.xlane.f32.xlu0 %v121
  %v123 = vpop.xlane.xlu0 %122
  %v124 = vsel %vm68, %v62, inf
  %125 = vmin.xlane.f32.xlu0 %v124
  %v126 = vpop.xlane.xlu0 %125
  %v127 = vsel %vm68, %v63, inf
  %128 = vmin.xlane.f32.xlu0 %v127
  %v129 = vpop.xlane.xlu0 %128
  %v130 = vsel %vm75, %v64, inf
  %131 = vmin.xlane.f32.xlu0 %v130
  %v132 = vpop.xlane.xlu0 %131
  %v133 = vsel %vm68, %v65, inf
  %134 = vmin.xlane.f32.xlu0 %v133
  %v135 = vpop.xlane.xlu0 %134
  %v136 = vsel %vm68, %v66, inf
  %137 = vmin.xlane.f32.xlu0 %v136
  %v138 = vpop.xlane.xlu0 %137
  %v139 = vsel %vm75, %v67, inf
  %140 = vmin.xlane.f32.xlu0 %v139
  %v141 = vpop.xlane.xlu0 %140
  %vm142 = vcmp.gt.f32.partialorder %v71, 0.0
  %vm143 = vcmp.gt.f32.partialorder %v74, 0.0
  %vm144 = vcmp.gt.f32.partialorder %v78, 0.0
  %vm145 = vcmp.gt.f32.partialorder %v81, 0.0
  %vm146 = vcmp.gt.f32.partialorder %v84, 0.0
  %vm147 = vcmp.gt.f32.partialorder %v87, 0.0
  %vm148 = vcmp.gt.f32.partialorder %v90, 0.0
  %vm149 = vcmp.gt.f32.partialorder %v93, 0.0
  %vm150 = vcmp.gt.f32.partialorder %v96, 0.0
  %vm151 = vcmp.gt.f32.partialorder %v99, 0.0
  %vm152 = vcmp.gt.f32.partialorder %v102, 0.0
  %vm153 = vcmp.gt.f32.partialorder %v105, 0.0
  %vm154 = vcmp.gt.f32.partialorder %v108, 0.0
  %vm155 = vcmp.gt.f32.partialorder %v111, 0.0
  %vm156 = vcmp.gt.f32.partialorder %v114, 0.0
  %vm157 = vcmp.gt.f32.partialorder %v117, 0.0
  %vm158 = vcmp.gt.f32.partialorder %v120, 0.0
  %vm159 = vcmp.gt.f32.partialorder %v123, 0.0
  %vm160 = vcmp.gt.f32.partialorder %v126, 0.0
  %vm161 = vcmp.gt.f32.partialorder %v129, 0.0
  %vm162 = vcmp.gt.f32.partialorder %v132, 0.0
  %vm163 = vcmp.gt.f32.partialorder %v135, 0.0
  %vm164 = vcmp.gt.f32.partialorder %v138, 0.0
  %vm165 = vcmp.gt.f32.partialorder %v141, 0.0
  %v166 = vsel %vm142, 0.0, %v71
  %v167 = vsel %vm143, 0.0, %v74
  %v168 = vsel %vm144, 0.0, %v78
  %v169 = vsel %vm145, 0.0, %v81
  %v170 = vsel %vm146, 0.0, %v84
  %v171 = vsel %vm147, 0.0, %v87
  %v172 = vsel %vm148, 0.0, %v90
  %v173 = vsel %vm149, 0.0, %v93
  %v174 = vsel %vm150, 0.0, %v96
  %v175 = vsel %vm151, 0.0, %v99
  %v176 = vsel %vm152, 0.0, %v102
  %v177 = vsel %vm153, 0.0, %v105
  %v178 = vsel %vm154, 0.0, %v108
  %v179 = vsel %vm155, 0.0, %v111
  %v180 = vsel %vm156, 0.0, %v114
  %v181 = vsel %vm157, 0.0, %v117
  %v182 = vsel %vm158, 0.0, %v120
  %v183 = vsel %vm159, 0.0, %v123
  %v184 = vsel %vm160, 0.0, %v126
  %v185 = vsel %vm161, 0.0, %v129
  %v186 = vsel %vm162, 0.0, %v132
  %v187 = vsel %vm163, 0.0, %v135
  %v188 = vsel %vm164, 0.0, %v138
  %v189 = vsel %vm165, 0.0, %v141
  %v190 = vsub.f32 %v44, %v166
  %v191 = vsub.f32 %v45, %v167
  %v192 = vsub.f32 %v46, %v168
  %v193 = vsub.f32 %v47, %v169
  %v194 = vsub.f32 %v48, %v170
  %v195 = vsub.f32 %v49, %v171
  %v196 = vsub.f32 %v50, %v172
  %v197 = vsub.f32 %v51, %v173
  %v198 = vsub.f32 %v52, %v174
  %v199 = vsub.f32 %v53, %v175
  %v200 = vsub.f32 %v54, %v176
  %v201 = vsub.f32 %v55, %v177
  %v202 = vsub.f32 %v56, %v178
  %v203 = vsub.f32 %v57, %v179
  %v204 = vsub.f32 %v58, %v180
  %v205 = vsub.f32 %v59, %v181
  %v206 = vsub.f32 %v60, %v182
  %v207 = vsub.f32 %v61, %v183
  %v208 = vsub.f32 %v62, %v184
  %v209 = vsub.f32 %v63, %v185
  %v210 = vsub.f32 %v64, %v186
  %v211 = vsub.f32 %v65, %v187
  %v212 = vsub.f32 %v66, %v188
  %v213 = vsub.f32 %v67, %v189
  %v214 = vsel %vm35, 1, 0
  %v215 = vcombine.high %v214, %v214
  %v217 = vunpack.c.l.s4 1966171168
  %v218 = vunpack.c.0.s8 %v217
  %v219 = vlaneseq
  %v220 = vshrl.u32 %v219, 7
  %v221 = vsub.s32 %v218, %v220
  %v222 = vrot.slane %v214, %v221
  %v224 = vunpack.c.l.s4 1966171168
  %v225 = vunpack.c.0.s8 %v224
  %v226 = vlaneseq
  %v227 = vshrl.u32 %v226, 7
  %v228 = vsub.s32 %v225, %v227
  %v229 = vrot.slane %v215, %v228
  %v230 = vcombine.high %v222, %v222
  %v231 = vcombine.high %v229, %v229
  %v233 = vunpack.c.l.s4 1966171168
  %v234 = vunpack.c.0.s8 %v233
  %v235 = vlaneseq
  %v236 = vshrl.u32 %v235, 7
  %v237 = vsub.s32 %v234, %v236
  %v238 = vrot.slane %v222, %v237
  %v240 = vunpack.c.l.s4 1966171168
  %v241 = vunpack.c.0.s8 %v240
  %v242 = vlaneseq
  %v243 = vshrl.u32 %v242, 7
  %v244 = vsub.s32 %v241, %v243
  %v245 = vrot.slane %v229, %v244
  %v247 = vunpack.c.l.s4 1966171168
  %v248 = vunpack.c.0.s8 %v247
  %v249 = vlaneseq
  %v250 = vshrl.u32 %v249, 7
  %v251 = vsub.s32 %v248, %v250
  %v252 = vrot.slane %v230, %v251
  %v254 = vunpack.c.l.s4 1966171168
  %v255 = vunpack.c.0.s8 %v254
  %v256 = vlaneseq
  %v257 = vshrl.u32 %v256, 7
  %v258 = vsub.s32 %v255, %v257
  %v259 = vrot.slane %v231, %v258
  %v260 = vcombine.high %v238, %v238
  %v261 = vcombine.high %v245, %v245
  %v262 = vcombine.high %v252, %v252
  %v263 = vcombine.high %v259, %v259
  %vm264 = vcmp.ne.s32.totalorder %v238, 0
  %vm265 = vcmp.ne.s32.totalorder %v252, 0
  %vm266 = vcmp.ne.s32.totalorder %v260, 0
  %vm267 = vcmp.ne.s32.totalorder %v262, 0
  %vm268 = vcmp.ne.s32.totalorder %v245, 0
  %vm269 = vcmp.ne.s32.totalorder %v259, 0
  %vm270 = vcmp.ne.s32.totalorder %v261, 0
  %vm271 = vcmp.ne.s32.totalorder %v263, 0
  %v272 = vsel %vm264, 1, 0
  %v273 = vsel %vm265, 1, 0
  %v274 = vsel %vm266, 1, 0
  %v275 = vsel %vm267, 1, 0
  %v276 = vsel %vm268, 1, 0
  %v277 = vsel %vm269, 1, 0
  %v278 = vsel %vm270, 1, 0
  %v279 = vsel %vm271, 1, 0
  %v280 = vlaneseq
  %v281 = vshrl.u32 %v280, 7
  %v282 = vsub.s32 0, %v281
  %v283 = vrot.slane %v272, %v282
  %v284 = vlaneseq
  %v285 = vshrl.u32 %v284, 7
  %v286 = vsub.s32 0, %v285
  %v287 = vrot.slane %v273, %v286
  %v288 = vlaneseq
  %v289 = vshrl.u32 %v288, 7
  %v290 = vsub.s32 0, %v289
  %v291 = vrot.slane %v274, %v290
  %v292 = vlaneseq
  %v293 = vshrl.u32 %v292, 7
  %v294 = vsub.s32 0, %v293
  %v295 = vrot.slane %v275, %v294
  %v296 = vlaneseq
  %v297 = vshrl.u32 %v296, 7
  %v298 = vsub.s32 0, %v297
  %v299 = vrot.slane %v276, %v298
  %v300 = vlaneseq
  %v301 = vshrl.u32 %v300, 7
  %v302 = vsub.s32 0, %v301
  %v303 = vrot.slane %v277, %v302
  %v304 = vlaneseq
  %v305 = vshrl.u32 %v304, 7
  %v306 = vsub.s32 0, %v305
  %v307 = vrot.slane %v278, %v306
  %v308 = vlaneseq
  %v309 = vshrl.u32 %v308, 7
  %v310 = vsub.s32 0, %v309
  %v311 = vrot.slane %v279, %v310
  %vm312 = vcmp.eq.s32.totalorder %v283, 1
  %vm313 = vcmp.eq.s32.totalorder %v287, 1
  %vm314 = vcmp.eq.s32.totalorder %v291, 1
  %vm315 = vcmp.eq.s32.totalorder %v295, 1
  %vm316 = vcmp.eq.s32.totalorder %v299, 1
  %vm317 = vcmp.eq.s32.totalorder %v303, 1
  %vm318 = vcmp.eq.s32.totalorder %v307, 1
  %vm319 = vcmp.eq.s32.totalorder %v311, 1
  %v320 = vsel %vm312, %v190, 0.0
  %v321 = vsel %vm312, %v191, 0.0
  %v322 = vsel %vm312, %v192, 0.0
  %v323 = vsel %vm313, %v193, 0.0
  %v324 = vsel %vm313, %v194, 0.0
  %v325 = vsel %vm313, %v195, 0.0
  %v326 = vsel %vm314, %v196, 0.0
  %v327 = vsel %vm314, %v197, 0.0
  %v328 = vsel %vm314, %v198, 0.0
  %v329 = vsel %vm315, %v199, 0.0
  %v330 = vsel %vm315, %v200, 0.0
  %v331 = vsel %vm315, %v201, 0.0
  %v332 = vsel %vm316, %v202, 0.0
  %v333 = vsel %vm316, %v203, 0.0
  %v334 = vsel %vm316, %v204, 0.0
  %v335 = vsel %vm317, %v205, 0.0
  %v336 = vsel %vm317, %v206, 0.0
  %v337 = vsel %vm317, %v207, 0.0
  %v338 = vsel %vm318, %v208, 0.0
  %v339 = vsel %vm318, %v209, 0.0
  %v340 = vsel %vm318, %v210, 0.0
  %v341 = vsel %vm319, %v211, 0.0
  %v342 = vsel %vm319, %v212, 0.0
  %v343 = vsel %vm319, %v213, 0.0
  %v344 = vsel %vm68, %v320, 0.0
  %345 = vadd.xlane.f32.xlu0 %v344
  %v346 = vpop.xlane.xlu0 %345
  %v347 = vsel %vm68, %v321, 0.0
  %348 = vadd.xlane.f32.xlu0 %v347
  %v349 = vpop.xlane.xlu0 %348
  %v350 = vsel %vm75, %v322, 0.0
  %351 = vadd.xlane.f32.xlu0 %v350
  %v352 = vpop.xlane.xlu0 %351
  %v353 = vsel %vm68, %v323, 0.0
  %354 = vadd.xlane.f32.xlu0 %v353
  %v355 = vpop.xlane.xlu0 %354
  %v356 = vsel %vm68, %v324, 0.0
  %357 = vadd.xlane.f32.xlu0 %v356
  %v358 = vpop.xlane.xlu0 %357
  %v359 = vsel %vm75, %v325, 0.0
  %360 = vadd.xlane.f32.xlu0 %v359
  %v361 = vpop.xlane.xlu0 %360
  %v362 = vsel %vm68, %v326, 0.0
  %363 = vadd.xlane.f32.xlu0 %v362
  %v364 = vpop.xlane.xlu0 %363
  %v365 = vsel %vm68, %v327, 0.0
  %366 = vadd.xlane.f32.xlu0 %v365
  %v367 = vpop.xlane.xlu0 %366
  %v368 = vsel %vm75, %v328, 0.0
  %369 = vadd.xlane.f32.xlu0 %v368
  %v370 = vpop.xlane.xlu0 %369
  %v371 = vsel %vm68, %v329, 0.0
  %372 = vadd.xlane.f32.xlu0 %v371
  %v373 = vpop.xlane.xlu0 %372
  %v374 = vsel %vm68, %v330, 0.0
  %375 = vadd.xlane.f32.xlu0 %v374
  %v376 = vpop.xlane.xlu0 %375
  %v377 = vsel %vm75, %v331, 0.0
  %378 = vadd.xlane.f32.xlu0 %v377
  %v379 = vpop.xlane.xlu0 %378
  %v380 = vsel %vm68, %v332, 0.0
  %381 = vadd.xlane.f32.xlu0 %v380
  %v382 = vpop.xlane.xlu0 %381
  %v383 = vsel %vm68, %v333, 0.0
  %384 = vadd.xlane.f32.xlu0 %v383
  %v385 = vpop.xlane.xlu0 %384
  %v386 = vsel %vm75, %v334, 0.0
  %387 = vadd.xlane.f32.xlu0 %v386
  %v388 = vpop.xlane.xlu0 %387
  %v389 = vsel %vm68, %v335, 0.0
  %390 = vadd.xlane.f32.xlu0 %v389
  %v391 = vpop.xlane.xlu0 %390
  %v392 = vsel %vm68, %v336, 0.0
  %393 = vadd.xlane.f32.xlu0 %v392
  %v394 = vpop.xlane.xlu0 %393
  %v395 = vsel %vm75, %v337, 0.0
  %396 = vadd.xlane.f32.xlu0 %v395
  %v397 = vpop.xlane.xlu0 %396
  %v398 = vsel %vm68, %v338, 0.0
  %399 = vadd.xlane.f32.xlu0 %v398
  %v400 = vpop.xlane.xlu0 %399
  %v401 = vsel %vm68, %v339, 0.0
  %402 = vadd.xlane.f32.xlu0 %v401
  %v403 = vpop.xlane.xlu0 %402
  %v404 = vsel %vm75, %v340, 0.0
  %405 = vadd.xlane.f32.xlu0 %v404
  %v406 = vpop.xlane.xlu0 %405
  %v407 = vsel %vm68, %v341, 0.0
  %408 = vadd.xlane.f32.xlu0 %v407
  %v409 = vpop.xlane.xlu0 %408
  %v410 = vsel %vm68, %v342, 0.0
  %411 = vadd.xlane.f32.xlu0 %v410
  %v412 = vpop.xlane.xlu0 %411
  %v413 = vsel %vm75, %v343, 0.0
  %414 = vadd.xlane.f32.xlu0 %v413
  %v415 = vpop.xlane.xlu0 %414
  %v416 = vmul.f32 %v320, %v41
  %v417 = vmul.f32 %v321, %v42
  %v418 = vmul.f32 %v322, %v43
  %v419 = vmul.f32 %v323, %v41
  %v420 = vmul.f32 %v324, %v42
  %v421 = vmul.f32 %v325, %v43
  %v422 = vmul.f32 %v326, %v41
  %v423 = vmul.f32 %v327, %v42
  %v424 = vmul.f32 %v328, %v43
  %v425 = vmul.f32 %v329, %v41
  %v426 = vmul.f32 %v330, %v42
  %v427 = vmul.f32 %v331, %v43
  %v428 = vmul.f32 %v332, %v41
  %v429 = vmul.f32 %v333, %v42
  %v430 = vmul.f32 %v334, %v43
  %v431 = vmul.f32 %v335, %v41
  %v432 = vmul.f32 %v336, %v42
  %v433 = vmul.f32 %v337, %v43
  %v434 = vmul.f32 %v338, %v41
  %v435 = vmul.f32 %v339, %v42
  %v436 = vmul.f32 %v340, %v43
  %v437 = vmul.f32 %v341, %v41
  %v438 = vmul.f32 %v342, %v42
  %v439 = vmul.f32 %v343, %v43
  %v440 = vsel %vm68, %v416, 0.0
  %441 = vadd.xlane.f32.xlu0 %v440
  %v442 = vpop.xlane.xlu0 %441
  %v443 = vsel %vm68, %v417, 0.0
  %444 = vadd.xlane.f32.xlu0 %v443
  %v445 = vpop.xlane.xlu0 %444
  %v446 = vsel %vm75, %v418, 0.0
  %447 = vadd.xlane.f32.xlu0 %v446
  %v448 = vpop.xlane.xlu0 %447
  %v449 = vsel %vm68, %v419, 0.0
  %450 = vadd.xlane.f32.xlu0 %v449
  %v451 = vpop.xlane.xlu0 %450
  %v452 = vsel %vm68, %v420, 0.0
  %453 = vadd.xlane.f32.xlu0 %v452
  %v454 = vpop.xlane.xlu0 %453
  %v455 = vsel %vm75, %v421, 0.0
  %456 = vadd.xlane.f32.xlu0 %v455
  %v457 = vpop.xlane.xlu0 %456
  %v458 = vsel %vm68, %v422, 0.0
  %459 = vadd.xlane.f32.xlu0 %v458
  %v460 = vpop.xlane.xlu0 %459
  %v461 = vsel %vm68, %v423, 0.0
  %462 = vadd.xlane.f32.xlu0 %v461
  %v463 = vpop.xlane.xlu0 %462
  %v464 = vsel %vm75, %v424, 0.0
  %465 = vadd.xlane.f32.xlu0 %v464
  %v466 = vpop.xlane.xlu0 %465
  %v467 = vsel %vm68, %v425, 0.0
  %468 = vadd.xlane.f32.xlu0 %v467
  %v469 = vpop.xlane.xlu0 %468
  %v470 = vsel %vm68, %v426, 0.0
  %471 = vadd.xlane.f32.xlu0 %v470
  %v472 = vpop.xlane.xlu0 %471
  %v473 = vsel %vm75, %v427, 0.0
  %474 = vadd.xlane.f32.xlu0 %v473
  %v475 = vpop.xlane.xlu0 %474
  %v476 = vsel %vm68, %v428, 0.0
  %477 = vadd.xlane.f32.xlu0 %v476
  %v478 = vpop.xlane.xlu0 %477
  %v479 = vsel %vm68, %v429, 0.0
  %480 = vadd.xlane.f32.xlu0 %v479
  %v481 = vpop.xlane.xlu0 %480
  %v482 = vsel %vm75, %v430, 0.0
  %483 = vadd.xlane.f32.xlu0 %v482
  %v484 = vpop.xlane.xlu0 %483
  %v485 = vsel %vm68, %v431, 0.0
  %486 = vadd.xlane.f32.xlu0 %v485
  %v487 = vpop.xlane.xlu0 %486
  %v488 = vsel %vm68, %v432, 0.0
  %489 = vadd.xlane.f32.xlu0 %v488
  %v490 = vpop.xlane.xlu0 %489
  %v491 = vsel %vm75, %v433, 0.0
  %492 = vadd.xlane.f32.xlu0 %v491
  %v493 = vpop.xlane.xlu0 %492
  %v494 = vsel %vm68, %v434, 0.0
  %495 = vadd.xlane.f32.xlu0 %v494
  %v496 = vpop.xlane.xlu0 %495
  %v497 = vsel %vm68, %v435, 0.0
  %498 = vadd.xlane.f32.xlu0 %v497
  %v499 = vpop.xlane.xlu0 %498
  %v500 = vsel %vm75, %v436, 0.0
  %501 = vadd.xlane.f32.xlu0 %v500
  %v502 = vpop.xlane.xlu0 %501
  %v503 = vsel %vm68, %v437, 0.0
  %504 = vadd.xlane.f32.xlu0 %v503
  %v505 = vpop.xlane.xlu0 %504
  %v506 = vsel %vm68, %v438, 0.0
  %507 = vadd.xlane.f32.xlu0 %v506
  %v508 = vpop.xlane.xlu0 %507
  %v509 = vsel %vm75, %v439, 0.0
  %510 = vadd.xlane.f32.xlu0 %v509
  %v511 = vpop.xlane.xlu0 %510
  %v512 = vrcp.pop %v346
  %v513 = vmul.f32 %v442, %v512
  %v514 = vrcp.pop %v349
  %v515 = vmul.f32 %v445, %v514
  %v516 = vrcp.pop %v352
  %v517 = vmul.f32 %v448, %v516
  %v518 = vrcp.pop %v355
  %v519 = vmul.f32 %v451, %v518
  %v520 = vrcp.pop %v358
  %v521 = vmul.f32 %v454, %v520
  %v522 = vrcp.pop %v361
  %v523 = vmul.f32 %v457, %v522
  %v524 = vrcp.pop %v364
  %v525 = vmul.f32 %v460, %v524
  %v526 = vrcp.pop %v367
  %v527 = vmul.f32 %v463, %v526
  %v528 = vrcp.pop %v370
  %v529 = vmul.f32 %v466, %v528
  %v530 = vrcp.pop %v373
  %v531 = vmul.f32 %v469, %v530
  %v532 = vrcp.pop %v376
  %v533 = vmul.f32 %v472, %v532
  %v534 = vrcp.pop %v379
  %v535 = vmul.f32 %v475, %v534
  %v536 = vrcp.pop %v382
  %v537 = vmul.f32 %v478, %v536
  %v538 = vrcp.pop %v385
  %v539 = vmul.f32 %v481, %v538
  %v540 = vrcp.pop %v388
  %v541 = vmul.f32 %v484, %v540
  %v542 = vrcp.pop %v391
  %v543 = vmul.f32 %v487, %v542
  %v544 = vrcp.pop %v394
  %v545 = vmul.f32 %v490, %v544
  %v546 = vrcp.pop %v397
  %v547 = vmul.f32 %v493, %v546
  %v548 = vrcp.pop %v400
  %v549 = vmul.f32 %v496, %v548
  %v550 = vrcp.pop %v403
  %v551 = vmul.f32 %v499, %v550
  %v552 = vrcp.pop %v406
  %v553 = vmul.f32 %v502, %v552
  %v554 = vrcp.pop %v409
  %v555 = vmul.f32 %v505, %v554
  %v556 = vrcp.pop %v412
  %v557 = vmul.f32 %v508, %v556
  %v558 = vrcp.pop %v415
  %v559 = vmul.f32 %v511, %v558
  %v560 = vld [vmem:[%s4] sm:$0xff]
  %v561 = vld [vmem:[%s4 + $0x8] sm:$0xff]
  %v562 = vld [vmem:[%s4 + $0x10] sm:$0x7f]
  %v563 = vld [vmem:[%s4 + $0x18] sm:$0xff]
  %v564 = vld [vmem:[%s4 + $0x20] sm:$0xff]
  %v565 = vld [vmem:[%s4 + $0x28] sm:$0x7f]
  %v566 = vld [vmem:[%s4 + $0x30] sm:$0xff]
  %v567 = vld [vmem:[%s4 + $0x38] sm:$0xff]
  %v568 = vld [vmem:[%s4 + $0x40] sm:$0x7f]
  %v569 = vld [vmem:[%s4 + $0x48] sm:$0xff]
  %v570 = vld [vmem:[%s4 + $0x50] sm:$0xff]
  %v571 = vld [vmem:[%s4 + $0x58] sm:$0x7f]
  %v572 = vld [vmem:[%s4 + $0x60] sm:$0xff]
  %v573 = vld [vmem:[%s4 + $0x68] sm:$0xff]
  %v574 = vld [vmem:[%s4 + $0x70] sm:$0x7f]
  %v575 = vld [vmem:[%s4 + $0x78] sm:$0xff]
  %v576 = vld [vmem:[%s4 + $0x80] sm:$0xff]
  %v577 = vld [vmem:[%s4 + $0x88] sm:$0x7f]
  %v578 = vld [vmem:[%s4 + $0x90] sm:$0xff]
  %v579 = vld [vmem:[%s4 + $0x98] sm:$0xff]
  %v580 = vld [vmem:[%s4 + $0xa0] sm:$0x7f]
  %v581 = vld [vmem:[%s4 + $0xa8] sm:$0xff]
  %v582 = vld [vmem:[%s4 + $0xb0] sm:$0xff]
  %v583 = vld [vmem:[%s4 + $0xb8] sm:$0x7f]
  %v584 = vsel %vm68, %v560, inf
  %585 = vmin.xlane.f32.xlu0 %v584
  %v586 = vpop.xlane.xlu0 %585
  %v587 = vsel %vm68, %v561, inf
  %588 = vmin.xlane.f32.xlu0 %v587
  %v589 = vpop.xlane.xlu0 %588
  %v590 = vsel %vm75, %v562, inf
  %591 = vmin.xlane.f32.xlu0 %v590
  %v592 = vpop.xlane.xlu0 %591
  %v593 = vsel %vm68, %v563, inf
  %594 = vmin.xlane.f32.xlu0 %v593
  %v595 = vpop.xlane.xlu0 %594
  %v596 = vsel %vm68, %v564, inf
  %597 = vmin.xlane.f32.xlu0 %v596
  %v598 = vpop.xlane.xlu0 %597
  %v599 = vsel %vm75, %v565, inf
  %600 = vmin.xlane.f32.xlu0 %v599
  %v601 = vpop.xlane.xlu0 %600
  %v602 = vsel %vm68, %v566, inf
  %603 = vmin.xlane.f32.xlu0 %v602
  %v604 = vpop.xlane.xlu0 %603
  %v605 = vsel %vm68, %v567, inf
  %606 = vmin.xlane.f32.xlu0 %v605
  %v607 = vpop.xlane.xlu0 %606
  %v608 = vsel %vm75, %v568, inf
  %609 = vmin.xlane.f32.xlu0 %v608
  %v610 = vpop.xlane.xlu0 %609
  %v611 = vsel %vm68, %v569, inf
  %612 = vmin.xlane.f32.xlu0 %v611
  %v613 = vpop.xlane.xlu0 %612
  %v614 = vsel %vm68, %v570, inf
  %615 = vmin.xlane.f32.xlu0 %v614
  %v616 = vpop.xlane.xlu0 %615
  %v617 = vsel %vm75, %v571, inf
  %618 = vmin.xlane.f32.xlu0 %v617
  %v619 = vpop.xlane.xlu0 %618
  %v620 = vsel %vm68, %v572, inf
  %621 = vmin.xlane.f32.xlu0 %v620
  %v622 = vpop.xlane.xlu0 %621
  %v623 = vsel %vm68, %v573, inf
  %624 = vmin.xlane.f32.xlu0 %v623
  %v625 = vpop.xlane.xlu0 %624
  %v626 = vsel %vm75, %v574, inf
  %627 = vmin.xlane.f32.xlu0 %v626
  %v628 = vpop.xlane.xlu0 %627
  %v629 = vsel %vm68, %v575, inf
  %630 = vmin.xlane.f32.xlu0 %v629
  %v631 = vpop.xlane.xlu0 %630
  %v632 = vsel %vm68, %v576, inf
  %633 = vmin.xlane.f32.xlu0 %v632
  %v634 = vpop.xlane.xlu0 %633
  %v635 = vsel %vm75, %v577, inf
  %636 = vmin.xlane.f32.xlu0 %v635
  %v637 = vpop.xlane.xlu0 %636
  %v638 = vsel %vm68, %v578, inf
  %639 = vmin.xlane.f32.xlu0 %v638
  %v640 = vpop.xlane.xlu0 %639
  %v641 = vsel %vm68, %v579, inf
  %642 = vmin.xlane.f32.xlu0 %v641
  %v643 = vpop.xlane.xlu0 %642
  %v644 = vsel %vm75, %v580, inf
  %645 = vmin.xlane.f32.xlu0 %v644
  %v646 = vpop.xlane.xlu0 %645
  %v647 = vsel %vm68, %v581, inf
  %648 = vmin.xlane.f32.xlu0 %v647
  %v649 = vpop.xlane.xlu0 %648
  %v650 = vsel %vm68, %v582, inf
  %651 = vmin.xlane.f32.xlu0 %v650
  %v652 = vpop.xlane.xlu0 %651
  %v653 = vsel %vm75, %v583, inf
  %654 = vmin.xlane.f32.xlu0 %v653
  %v655 = vpop.xlane.xlu0 %654
  %vm656 = vcmp.gt.f32.partialorder %v586, 0.0
  %vm657 = vcmp.gt.f32.partialorder %v589, 0.0
  %vm658 = vcmp.gt.f32.partialorder %v592, 0.0
  %vm659 = vcmp.gt.f32.partialorder %v595, 0.0
  %vm660 = vcmp.gt.f32.partialorder %v598, 0.0
  %vm661 = vcmp.gt.f32.partialorder %v601, 0.0
  %vm662 = vcmp.gt.f32.partialorder %v604, 0.0
  %vm663 = vcmp.gt.f32.partialorder %v607, 0.0
  %vm664 = vcmp.gt.f32.partialorder %v610, 0.0
  %vm665 = vcmp.gt.f32.partialorder %v613, 0.0
  %vm666 = vcmp.gt.f32.partialorder %v616, 0.0
  %vm667 = vcmp.gt.f32.partialorder %v619, 0.0
  %vm668 = vcmp.gt.f32.partialorder %v622, 0.0
  %vm669 = vcmp.gt.f32.partialorder %v625, 0.0
  %vm670 = vcmp.gt.f32.partialorder %v628, 0.0
  %vm671 = vcmp.gt.f32.partialorder %v631, 0.0
  %vm672 = vcmp.gt.f32.partialorder %v634, 0.0
  %vm673 = vcmp.gt.f32.partialorder %v637, 0.0
  %vm674 = vcmp.gt.f32.partialorder %v640, 0.0
  %vm675 = vcmp.gt.f32.partialorder %v643, 0.0
  %vm676 = vcmp.gt.f32.partialorder %v646, 0.0
  %vm677 = vcmp.gt.f32.partialorder %v649, 0.0
  %vm678 = vcmp.gt.f32.partialorder %v652, 0.0
  %vm679 = vcmp.gt.f32.partialorder %v655, 0.0
  %v680 = vsel %vm656, 0.0, %v586
  %v681 = vsel %vm657, 0.0, %v589
  %v682 = vsel %vm658, 0.0, %v592
  %v683 = vsel %vm659, 0.0, %v595
  %v684 = vsel %vm660, 0.0, %v598
  %v685 = vsel %vm661, 0.0, %v601
  %v686 = vsel %vm662, 0.0, %v604
  %v687 = vsel %vm663, 0.0, %v607
  %v688 = vsel %vm664, 0.0, %v610
  %v689 = vsel %vm665, 0.0, %v613
  %v690 = vsel %vm666, 0.0, %v616
  %v691 = vsel %vm667, 0.0, %v619
  %v692 = vsel %vm668, 0.0, %v622
  %v693 = vsel %vm669, 0.0, %v625
  %v694 = vsel %vm670, 0.0, %v628
  %v695 = vsel %vm671, 0.0, %v631
  %v696 = vsel %vm672, 0.0, %v634
  %v697 = vsel %vm673, 0.0, %v637
  %v698 = vsel %vm674, 0.0, %v640
  %v699 = vsel %vm675, 0.0, %v643
  %v700 = vsel %vm676, 0.0, %v646
  %v701 = vsel %vm677, 0.0, %v649
  %v702 = vsel %vm678, 0.0, %v652
  %v703 = vsel %vm679, 0.0, %v655
  %v704 = vsub.f32 %v560, %v680
  %v705 = vsub.f32 %v561, %v681
  %v706 = vsub.f32 %v562, %v682
  %v707 = vsub.f32 %v563, %v683
  %v708 = vsub.f32 %v564, %v684
  %v709 = vsub.f32 %v565, %v685
  %v710 = vsub.f32 %v566, %v686
  %v711 = vsub.f32 %v567, %v687
  %v712 = vsub.f32 %v568, %v688
  %v713 = vsub.f32 %v569, %v689
  %v714 = vsub.f32 %v570, %v690
  %v715 = vsub.f32 %v571, %v691
  %v716 = vsub.f32 %v572, %v692
  %v717 = vsub.f32 %v573, %v693
  %v718 = vsub.f32 %v574, %v694
  %v719 = vsub.f32 %v575, %v695
  %v720 = vsub.f32 %v576, %v696
  %v721 = vsub.f32 %v577, %v697
  %v722 = vsub.f32 %v578, %v698
  %v723 = vsub.f32 %v579, %v699
  %v724 = vsub.f32 %v580, %v700
  %v725 = vsub.f32 %v581, %v701
  %v726 = vsub.f32 %v582, %v702
  %v727 = vsub.f32 %v583, %v703
  %v728 = vsel %vm36, 1, 0
  %v729 = vsel %vm37, 1, 0
  %vm730 = vcmp.eq.s32.totalorder %v214, 1
  %vm731 = vcmp.eq.s32.totalorder %v728, 1
  %vm732 = vcmp.eq.s32.totalorder %v729, 1
  %v733 = vsel %vm730, %v704, 0.0
  %v734 = vsel %vm731, %v705, 0.0
  %v735 = vsel %vm732, %v706, 0.0
  %v736 = vsel %vm730, %v707, 0.0
  %v737 = vsel %vm731, %v708, 0.0
  %v738 = vsel %vm732, %v709, 0.0
  %v739 = vsel %vm730, %v710, 0.0
  %v740 = vsel %vm731, %v711, 0.0
  %v741 = vsel %vm732, %v712, 0.0
  %v742 = vsel %vm730, %v713, 0.0
  %v743 = vsel %vm731, %v714, 0.0
  %v744 = vsel %vm732, %v715, 0.0
  %v745 = vsel %vm730, %v716, 0.0
  %v746 = vsel %vm731, %v717, 0.0
  %v747 = vsel %vm732, %v718, 0.0
  %v748 = vsel %vm730, %v719, 0.0
  %v749 = vsel %vm731, %v720, 0.0
  %v750 = vsel %vm732, %v721, 0.0
  %v751 = vsel %vm730, %v722, 0.0
  %v752 = vsel %vm731, %v723, 0.0
  %v753 = vsel %vm732, %v724, 0.0
  %v754 = vsel %vm730, %v725, 0.0
  %v755 = vsel %vm731, %v726, 0.0
  %v756 = vsel %vm732, %v727, 0.0
  %v757 = vsel %vm68, %v733, 0.0
  %758 = vadd.xlane.f32.xlu0 %v757
  %v759 = vpop.xlane.xlu0 %758
  %v760 = vsel %vm68, %v734, 0.0
  %761 = vadd.xlane.f32.xlu0 %v760
  %v762 = vpop.xlane.xlu0 %761
  %v763 = vsel %vm75, %v735, 0.0
  %764 = vadd.xlane.f32.xlu0 %v763
  %v765 = vpop.xlane.xlu0 %764
  %v766 = vsel %vm68, %v736, 0.0
  %767 = vadd.xlane.f32.xlu0 %v766
  %v768 = vpop.xlane.xlu0 %767
  %v769 = vsel %vm68, %v737, 0.0
  %770 = vadd.xlane.f32.xlu0 %v769
  %v771 = vpop.xlane.xlu0 %770
  %v772 = vsel %vm75, %v738, 0.0
  %773 = vadd.xlane.f32.xlu0 %v772
  %v774 = vpop.xlane.xlu0 %773
  %v775 = vsel %vm68, %v739, 0.0
  %776 = vadd.xlane.f32.xlu0 %v775
  %v777 = vpop.xlane.xlu0 %776
  %v778 = vsel %vm68, %v740, 0.0
  %779 = vadd.xlane.f32.xlu0 %v778
  %v780 = vpop.xlane.xlu0 %779
  %v781 = vsel %vm75, %v741, 0.0
  %782 = vadd.xlane.f32.xlu0 %v781
  %v783 = vpop.xlane.xlu0 %782
  %v784 = vsel %vm68, %v742, 0.0
  %785 = vadd.xlane.f32.xlu0 %v784
  %v786 = vpop.xlane.xlu0 %785
  %v787 = vsel %vm68, %v743, 0.0
  %788 = vadd.xlane.f32.xlu0 %v787
  %v789 = vpop.xlane.xlu0 %788
  %v790 = vsel %vm75, %v744, 0.0
  %791 = vadd.xlane.f32.xlu0 %v790
  %v792 = vpop.xlane.xlu0 %791
  %v793 = vsel %vm68, %v745, 0.0
  %794 = vadd.xlane.f32.xlu0 %v793
  %v795 = vpop.xlane.xlu0 %794
  %v796 = vsel %vm68, %v746, 0.0
  %797 = vadd.xlane.f32.xlu0 %v796
  %v798 = vpop.xlane.xlu0 %797
  %v799 = vsel %vm75, %v747, 0.0
  %800 = vadd.xlane.f32.xlu0 %v799
  %v801 = vpop.xlane.xlu0 %800
  %v802 = vsel %vm68, %v748, 0.0
  %803 = vadd.xlane.f32.xlu0 %v802
  %v804 = vpop.xlane.xlu0 %803
  %v805 = vsel %vm68, %v749, 0.0
  %806 = vadd.xlane.f32.xlu0 %v805
  %v807 = vpop.xlane.xlu0 %806
  %v808 = vsel %vm75, %v750, 0.0
  %809 = vadd.xlane.f32.xlu0 %v808
  %v810 = vpop.xlane.xlu0 %809
  %v811 = vsel %vm68, %v751, 0.0
  %812 = vadd.xlane.f32.xlu0 %v811
  %v813 = vpop.xlane.xlu0 %812
  %v814 = vsel %vm68, %v752, 0.0
  %815 = vadd.xlane.f32.xlu0 %v814
  %v816 = vpop.xlane.xlu0 %815
  %v817 = vsel %vm75, %v753, 0.0
  %818 = vadd.xlane.f32.xlu0 %v817
  %v819 = vpop.xlane.xlu0 %818
  %v820 = vsel %vm68, %v754, 0.0
  %821 = vadd.xlane.f32.xlu0 %v820
  %v822 = vpop.xlane.xlu0 %821
  %v823 = vsel %vm68, %v755, 0.0
  %824 = vadd.xlane.f32.xlu0 %v823
  %v825 = vpop.xlane.xlu0 %824
  %v826 = vsel %vm75, %v756, 0.0
  %827 = vadd.xlane.f32.xlu0 %v826
  %v828 = vpop.xlane.xlu0 %827
  %v830 = vcombine.high %v38, %v38
  %v832 = vunpack.c.l.s4 1966171168
  %v833 = vunpack.c.0.s8 %v832
  %v834 = vlaneseq
  %v835 = vshrl.u32 %v834, 7
  %v836 = vsub.s32 %v833, %v835
  %v837 = vrot.slane %v38, %v836
  %v839 = vunpack.c.l.s4 1966171168
  %v840 = vunpack.c.0.s8 %v839
  %v841 = vlaneseq
  %v842 = vshrl.u32 %v841, 7
  %v843 = vsub.s32 %v840, %v842
  %v844 = vrot.slane %v830, %v843
  %v845 = vcombine.high %v837, %v837
  %v846 = vcombine.high %v844, %v844
  %v848 = vunpack.c.l.s4 1966171168
  %v849 = vunpack.c.0.s8 %v848
  %v850 = vlaneseq
  %v851 = vshrl.u32 %v850, 7
  %v852 = vsub.s32 %v849, %v851
  %v853 = vrot.slane %v837, %v852
  %v855 = vunpack.c.l.s4 1966171168
  %v856 = vunpack.c.0.s8 %v855
  %v857 = vlaneseq
  %v858 = vshrl.u32 %v857, 7
  %v859 = vsub.s32 %v856, %v858
  %v860 = vrot.slane %v844, %v859
  %v862 = vunpack.c.l.s4 1966171168
  %v863 = vunpack.c.0.s8 %v862
  %v864 = vlaneseq
  %v865 = vshrl.u32 %v864, 7
  %v866 = vsub.s32 %v863, %v865
  %v867 = vrot.slane %v845, %v866
  %v869 = vunpack.c.l.s4 1966171168
  %v870 = vunpack.c.0.s8 %v869
  %v871 = vlaneseq
  %v872 = vshrl.u32 %v871, 7
  %v873 = vsub.s32 %v870, %v872
  %v874 = vrot.slane %v846, %v873
  %v875 = vcombine.high %v853, %v853
  %v876 = vcombine.high %v860, %v860
  %v877 = vcombine.high %v867, %v867
  %v878 = vcombine.high %v874, %v874
  %v879 = vlaneseq
  %v880 = vshrl.u32 %v879, 7
  %v881 = vsub.s32 0, %v880
  %v882 = vrot.slane %v853, %v881
  %v883 = vlaneseq
  %v884 = vshrl.u32 %v883, 7
  %v885 = vsub.s32 0, %v884
  %v886 = vrot.slane %v867, %v885
  %v887 = vlaneseq
  %v888 = vshrl.u32 %v887, 7
  %v889 = vsub.s32 0, %v888
  %v890 = vrot.slane %v875, %v889
  %v891 = vlaneseq
  %v892 = vshrl.u32 %v891, 7
  %v893 = vsub.s32 0, %v892
  %v894 = vrot.slane %v877, %v893
  %v895 = vlaneseq
  %v896 = vshrl.u32 %v895, 7
  %v897 = vsub.s32 0, %v896
  %v898 = vrot.slane %v860, %v897
  %v899 = vlaneseq
  %v900 = vshrl.u32 %v899, 7
  %v901 = vsub.s32 0, %v900
  %v902 = vrot.slane %v874, %v901
  %v903 = vlaneseq
  %v904 = vshrl.u32 %v903, 7
  %v905 = vsub.s32 0, %v904
  %v906 = vrot.slane %v876, %v905
  %v907 = vlaneseq
  %v908 = vshrl.u32 %v907, 7
  %v909 = vsub.s32 0, %v908
  %v910 = vrot.slane %v878, %v909
  %v919 = vmul.f32 %v733, %v882
  %v920 = vmul.f32 %v734, %v882
  %v921 = vmul.f32 %v735, %v882
  %v922 = vmul.f32 %v736, %v886
  %v923 = vmul.f32 %v737, %v886
  %v924 = vmul.f32 %v738, %v886
  %v925 = vmul.f32 %v739, %v890
  %v926 = vmul.f32 %v740, %v890
  %v927 = vmul.f32 %v741, %v890
  %v928 = vmul.f32 %v742, %v894
  %v929 = vmul.f32 %v743, %v894
  %v930 = vmul.f32 %v744, %v894
  %v931 = vmul.f32 %v745, %v898
  %v932 = vmul.f32 %v746, %v898
  %v933 = vmul.f32 %v747, %v898
  %v934 = vmul.f32 %v748, %v902
  %v935 = vmul.f32 %v749, %v902
  %v936 = vmul.f32 %v750, %v902
  %v937 = vmul.f32 %v751, %v906
  %v938 = vmul.f32 %v752, %v906
  %v939 = vmul.f32 %v753, %v906
  %v940 = vmul.f32 %v754, %v910
  %v941 = vmul.f32 %v755, %v910
  %v942 = vmul.f32 %v756, %v910
  %v943 = vsel %vm68, %v919, 0.0
  %944 = vadd.xlane.f32.xlu0 %v943
  %v945 = vpop.xlane.xlu0 %944
  %v946 = vsel %vm68, %v920, 0.0
  %947 = vadd.xlane.f32.xlu0 %v946
  %v948 = vpop.xlane.xlu0 %947
  %v949 = vsel %vm75, %v921, 0.0
  %950 = vadd.xlane.f32.xlu0 %v949
  %v951 = vpop.xlane.xlu0 %950
  %v952 = vsel %vm68, %v922, 0.0
  %953 = vadd.xlane.f32.xlu0 %v952
  %v954 = vpop.xlane.xlu0 %953
  %v955 = vsel %vm68, %v923, 0.0
  %956 = vadd.xlane.f32.xlu0 %v955
  %v957 = vpop.xlane.xlu0 %956
  %v958 = vsel %vm75, %v924, 0.0
  %959 = vadd.xlane.f32.xlu0 %v958
  %v960 = vpop.xlane.xlu0 %959
  %v961 = vsel %vm68, %v925, 0.0
  %962 = vadd.xlane.f32.xlu0 %v961
  %v963 = vpop.xlane.xlu0 %962
  %v964 = vsel %vm68, %v926, 0.0
  %965 = vadd.xlane.f32.xlu0 %v964
  %v966 = vpop.xlane.xlu0 %965
  %v967 = vsel %vm75, %v927, 0.0
  %968 = vadd.xlane.f32.xlu0 %v967
  %v969 = vpop.xlane.xlu0 %968
  %v970 = vsel %vm68, %v928, 0.0
  %971 = vadd.xlane.f32.xlu0 %v970
  %v972 = vpop.xlane.xlu0 %971
  %v973 = vsel %vm68, %v929, 0.0
  %974 = vadd.xlane.f32.xlu0 %v973
  %v975 = vpop.xlane.xlu0 %974
  %v976 = vsel %vm75, %v930, 0.0
  %977 = vadd.xlane.f32.xlu0 %v976
  %v978 = vpop.xlane.xlu0 %977
  %v979 = vsel %vm68, %v931, 0.0
  %980 = vadd.xlane.f32.xlu0 %v979
  %v981 = vpop.xlane.xlu0 %980
  %v982 = vsel %vm68, %v932, 0.0
  %983 = vadd.xlane.f32.xlu0 %v982
  %v984 = vpop.xlane.xlu0 %983
  %v985 = vsel %vm75, %v933, 0.0
  %986 = vadd.xlane.f32.xlu0 %v985
  %v987 = vpop.xlane.xlu0 %986
  %v988 = vsel %vm68, %v934, 0.0
  %989 = vadd.xlane.f32.xlu0 %v988
  %v990 = vpop.xlane.xlu0 %989
  %v991 = vsel %vm68, %v935, 0.0
  %992 = vadd.xlane.f32.xlu0 %v991
  %v993 = vpop.xlane.xlu0 %992
  %v994 = vsel %vm75, %v936, 0.0
  %995 = vadd.xlane.f32.xlu0 %v994
  %v996 = vpop.xlane.xlu0 %995
  %v997 = vsel %vm68, %v937, 0.0
  %998 = vadd.xlane.f32.xlu0 %v997
  %v999 = vpop.xlane.xlu0 %998
  %v1000 = vsel %vm68, %v938, 0.0
  %1001 = vadd.xlane.f32.xlu0 %v1000
  %v1002 = vpop.xlane.xlu0 %1001
  %v1003 = vsel %vm75, %v939, 0.0
  %1004 = vadd.xlane.f32.xlu0 %v1003
  %v1005 = vpop.xlane.xlu0 %1004
  %v1006 = vsel %vm68, %v940, 0.0
  %1007 = vadd.xlane.f32.xlu0 %v1006
  %v1008 = vpop.xlane.xlu0 %1007
  %v1009 = vsel %vm68, %v941, 0.0
  %1010 = vadd.xlane.f32.xlu0 %v1009
  %v1011 = vpop.xlane.xlu0 %1010
  %v1012 = vsel %vm75, %v942, 0.0
  %1013 = vadd.xlane.f32.xlu0 %v1012
  %v1014 = vpop.xlane.xlu0 %1013
  %v1015 = vrcp.pop %v759
  %v1016 = vmul.f32 %v945, %v1015
  %v1017 = vrcp.pop %v762
  %v1018 = vmul.f32 %v948, %v1017
  %v1019 = vrcp.pop %v765
  %v1020 = vmul.f32 %v951, %v1019
  %v1021 = vrcp.pop %v768
  %v1022 = vmul.f32 %v954, %v1021
  %v1023 = vrcp.pop %v771
  %v1024 = vmul.f32 %v957, %v1023
  %v1025 = vrcp.pop %v774
  %v1026 = vmul.f32 %v960, %v1025
  %v1027 = vrcp.pop %v777
  %v1028 = vmul.f32 %v963, %v1027
  %v1029 = vrcp.pop %v780
  %v1030 = vmul.f32 %v966, %v1029
  %v1031 = vrcp.pop %v783
  %v1032 = vmul.f32 %v969, %v1031
  %v1033 = vrcp.pop %v786
  %v1034 = vmul.f32 %v972, %v1033
  %v1035 = vrcp.pop %v789
  %v1036 = vmul.f32 %v975, %v1035
  %v1037 = vrcp.pop %v792
  %v1038 = vmul.f32 %v978, %v1037
  %v1039 = vrcp.pop %v795
  %v1040 = vmul.f32 %v981, %v1039
  %v1041 = vrcp.pop %v798
  %v1042 = vmul.f32 %v984, %v1041
  %v1043 = vrcp.pop %v801
  %v1044 = vmul.f32 %v987, %v1043
  %v1045 = vrcp.pop %v804
  %v1046 = vmul.f32 %v990, %v1045
  %v1047 = vrcp.pop %v807
  %v1048 = vmul.f32 %v993, %v1047
  %v1049 = vrcp.pop %v810
  %v1050 = vmul.f32 %v996, %v1049
  %v1051 = vrcp.pop %v813
  %v1052 = vmul.f32 %v999, %v1051
  %v1053 = vrcp.pop %v816
  %v1054 = vmul.f32 %v1002, %v1053
  %v1055 = vrcp.pop %v819
  %v1056 = vmul.f32 %v1005, %v1055
  %v1057 = vrcp.pop %v822
  %v1058 = vmul.f32 %v1008, %v1057
  %v1059 = vrcp.pop %v825
  %v1060 = vmul.f32 %v1011, %v1059
  %v1061 = vrcp.pop %v828
  %v1062 = vmul.f32 %v1014, %v1061
  %v1063 = vadd.f32 %v513, %v1016
  %v1064 = vadd.f32 %v515, %v1018
  %v1065 = vadd.f32 %v517, %v1020
  %v1066 = vadd.f32 %v519, %v1022
  %v1067 = vadd.f32 %v521, %v1024
  %v1068 = vadd.f32 %v523, %v1026
  %v1069 = vadd.f32 %v525, %v1028
  %v1070 = vadd.f32 %v527, %v1030
  %v1071 = vadd.f32 %v529, %v1032
  %v1072 = vadd.f32 %v531, %v1034
  %v1073 = vadd.f32 %v533, %v1036
  %v1074 = vadd.f32 %v535, %v1038
  %v1075 = vadd.f32 %v537, %v1040
  %v1076 = vadd.f32 %v539, %v1042
  %v1077 = vadd.f32 %v541, %v1044
  %v1078 = vadd.f32 %v543, %v1046
  %v1079 = vadd.f32 %v545, %v1048
  %v1080 = vadd.f32 %v547, %v1050
  %v1081 = vadd.f32 %v549, %v1052
  %v1082 = vadd.f32 %v551, %v1054
  %v1083 = vadd.f32 %v553, %v1056
  %v1084 = vadd.f32 %v555, %v1058
  %v1085 = vadd.f32 %v557, %v1060
  %v1086 = vadd.f32 %v559, %v1062
  %v1087 = vmul.f32 %v1063, 0.5
  %v1088 = vmul.f32 %v1064, 0.5
  %v1089 = vmul.f32 %v1065, 0.5
  %v1090 = vmul.f32 %v1066, 0.5
  %v1091 = vmul.f32 %v1067, 0.5
  %v1092 = vmul.f32 %v1068, 0.5
  %v1093 = vmul.f32 %v1069, 0.5
  %v1094 = vmul.f32 %v1070, 0.5
  %v1095 = vmul.f32 %v1071, 0.5
  %v1096 = vmul.f32 %v1072, 0.5
  %v1097 = vmul.f32 %v1073, 0.5
  %v1098 = vmul.f32 %v1074, 0.5
  %v1099 = vmul.f32 %v1075, 0.5
  %v1100 = vmul.f32 %v1076, 0.5
  %v1101 = vmul.f32 %v1077, 0.5
  %v1102 = vmul.f32 %v1078, 0.5
  %v1103 = vmul.f32 %v1079, 0.5
  %v1104 = vmul.f32 %v1080, 0.5
  %v1105 = vmul.f32 %v1081, 0.5
  %v1106 = vmul.f32 %v1082, 0.5
  %v1107 = vmul.f32 %v1083, 0.5
  %v1108 = vmul.f32 %v1084, 0.5
  %v1109 = vmul.f32 %v1085, 0.5
  %v1110 = vmul.f32 %v1086, 0.5
  %v1135 = vlaneseq
  %v1136 = vshrl.u32 %v1135, 7
  %v1137 = vsub.s32 %v25, %v1136
  %v1138 = vrot.slane %v1087, %v1137
  %v1139 = vadd.s32 %v25, 4294967288
  %v1140 = vlaneseq
  %v1141 = vshrl.u32 %v1140, 7
  %v1142 = vsub.s32 %v1139, %v1141
  %v1143 = vrot.slane %v1088, %v1142
  %vm1144 = vcmask 130112
  %v1145 = vsel %vm1144, %v1143, %v1138
  %v1146 = vadd.s32 %v25, 4294967280
  %v1147 = vlaneseq
  %v1148 = vshrl.u32 %v1147, 7
  %v1149 = vsub.s32 %v1146, %v1148
  %v1150 = vrot.slane %v1089, %v1149
  %vm1151 = vcmask 195712
  %v1152 = vsel %vm1151, %v1150, %v1145
  %v1153 = vlaneseq
  %v1154 = vshrl.u32 %v1153, 7
  %v1155 = vsub.s32 %v25, %v1154
  %v1156 = vrot.slane %v1090, %v1155
  %v1157 = vlaneseq
  %v1158 = vshrl.u32 %v1157, 7
  %v1159 = vsub.s32 %v1139, %v1158
  %v1160 = vrot.slane %v1091, %v1159
  %v1161 = vsel %vm1144, %v1160, %v1156
  %v1162 = vlaneseq
  %v1163 = vshrl.u32 %v1162, 7
  %v1164 = vsub.s32 %v1146, %v1163
  %v1165 = vrot.slane %v1092, %v1164
  %v1166 = vsel %vm1151, %v1165, %v1161
  %v1167 = vlaneseq
  %v1168 = vshrl.u32 %v1167, 7
  %v1169 = vsub.s32 %v25, %v1168
  %v1170 = vrot.slane %v1093, %v1169
  %v1171 = vlaneseq
  %v1172 = vshrl.u32 %v1171, 7
  %v1173 = vsub.s32 %v1139, %v1172
  %v1174 = vrot.slane %v1094, %v1173
  %v1175 = vsel %vm1144, %v1174, %v1170
  %v1176 = vlaneseq
  %v1177 = vshrl.u32 %v1176, 7
  %v1178 = vsub.s32 %v1146, %v1177
  %v1179 = vrot.slane %v1095, %v1178
  %v1180 = vsel %vm1151, %v1179, %v1175
  %v1181 = vlaneseq
  %v1182 = vshrl.u32 %v1181, 7
  %v1183 = vsub.s32 %v25, %v1182
  %v1184 = vrot.slane %v1096, %v1183
  %v1185 = vlaneseq
  %v1186 = vshrl.u32 %v1185, 7
  %v1187 = vsub.s32 %v1139, %v1186
  %v1188 = vrot.slane %v1097, %v1187
  %v1189 = vsel %vm1144, %v1188, %v1184
  %v1190 = vlaneseq
  %v1191 = vshrl.u32 %v1190, 7
  %v1192 = vsub.s32 %v1146, %v1191
  %v1193 = vrot.slane %v1098, %v1192
  %v1194 = vsel %vm1151, %v1193, %v1189
  %v1195 = vlaneseq
  %v1196 = vshrl.u32 %v1195, 7
  %v1197 = vsub.s32 %v25, %v1196
  %v1198 = vrot.slane %v1099, %v1197
  %v1199 = vlaneseq
  %v1200 = vshrl.u32 %v1199, 7
  %v1201 = vsub.s32 %v1139, %v1200
  %v1202 = vrot.slane %v1100, %v1201
  %v1203 = vsel %vm1144, %v1202, %v1198
  %v1204 = vlaneseq
  %v1205 = vshrl.u32 %v1204, 7
  %v1206 = vsub.s32 %v1146, %v1205
  %v1207 = vrot.slane %v1101, %v1206
  %v1208 = vsel %vm1151, %v1207, %v1203
  %v1209 = vlaneseq
  %v1210 = vshrl.u32 %v1209, 7
  %v1211 = vsub.s32 %v25, %v1210
  %v1212 = vrot.slane %v1102, %v1211
  %v1213 = vlaneseq
  %v1214 = vshrl.u32 %v1213, 7
  %v1215 = vsub.s32 %v1139, %v1214
  %v1216 = vrot.slane %v1103, %v1215
  %v1217 = vsel %vm1144, %v1216, %v1212
  %v1218 = vlaneseq
  %v1219 = vshrl.u32 %v1218, 7
  %v1220 = vsub.s32 %v1146, %v1219
  %v1221 = vrot.slane %v1104, %v1220
  %v1222 = vsel %vm1151, %v1221, %v1217
  %v1223 = vlaneseq
  %v1224 = vshrl.u32 %v1223, 7
  %v1225 = vsub.s32 %v25, %v1224
  %v1226 = vrot.slane %v1105, %v1225
  %v1227 = vlaneseq
  %v1228 = vshrl.u32 %v1227, 7
  %v1229 = vsub.s32 %v1139, %v1228
  %v1230 = vrot.slane %v1106, %v1229
  %v1231 = vsel %vm1144, %v1230, %v1226
  %v1232 = vlaneseq
  %v1233 = vshrl.u32 %v1232, 7
  %v1234 = vsub.s32 %v1146, %v1233
  %v1235 = vrot.slane %v1107, %v1234
  %v1236 = vsel %vm1151, %v1235, %v1231
  %v1237 = vlaneseq
  %v1238 = vshrl.u32 %v1237, 7
  %v1239 = vsub.s32 %v25, %v1238
  %v1240 = vrot.slane %v1108, %v1239
  %v1241 = vlaneseq
  %v1242 = vshrl.u32 %v1241, 7
  %v1243 = vsub.s32 %v1139, %v1242
  %v1244 = vrot.slane %v1109, %v1243
  %v1245 = vsel %vm1144, %v1244, %v1240
  %v1246 = vlaneseq
  %v1247 = vshrl.u32 %v1246, 7
  %v1248 = vsub.s32 %v1146, %v1247
  %v1249 = vrot.slane %v1110, %v1248
  %v1250 = vsel %vm1151, %v1249, %v1245
  %vm1251 = vcmask 1041409
  %v1252 = vsel %vm1251, %v1166, %v1152
  %vm1253 = vcmask 1042434
  %v1254 = vsel %vm1253, %v1180, %v1252
  %vm1255 = vcmask 1043459
  %v1256 = vsel %vm1255, %v1194, %v1254
  %vm1257 = vcmask 1044484
  %v1258 = vsel %vm1257, %v1208, %v1256
  %vm1259 = vcmask 1045509
  %v1260 = vsel %vm1259, %v1222, %v1258
  %vm1261 = vcmask 1046534
  %v1262 = vsel %vm1261, %v1236, %v1260
  %vm1263 = vcmask 1047559
  %v1264 = vsel %vm1263, %v1250, %v1262
  %1266 = vst.msk [vmem:[%s5] sm:$0xff] %vm68, %v1264
  %s1267 = scalar_lea.vmem %s3, 192
  %v1268 = vld [vmem:[%s1267] sm:$0xff]
  %v1269 = vld [vmem:[%s1267 + $0x8] sm:$0xff]
  %v1270 = vld [vmem:[%s1267 + $0x10] sm:$0x7f]
  %v1271 = vld [vmem:[%s1267 + $0x18] sm:$0xff]
  %v1272 = vld [vmem:[%s1267 + $0x20] sm:$0xff]
  %v1273 = vld [vmem:[%s1267 + $0x28] sm:$0x7f]
  %v1274 = vld [vmem:[%s1267 + $0x30] sm:$0xff]
  %v1275 = vld [vmem:[%s1267 + $0x38] sm:$0xff]
  %v1276 = vld [vmem:[%s1267 + $0x40] sm:$0x7f]
  %v1277 = vld [vmem:[%s1267 + $0x48] sm:$0xff]
  %v1278 = vld [vmem:[%s1267 + $0x50] sm:$0xff]
  %v1279 = vld [vmem:[%s1267 + $0x58] sm:$0x7f]
  %v1280 = vld [vmem:[%s1267 + $0x60] sm:$0xff]
  %v1281 = vld [vmem:[%s1267 + $0x68] sm:$0xff]
  %v1282 = vld [vmem:[%s1267 + $0x70] sm:$0x7f]
  %v1283 = vld [vmem:[%s1267 + $0x78] sm:$0xff]
  %v1284 = vld [vmem:[%s1267 + $0x80] sm:$0xff]
  %v1285 = vld [vmem:[%s1267 + $0x88] sm:$0x7f]
  %v1286 = vld [vmem:[%s1267 + $0x90] sm:$0xff]
  %v1287 = vld [vmem:[%s1267 + $0x98] sm:$0xff]
  %v1288 = vld [vmem:[%s1267 + $0xa0] sm:$0x7f]
  %v1289 = vld [vmem:[%s1267 + $0xa8] sm:$0xff]
  %v1290 = vld [vmem:[%s1267 + $0xb0] sm:$0xff]
  %v1291 = vld [vmem:[%s1267 + $0xb8] sm:$0x7f]
  %v1292 = vsel %vm68, %v1268, inf
  %1293 = vmin.xlane.f32.xlu0 %v1292
  %v1294 = vpop.xlane.xlu0 %1293
  %v1295 = vsel %vm68, %v1269, inf
  %1296 = vmin.xlane.f32.xlu0 %v1295
  %v1297 = vpop.xlane.xlu0 %1296
  %v1298 = vsel %vm75, %v1270, inf
  %1299 = vmin.xlane.f32.xlu0 %v1298
  %v1300 = vpop.xlane.xlu0 %1299
  %v1301 = vsel %vm68, %v1271, inf
  %1302 = vmin.xlane.f32.xlu0 %v1301
  %v1303 = vpop.xlane.xlu0 %1302
  %v1304 = vsel %vm68, %v1272, inf
  %1305 = vmin.xlane.f32.xlu0 %v1304
  %v1306 = vpop.xlane.xlu0 %1305
  %v1307 = vsel %vm75, %v1273, inf
  %1308 = vmin.xlane.f32.xlu0 %v1307
  %v1309 = vpop.xlane.xlu0 %1308
  %v1310 = vsel %vm68, %v1274, inf
  %1311 = vmin.xlane.f32.xlu0 %v1310
  %v1312 = vpop.xlane.xlu0 %1311
  %v1313 = vsel %vm68, %v1275, inf
  %1314 = vmin.xlane.f32.xlu0 %v1313
  %v1315 = vpop.xlane.xlu0 %1314
  %v1316 = vsel %vm75, %v1276, inf
  %1317 = vmin.xlane.f32.xlu0 %v1316
  %v1318 = vpop.xlane.xlu0 %1317
  %v1319 = vsel %vm68, %v1277, inf
  %1320 = vmin.xlane.f32.xlu0 %v1319
  %v1321 = vpop.xlane.xlu0 %1320
  %v1322 = vsel %vm68, %v1278, inf
  %1323 = vmin.xlane.f32.xlu0 %v1322
  %v1324 = vpop.xlane.xlu0 %1323
  %v1325 = vsel %vm75, %v1279, inf
  %1326 = vmin.xlane.f32.xlu0 %v1325
  %v1327 = vpop.xlane.xlu0 %1326
  %v1328 = vsel %vm68, %v1280, inf
  %1329 = vmin.xlane.f32.xlu0 %v1328
  %v1330 = vpop.xlane.xlu0 %1329
  %v1331 = vsel %vm68, %v1281, inf
  %1332 = vmin.xlane.f32.xlu0 %v1331
  %v1333 = vpop.xlane.xlu0 %1332
  %v1334 = vsel %vm75, %v1282, inf
  %1335 = vmin.xlane.f32.xlu0 %v1334
  %v1336 = vpop.xlane.xlu0 %1335
  %v1337 = vsel %vm68, %v1283, inf
  %1338 = vmin.xlane.f32.xlu0 %v1337
  %v1339 = vpop.xlane.xlu0 %1338
  %v1340 = vsel %vm68, %v1284, inf
  %1341 = vmin.xlane.f32.xlu0 %v1340
  %v1342 = vpop.xlane.xlu0 %1341
  %v1343 = vsel %vm75, %v1285, inf
  %1344 = vmin.xlane.f32.xlu0 %v1343
  %v1345 = vpop.xlane.xlu0 %1344
  %v1346 = vsel %vm68, %v1286, inf
  %1347 = vmin.xlane.f32.xlu0 %v1346
  %v1348 = vpop.xlane.xlu0 %1347
  %v1349 = vsel %vm68, %v1287, inf
  %1350 = vmin.xlane.f32.xlu0 %v1349
  %v1351 = vpop.xlane.xlu0 %1350
  %v1352 = vsel %vm75, %v1288, inf
  %1353 = vmin.xlane.f32.xlu0 %v1352
  %v1354 = vpop.xlane.xlu0 %1353
  %v1355 = vsel %vm68, %v1289, inf
  %1356 = vmin.xlane.f32.xlu0 %v1355
  %v1357 = vpop.xlane.xlu0 %1356
  %v1358 = vsel %vm68, %v1290, inf
  %1359 = vmin.xlane.f32.xlu0 %v1358
  %v1360 = vpop.xlane.xlu0 %1359
  %v1361 = vsel %vm75, %v1291, inf
  %1362 = vmin.xlane.f32.xlu0 %v1361
  %v1363 = vpop.xlane.xlu0 %1362
  %vm1364 = vcmp.gt.f32.partialorder %v1294, 0.0
  %vm1365 = vcmp.gt.f32.partialorder %v1297, 0.0
  %vm1366 = vcmp.gt.f32.partialorder %v1300, 0.0
  %vm1367 = vcmp.gt.f32.partialorder %v1303, 0.0
  %vm1368 = vcmp.gt.f32.partialorder %v1306, 0.0
  %vm1369 = vcmp.gt.f32.partialorder %v1309, 0.0
  %vm1370 = vcmp.gt.f32.partialorder %v1312, 0.0
  %vm1371 = vcmp.gt.f32.partialorder %v1315, 0.0
  %vm1372 = vcmp.gt.f32.partialorder %v1318, 0.0
  %vm1373 = vcmp.gt.f32.partialorder %v1321, 0.0
  %vm1374 = vcmp.gt.f32.partialorder %v1324, 0.0
  %vm1375 = vcmp.gt.f32.partialorder %v1327, 0.0
  %vm1376 = vcmp.gt.f32.partialorder %v1330, 0.0
  %vm1377 = vcmp.gt.f32.partialorder %v1333, 0.0
  %vm1378 = vcmp.gt.f32.partialorder %v1336, 0.0
  %vm1379 = vcmp.gt.f32.partialorder %v1339, 0.0
  %vm1380 = vcmp.gt.f32.partialorder %v1342, 0.0
  %vm1381 = vcmp.gt.f32.partialorder %v1345, 0.0
  %vm1382 = vcmp.gt.f32.partialorder %v1348, 0.0
  %vm1383 = vcmp.gt.f32.partialorder %v1351, 0.0
  %vm1384 = vcmp.gt.f32.partialorder %v1354, 0.0
  %vm1385 = vcmp.gt.f32.partialorder %v1357, 0.0
  %vm1386 = vcmp.gt.f32.partialorder %v1360, 0.0
  %vm1387 = vcmp.gt.f32.partialorder %v1363, 0.0
  %v1388 = vsel %vm1364, 0.0, %v1294
  %v1389 = vsel %vm1365, 0.0, %v1297
  %v1390 = vsel %vm1366, 0.0, %v1300
  %v1391 = vsel %vm1367, 0.0, %v1303
  %v1392 = vsel %vm1368, 0.0, %v1306
  %v1393 = vsel %vm1369, 0.0, %v1309
  %v1394 = vsel %vm1370, 0.0, %v1312
  %v1395 = vsel %vm1371, 0.0, %v1315
  %v1396 = vsel %vm1372, 0.0, %v1318
  %v1397 = vsel %vm1373, 0.0, %v1321
  %v1398 = vsel %vm1374, 0.0, %v1324
  %v1399 = vsel %vm1375, 0.0, %v1327
  %v1400 = vsel %vm1376, 0.0, %v1330
  %v1401 = vsel %vm1377, 0.0, %v1333
  %v1402 = vsel %vm1378, 0.0, %v1336
  %v1403 = vsel %vm1379, 0.0, %v1339
  %v1404 = vsel %vm1380, 0.0, %v1342
  %v1405 = vsel %vm1381, 0.0, %v1345
  %v1406 = vsel %vm1382, 0.0, %v1348
  %v1407 = vsel %vm1383, 0.0, %v1351
  %v1408 = vsel %vm1384, 0.0, %v1354
  %v1409 = vsel %vm1385, 0.0, %v1357
  %v1410 = vsel %vm1386, 0.0, %v1360
  %v1411 = vsel %vm1387, 0.0, %v1363
  %v1412 = vsub.f32 %v1268, %v1388
  %v1413 = vsub.f32 %v1269, %v1389
  %v1414 = vsub.f32 %v1270, %v1390
  %v1415 = vsub.f32 %v1271, %v1391
  %v1416 = vsub.f32 %v1272, %v1392
  %v1417 = vsub.f32 %v1273, %v1393
  %v1418 = vsub.f32 %v1274, %v1394
  %v1419 = vsub.f32 %v1275, %v1395
  %v1420 = vsub.f32 %v1276, %v1396
  %v1421 = vsub.f32 %v1277, %v1397
  %v1422 = vsub.f32 %v1278, %v1398
  %v1423 = vsub.f32 %v1279, %v1399
  %v1424 = vsub.f32 %v1280, %v1400
  %v1425 = vsub.f32 %v1281, %v1401
  %v1426 = vsub.f32 %v1282, %v1402
  %v1427 = vsub.f32 %v1283, %v1403
  %v1428 = vsub.f32 %v1284, %v1404
  %v1429 = vsub.f32 %v1285, %v1405
  %v1430 = vsub.f32 %v1286, %v1406
  %v1431 = vsub.f32 %v1287, %v1407
  %v1432 = vsub.f32 %v1288, %v1408
  %v1433 = vsub.f32 %v1289, %v1409
  %v1434 = vsub.f32 %v1290, %v1410
  %v1435 = vsub.f32 %v1291, %v1411
  %v1436 = vcombine.high %v728, %v728
  %v1438 = vunpack.c.l.s4 1966171168
  %v1439 = vunpack.c.0.s8 %v1438
  %v1440 = vlaneseq
  %v1441 = vshrl.u32 %v1440, 7
  %v1442 = vsub.s32 %v1439, %v1441
  %v1443 = vrot.slane %v728, %v1442
  %v1445 = vunpack.c.l.s4 1966171168
  %v1446 = vunpack.c.0.s8 %v1445
  %v1447 = vlaneseq
  %v1448 = vshrl.u32 %v1447, 7
  %v1449 = vsub.s32 %v1446, %v1448
  %v1450 = vrot.slane %v1436, %v1449
  %v1451 = vcombine.high %v1443, %v1443
  %v1452 = vcombine.high %v1450, %v1450
  %v1454 = vunpack.c.l.s4 1966171168
  %v1455 = vunpack.c.0.s8 %v1454
  %v1456 = vlaneseq
  %v1457 = vshrl.u32 %v1456, 7
  %v1458 = vsub.s32 %v1455, %v1457
  %v1459 = vrot.slane %v1443, %v1458
  %v1461 = vunpack.c.l.s4 1966171168
  %v1462 = vunpack.c.0.s8 %v1461
  %v1463 = vlaneseq
  %v1464 = vshrl.u32 %v1463, 7
  %v1465 = vsub.s32 %v1462, %v1464
  %v1466 = vrot.slane %v1450, %v1465
  %v1468 = vunpack.c.l.s4 1966171168
  %v1469 = vunpack.c.0.s8 %v1468
  %v1470 = vlaneseq
  %v1471 = vshrl.u32 %v1470, 7
  %v1472 = vsub.s32 %v1469, %v1471
  %v1473 = vrot.slane %v1451, %v1472
  %v1475 = vunpack.c.l.s4 1966171168
  %v1476 = vunpack.c.0.s8 %v1475
  %v1477 = vlaneseq
  %v1478 = vshrl.u32 %v1477, 7
  %v1479 = vsub.s32 %v1476, %v1478
  %v1480 = vrot.slane %v1452, %v1479
  %v1481 = vcombine.high %v1459, %v1459
  %v1482 = vcombine.high %v1466, %v1466
  %v1483 = vcombine.high %v1473, %v1473
  %v1484 = vcombine.high %v1480, %v1480
  %vm1485 = vcmp.ne.s32.totalorder %v1459, 0
  %vm1486 = vcmp.ne.s32.totalorder %v1473, 0
  %vm1487 = vcmp.ne.s32.totalorder %v1481, 0
  %vm1488 = vcmp.ne.s32.totalorder %v1483, 0
  %vm1489 = vcmp.ne.s32.totalorder %v1466, 0
  %vm1490 = vcmp.ne.s32.totalorder %v1480, 0
  %vm1491 = vcmp.ne.s32.totalorder %v1482, 0
  %vm1492 = vcmp.ne.s32.totalorder %v1484, 0
  %v1493 = vsel %vm1485, 1, 0
  %v1494 = vsel %vm1486, 1, 0
  %v1495 = vsel %vm1487, 1, 0
  %v1496 = vsel %vm1488, 1, 0
  %v1497 = vsel %vm1489, 1, 0
  %v1498 = vsel %vm1490, 1, 0
  %v1499 = vsel %vm1491, 1, 0
  %v1500 = vsel %vm1492, 1, 0
  %v1501 = vlaneseq
  %v1502 = vshrl.u32 %v1501, 7
  %v1503 = vsub.s32 0, %v1502
  %v1504 = vrot.slane %v1493, %v1503
  %v1505 = vlaneseq
  %v1506 = vshrl.u32 %v1505, 7
  %v1507 = vsub.s32 0, %v1506
  %v1508 = vrot.slane %v1494, %v1507
  %v1509 = vlaneseq
  %v1510 = vshrl.u32 %v1509, 7
  %v1511 = vsub.s32 0, %v1510
  %v1512 = vrot.slane %v1495, %v1511
  %v1513 = vlaneseq
  %v1514 = vshrl.u32 %v1513, 7
  %v1515 = vsub.s32 0, %v1514
  %v1516 = vrot.slane %v1496, %v1515
  %v1517 = vlaneseq
  %v1518 = vshrl.u32 %v1517, 7
  %v1519 = vsub.s32 0, %v1518
  %v1520 = vrot.slane %v1497, %v1519
  %v1521 = vlaneseq
  %v1522 = vshrl.u32 %v1521, 7
  %v1523 = vsub.s32 0, %v1522
  %v1524 = vrot.slane %v1498, %v1523
  %v1525 = vlaneseq
  %v1526 = vshrl.u32 %v1525, 7
  %v1527 = vsub.s32 0, %v1526
  %v1528 = vrot.slane %v1499, %v1527
  %v1529 = vlaneseq
  %v1530 = vshrl.u32 %v1529, 7
  %v1531 = vsub.s32 0, %v1530
  %v1532 = vrot.slane %v1500, %v1531
  %vm1533 = vcmp.eq.s32.totalorder %v1504, 1
  %vm1534 = vcmp.eq.s32.totalorder %v1508, 1
  %vm1535 = vcmp.eq.s32.totalorder %v1512, 1
  %vm1536 = vcmp.eq.s32.totalorder %v1516, 1
  %vm1537 = vcmp.eq.s32.totalorder %v1520, 1
  %vm1538 = vcmp.eq.s32.totalorder %v1524, 1
  %vm1539 = vcmp.eq.s32.totalorder %v1528, 1
  %vm1540 = vcmp.eq.s32.totalorder %v1532, 1
  %v1541 = vsel %vm1533, %v1412, 0.0
  %v1542 = vsel %vm1533, %v1413, 0.0
  %v1543 = vsel %vm1533, %v1414, 0.0
  %v1544 = vsel %vm1534, %v1415, 0.0
  %v1545 = vsel %vm1534, %v1416, 0.0
  %v1546 = vsel %vm1534, %v1417, 0.0
  %v1547 = vsel %vm1535, %v1418, 0.0
  %v1548 = vsel %vm1535, %v1419, 0.0
  %v1549 = vsel %vm1535, %v1420, 0.0
  %v1550 = vsel %vm1536, %v1421, 0.0
  %v1551 = vsel %vm1536, %v1422, 0.0
  %v1552 = vsel %vm1536, %v1423, 0.0
  %v1553 = vsel %vm1537, %v1424, 0.0
  %v1554 = vsel %vm1537, %v1425, 0.0
  %v1555 = vsel %vm1537, %v1426, 0.0
  %v1556 = vsel %vm1538, %v1427, 0.0
  %v1557 = vsel %vm1538, %v1428, 0.0
  %v1558 = vsel %vm1538, %v1429, 0.0
  %v1559 = vsel %vm1539, %v1430, 0.0
  %v1560 = vsel %vm1539, %v1431, 0.0
  %v1561 = vsel %vm1539, %v1432, 0.0
  %v1562 = vsel %vm1540, %v1433, 0.0
  %v1563 = vsel %vm1540, %v1434, 0.0
  %v1564 = vsel %vm1540, %v1435, 0.0
  %v1565 = vsel %vm68, %v1541, 0.0
  %1566 = vadd.xlane.f32.xlu0 %v1565
  %v1567 = vpop.xlane.xlu0 %1566
  %v1568 = vsel %vm68, %v1542, 0.0
  %1569 = vadd.xlane.f32.xlu0 %v1568
  %v1570 = vpop.xlane.xlu0 %1569
  %v1571 = vsel %vm75, %v1543, 0.0
  %1572 = vadd.xlane.f32.xlu0 %v1571
  %v1573 = vpop.xlane.xlu0 %1572
  %v1574 = vsel %vm68, %v1544, 0.0
  %1575 = vadd.xlane.f32.xlu0 %v1574
  %v1576 = vpop.xlane.xlu0 %1575
  %v1577 = vsel %vm68, %v1545, 0.0
  %1578 = vadd.xlane.f32.xlu0 %v1577
  %v1579 = vpop.xlane.xlu0 %1578
  %v1580 = vsel %vm75, %v1546, 0.0
  %1581 = vadd.xlane.f32.xlu0 %v1580
  %v1582 = vpop.xlane.xlu0 %1581
  %v1583 = vsel %vm68, %v1547, 0.0
  %1584 = vadd.xlane.f32.xlu0 %v1583
  %v1585 = vpop.xlane.xlu0 %1584
  %v1586 = vsel %vm68, %v1548, 0.0
  %1587 = vadd.xlane.f32.xlu0 %v1586
  %v1588 = vpop.xlane.xlu0 %1587
  %v1589 = vsel %vm75, %v1549, 0.0
  %1590 = vadd.xlane.f32.xlu0 %v1589
  %v1591 = vpop.xlane.xlu0 %1590
  %v1592 = vsel %vm68, %v1550, 0.0
  %1593 = vadd.xlane.f32.xlu0 %v1592
  %v1594 = vpop.xlane.xlu0 %1593
  %v1595 = vsel %vm68, %v1551, 0.0
  %1596 = vadd.xlane.f32.xlu0 %v1595
  %v1597 = vpop.xlane.xlu0 %1596
  %v1598 = vsel %vm75, %v1552, 0.0
  %1599 = vadd.xlane.f32.xlu0 %v1598
  %v1600 = vpop.xlane.xlu0 %1599
  %v1601 = vsel %vm68, %v1553, 0.0
  %1602 = vadd.xlane.f32.xlu0 %v1601
  %v1603 = vpop.xlane.xlu0 %1602
  %v1604 = vsel %vm68, %v1554, 0.0
  %1605 = vadd.xlane.f32.xlu0 %v1604
  %v1606 = vpop.xlane.xlu0 %1605
  %v1607 = vsel %vm75, %v1555, 0.0
  %1608 = vadd.xlane.f32.xlu0 %v1607
  %v1609 = vpop.xlane.xlu0 %1608
  %v1610 = vsel %vm68, %v1556, 0.0
  %1611 = vadd.xlane.f32.xlu0 %v1610
  %v1612 = vpop.xlane.xlu0 %1611
  %v1613 = vsel %vm68, %v1557, 0.0
  %1614 = vadd.xlane.f32.xlu0 %v1613
  %v1615 = vpop.xlane.xlu0 %1614
  %v1616 = vsel %vm75, %v1558, 0.0
  %1617 = vadd.xlane.f32.xlu0 %v1616
  %v1618 = vpop.xlane.xlu0 %1617
  %v1619 = vsel %vm68, %v1559, 0.0
  %1620 = vadd.xlane.f32.xlu0 %v1619
  %v1621 = vpop.xlane.xlu0 %1620
  %v1622 = vsel %vm68, %v1560, 0.0
  %1623 = vadd.xlane.f32.xlu0 %v1622
  %v1624 = vpop.xlane.xlu0 %1623
  %v1625 = vsel %vm75, %v1561, 0.0
  %1626 = vadd.xlane.f32.xlu0 %v1625
  %v1627 = vpop.xlane.xlu0 %1626
  %v1628 = vsel %vm68, %v1562, 0.0
  %1629 = vadd.xlane.f32.xlu0 %v1628
  %v1630 = vpop.xlane.xlu0 %1629
  %v1631 = vsel %vm68, %v1563, 0.0
  %1632 = vadd.xlane.f32.xlu0 %v1631
  %v1633 = vpop.xlane.xlu0 %1632
  %v1634 = vsel %vm75, %v1564, 0.0
  %1635 = vadd.xlane.f32.xlu0 %v1634
  %v1636 = vpop.xlane.xlu0 %1635
  %v1637 = vmul.f32 %v1541, %v41
  %v1638 = vmul.f32 %v1542, %v42
  %v1639 = vmul.f32 %v1543, %v43
  %v1640 = vmul.f32 %v1544, %v41
  %v1641 = vmul.f32 %v1545, %v42
  %v1642 = vmul.f32 %v1546, %v43
  %v1643 = vmul.f32 %v1547, %v41
  %v1644 = vmul.f32 %v1548, %v42
  %v1645 = vmul.f32 %v1549, %v43
  %v1646 = vmul.f32 %v1550, %v41
  %v1647 = vmul.f32 %v1551, %v42
  %v1648 = vmul.f32 %v1552, %v43
  %v1649 = vmul.f32 %v1553, %v41
  %v1650 = vmul.f32 %v1554, %v42
  %v1651 = vmul.f32 %v1555, %v43
  %v1652 = vmul.f32 %v1556, %v41
  %v1653 = vmul.f32 %v1557, %v42
  %v1654 = vmul.f32 %v1558, %v43
  %v1655 = vmul.f32 %v1559, %v41
  %v1656 = vmul.f32 %v1560, %v42
  %v1657 = vmul.f32 %v1561, %v43
  %v1658 = vmul.f32 %v1562, %v41
  %v1659 = vmul.f32 %v1563, %v42
  %v1660 = vmul.f32 %v1564, %v43
  %v1661 = vsel %vm68, %v1637, 0.0
  %1662 = vadd.xlane.f32.xlu0 %v1661
  %v1663 = vpop.xlane.xlu0 %1662
  %v1664 = vsel %vm68, %v1638, 0.0
  %1665 = vadd.xlane.f32.xlu0 %v1664
  %v1666 = vpop.xlane.xlu0 %1665
  %v1667 = vsel %vm75, %v1639, 0.0
  %1668 = vadd.xlane.f32.xlu0 %v1667
  %v1669 = vpop.xlane.xlu0 %1668
  %v1670 = vsel %vm68, %v1640, 0.0
  %1671 = vadd.xlane.f32.xlu0 %v1670
  %v1672 = vpop.xlane.xlu0 %1671
  %v1673 = vsel %vm68, %v1641, 0.0
  %1674 = vadd.xlane.f32.xlu0 %v1673
  %v1675 = vpop.xlane.xlu0 %1674
  %v1676 = vsel %vm75, %v1642, 0.0
  %1677 = vadd.xlane.f32.xlu0 %v1676
  %v1678 = vpop.xlane.xlu0 %1677
  %v1679 = vsel %vm68, %v1643, 0.0
  %1680 = vadd.xlane.f32.xlu0 %v1679
  %v1681 = vpop.xlane.xlu0 %1680
  %v1682 = vsel %vm68, %v1644, 0.0
  %1683 = vadd.xlane.f32.xlu0 %v1682
  %v1684 = vpop.xlane.xlu0 %1683
  %v1685 = vsel %vm75, %v1645, 0.0
  %1686 = vadd.xlane.f32.xlu0 %v1685
  %v1687 = vpop.xlane.xlu0 %1686
  %v1688 = vsel %vm68, %v1646, 0.0
  %1689 = vadd.xlane.f32.xlu0 %v1688
  %v1690 = vpop.xlane.xlu0 %1689
  %v1691 = vsel %vm68, %v1647, 0.0
  %1692 = vadd.xlane.f32.xlu0 %v1691
  %v1693 = vpop.xlane.xlu0 %1692
  %v1694 = vsel %vm75, %v1648, 0.0
  %1695 = vadd.xlane.f32.xlu0 %v1694
  %v1696 = vpop.xlane.xlu0 %1695
  %v1697 = vsel %vm68, %v1649, 0.0
  %1698 = vadd.xlane.f32.xlu0 %v1697
  %v1699 = vpop.xlane.xlu0 %1698
  %v1700 = vsel %vm68, %v1650, 0.0
  %1701 = vadd.xlane.f32.xlu0 %v1700
  %v1702 = vpop.xlane.xlu0 %1701
  %v1703 = vsel %vm75, %v1651, 0.0
  %1704 = vadd.xlane.f32.xlu0 %v1703
  %v1705 = vpop.xlane.xlu0 %1704
  %v1706 = vsel %vm68, %v1652, 0.0
  %1707 = vadd.xlane.f32.xlu0 %v1706
  %v1708 = vpop.xlane.xlu0 %1707
  %v1709 = vsel %vm68, %v1653, 0.0
  %1710 = vadd.xlane.f32.xlu0 %v1709
  %v1711 = vpop.xlane.xlu0 %1710
  %v1712 = vsel %vm75, %v1654, 0.0
  %1713 = vadd.xlane.f32.xlu0 %v1712
  %v1714 = vpop.xlane.xlu0 %1713
  %v1715 = vsel %vm68, %v1655, 0.0
  %1716 = vadd.xlane.f32.xlu0 %v1715
  %v1717 = vpop.xlane.xlu0 %1716
  %v1718 = vsel %vm68, %v1656, 0.0
  %1719 = vadd.xlane.f32.xlu0 %v1718
  %v1720 = vpop.xlane.xlu0 %1719
  %v1721 = vsel %vm75, %v1657, 0.0
  %1722 = vadd.xlane.f32.xlu0 %v1721
  %v1723 = vpop.xlane.xlu0 %1722
  %v1724 = vsel %vm68, %v1658, 0.0
  %1725 = vadd.xlane.f32.xlu0 %v1724
  %v1726 = vpop.xlane.xlu0 %1725
  %v1727 = vsel %vm68, %v1659, 0.0
  %1728 = vadd.xlane.f32.xlu0 %v1727
  %v1729 = vpop.xlane.xlu0 %1728
  %v1730 = vsel %vm75, %v1660, 0.0
  %1731 = vadd.xlane.f32.xlu0 %v1730
  %v1732 = vpop.xlane.xlu0 %1731
  %v1733 = vrcp.pop %v1567
  %v1734 = vmul.f32 %v1663, %v1733
  %v1735 = vrcp.pop %v1570
  %v1736 = vmul.f32 %v1666, %v1735
  %v1737 = vrcp.pop %v1573
  %v1738 = vmul.f32 %v1669, %v1737
  %v1739 = vrcp.pop %v1576
  %v1740 = vmul.f32 %v1672, %v1739
  %v1741 = vrcp.pop %v1579
  %v1742 = vmul.f32 %v1675, %v1741
  %v1743 = vrcp.pop %v1582
  %v1744 = vmul.f32 %v1678, %v1743
  %v1745 = vrcp.pop %v1585
  %v1746 = vmul.f32 %v1681, %v1745
  %v1747 = vrcp.pop %v1588
  %v1748 = vmul.f32 %v1684, %v1747
  %v1749 = vrcp.pop %v1591
  %v1750 = vmul.f32 %v1687, %v1749
  %v1751 = vrcp.pop %v1594
  %v1752 = vmul.f32 %v1690, %v1751
  %v1753 = vrcp.pop %v1597
  %v1754 = vmul.f32 %v1693, %v1753
  %v1755 = vrcp.pop %v1600
  %v1756 = vmul.f32 %v1696, %v1755
  %v1757 = vrcp.pop %v1603
  %v1758 = vmul.f32 %v1699, %v1757
  %v1759 = vrcp.pop %v1606
  %v1760 = vmul.f32 %v1702, %v1759
  %v1761 = vrcp.pop %v1609
  %v1762 = vmul.f32 %v1705, %v1761
  %v1763 = vrcp.pop %v1612
  %v1764 = vmul.f32 %v1708, %v1763
  %v1765 = vrcp.pop %v1615
  %v1766 = vmul.f32 %v1711, %v1765
  %v1767 = vrcp.pop %v1618
  %v1768 = vmul.f32 %v1714, %v1767
  %v1769 = vrcp.pop %v1621
  %v1770 = vmul.f32 %v1717, %v1769
  %v1771 = vrcp.pop %v1624
  %v1772 = vmul.f32 %v1720, %v1771
  %v1773 = vrcp.pop %v1627
  %v1774 = vmul.f32 %v1723, %v1773
  %v1775 = vrcp.pop %v1630
  %v1776 = vmul.f32 %v1726, %v1775
  %v1777 = vrcp.pop %v1633
  %v1778 = vmul.f32 %v1729, %v1777
  %v1779 = vrcp.pop %v1636
  %v1780 = vmul.f32 %v1732, %v1779
  %s1781 = scalar_lea.vmem %s4, 192
  %v1782 = vld [vmem:[%s1781] sm:$0xff]
  %v1783 = vld [vmem:[%s1781 + $0x8] sm:$0xff]
  %v1784 = vld [vmem:[%s1781 + $0x10] sm:$0x7f]
  %v1785 = vld [vmem:[%s1781 + $0x18] sm:$0xff]
  %v1786 = vld [vmem:[%s1781 + $0x20] sm:$0xff]
  %v1787 = vld [vmem:[%s1781 + $0x28] sm:$0x7f]
  %v1788 = vld [vmem:[%s1781 + $0x30] sm:$0xff]
  %v1789 = vld [vmem:[%s1781 + $0x38] sm:$0xff]
  %v1790 = vld [vmem:[%s1781 + $0x40] sm:$0x7f]
  %v1791 = vld [vmem:[%s1781 + $0x48] sm:$0xff]
  %v1792 = vld [vmem:[%s1781 + $0x50] sm:$0xff]
  %v1793 = vld [vmem:[%s1781 + $0x58] sm:$0x7f]
  %v1794 = vld [vmem:[%s1781 + $0x60] sm:$0xff]
  %v1795 = vld [vmem:[%s1781 + $0x68] sm:$0xff]
  %v1796 = vld [vmem:[%s1781 + $0x70] sm:$0x7f]
  %v1797 = vld [vmem:[%s1781 + $0x78] sm:$0xff]
  %v1798 = vld [vmem:[%s1781 + $0x80] sm:$0xff]
  %v1799 = vld [vmem:[%s1781 + $0x88] sm:$0x7f]
  %v1800 = vld [vmem:[%s1781 + $0x90] sm:$0xff]
  %v1801 = vld [vmem:[%s1781 + $0x98] sm:$0xff]
  %v1802 = vld [vmem:[%s1781 + $0xa0] sm:$0x7f]
  %v1803 = vld [vmem:[%s1781 + $0xa8] sm:$0xff]
  %v1804 = vld [vmem:[%s1781 + $0xb0] sm:$0xff]
  %v1805 = vld [vmem:[%s1781 + $0xb8] sm:$0x7f]
  %v1806 = vsel %vm68, %v1782, inf
  %1807 = vmin.xlane.f32.xlu0 %v1806
  %v1808 = vpop.xlane.xlu0 %1807
  %v1809 = vsel %vm68, %v1783, inf
  %1810 = vmin.xlane.f32.xlu0 %v1809
  %v1811 = vpop.xlane.xlu0 %1810
  %v1812 = vsel %vm75, %v1784, inf
  %1813 = vmin.xlane.f32.xlu0 %v1812
  %v1814 = vpop.xlane.xlu0 %1813
  %v1815 = vsel %vm68, %v1785, inf
  %1816 = vmin.xlane.f32.xlu0 %v1815
  %v1817 = vpop.xlane.xlu0 %1816
  %v1818 = vsel %vm68, %v1786, inf
  %1819 = vmin.xlane.f32.xlu0 %v1818
  %v1820 = vpop.xlane.xlu0 %1819
  %v1821 = vsel %vm75, %v1787, inf
  %1822 = vmin.xlane.f32.xlu0 %v1821
  %v1823 = vpop.xlane.xlu0 %1822
  %v1824 = vsel %vm68, %v1788, inf
  %1825 = vmin.xlane.f32.xlu0 %v1824
  %v1826 = vpop.xlane.xlu0 %1825
  %v1827 = vsel %vm68, %v1789, inf
  %1828 = vmin.xlane.f32.xlu0 %v1827
  %v1829 = vpop.xlane.xlu0 %1828
  %v1830 = vsel %vm75, %v1790, inf
  %1831 = vmin.xlane.f32.xlu0 %v1830
  %v1832 = vpop.xlane.xlu0 %1831
  %v1833 = vsel %vm68, %v1791, inf
  %1834 = vmin.xlane.f32.xlu0 %v1833
  %v1835 = vpop.xlane.xlu0 %1834
  %v1836 = vsel %vm68, %v1792, inf
  %1837 = vmin.xlane.f32.xlu0 %v1836
  %v1838 = vpop.xlane.xlu0 %1837
  %v1839 = vsel %vm75, %v1793, inf
  %1840 = vmin.xlane.f32.xlu0 %v1839
  %v1841 = vpop.xlane.xlu0 %1840
  %v1842 = vsel %vm68, %v1794, inf
  %1843 = vmin.xlane.f32.xlu0 %v1842
  %v1844 = vpop.xlane.xlu0 %1843
  %v1845 = vsel %vm68, %v1795, inf
  %1846 = vmin.xlane.f32.xlu0 %v1845
  %v1847 = vpop.xlane.xlu0 %1846
  %v1848 = vsel %vm75, %v1796, inf
  %1849 = vmin.xlane.f32.xlu0 %v1848
  %v1850 = vpop.xlane.xlu0 %1849
  %v1851 = vsel %vm68, %v1797, inf
  %1852 = vmin.xlane.f32.xlu0 %v1851
  %v1853 = vpop.xlane.xlu0 %1852
  %v1854 = vsel %vm68, %v1798, inf
  %1855 = vmin.xlane.f32.xlu0 %v1854
  %v1856 = vpop.xlane.xlu0 %1855
  %v1857 = vsel %vm75, %v1799, inf
  %1858 = vmin.xlane.f32.xlu0 %v1857
  %v1859 = vpop.xlane.xlu0 %1858
  %v1860 = vsel %vm68, %v1800, inf
  %1861 = vmin.xlane.f32.xlu0 %v1860
  %v1862 = vpop.xlane.xlu0 %1861
  %v1863 = vsel %vm68, %v1801, inf
  %1864 = vmin.xlane.f32.xlu0 %v1863
  %v1865 = vpop.xlane.xlu0 %1864
  %v1866 = vsel %vm75, %v1802, inf
  %1867 = vmin.xlane.f32.xlu0 %v1866
  %v1868 = vpop.xlane.xlu0 %1867
  %v1869 = vsel %vm68, %v1803, inf
  %1870 = vmin.xlane.f32.xlu0 %v1869
  %v1871 = vpop.xlane.xlu0 %1870
  %v1872 = vsel %vm68, %v1804, inf
  %1873 = vmin.xlane.f32.xlu0 %v1872
  %v1874 = vpop.xlane.xlu0 %1873
  %v1875 = vsel %vm75, %v1805, inf
  %1876 = vmin.xlane.f32.xlu0 %v1875
  %v1877 = vpop.xlane.xlu0 %1876
  %vm1878 = vcmp.gt.f32.partialorder %v1808, 0.0
  %vm1879 = vcmp.gt.f32.partialorder %v1811, 0.0
  %vm1880 = vcmp.gt.f32.partialorder %v1814, 0.0
  %vm1881 = vcmp.gt.f32.partialorder %v1817, 0.0
  %vm1882 = vcmp.gt.f32.partialorder %v1820, 0.0
  %vm1883 = vcmp.gt.f32.partialorder %v1823, 0.0
  %vm1884 = vcmp.gt.f32.partialorder %v1826, 0.0
  %vm1885 = vcmp.gt.f32.partialorder %v1829, 0.0
  %vm1886 = vcmp.gt.f32.partialorder %v1832, 0.0
  %vm1887 = vcmp.gt.f32.partialorder %v1835, 0.0
  %vm1888 = vcmp.gt.f32.partialorder %v1838, 0.0
  %vm1889 = vcmp.gt.f32.partialorder %v1841, 0.0
  %vm1890 = vcmp.gt.f32.partialorder %v1844, 0.0
  %vm1891 = vcmp.gt.f32.partialorder %v1847, 0.0
  %vm1892 = vcmp.gt.f32.partialorder %v1850, 0.0
  %vm1893 = vcmp.gt.f32.partialorder %v1853, 0.0
  %vm1894 = vcmp.gt.f32.partialorder %v1856, 0.0
  %vm1895 = vcmp.gt.f32.partialorder %v1859, 0.0
  %vm1896 = vcmp.gt.f32.partialorder %v1862, 0.0
  %vm1897 = vcmp.gt.f32.partialorder %v1865, 0.0
  %vm1898 = vcmp.gt.f32.partialorder %v1868, 0.0
  %vm1899 = vcmp.gt.f32.partialorder %v1871, 0.0
  %vm1900 = vcmp.gt.f32.partialorder %v1874, 0.0
  %vm1901 = vcmp.gt.f32.partialorder %v1877, 0.0
  %v1902 = vsel %vm1878, 0.0, %v1808
  %v1903 = vsel %vm1879, 0.0, %v1811
  %v1904 = vsel %vm1880, 0.0, %v1814
  %v1905 = vsel %vm1881, 0.0, %v1817
  %v1906 = vsel %vm1882, 0.0, %v1820
  %v1907 = vsel %vm1883, 0.0, %v1823
  %v1908 = vsel %vm1884, 0.0, %v1826
  %v1909 = vsel %vm1885, 0.0, %v1829
  %v1910 = vsel %vm1886, 0.0, %v1832
  %v1911 = vsel %vm1887, 0.0, %v1835
  %v1912 = vsel %vm1888, 0.0, %v1838
  %v1913 = vsel %vm1889, 0.0, %v1841
  %v1914 = vsel %vm1890, 0.0, %v1844
  %v1915 = vsel %vm1891, 0.0, %v1847
  %v1916 = vsel %vm1892, 0.0, %v1850
  %v1917 = vsel %vm1893, 0.0, %v1853
  %v1918 = vsel %vm1894, 0.0, %v1856
  %v1919 = vsel %vm1895, 0.0, %v1859
  %v1920 = vsel %vm1896, 0.0, %v1862
  %v1921 = vsel %vm1897, 0.0, %v1865
  %v1922 = vsel %vm1898, 0.0, %v1868
  %v1923 = vsel %vm1899, 0.0, %v1871
  %v1924 = vsel %vm1900, 0.0, %v1874
  %v1925 = vsel %vm1901, 0.0, %v1877
  %v1926 = vsub.f32 %v1782, %v1902
  %v1927 = vsub.f32 %v1783, %v1903
  %v1928 = vsub.f32 %v1784, %v1904
  %v1929 = vsub.f32 %v1785, %v1905
  %v1930 = vsub.f32 %v1786, %v1906
  %v1931 = vsub.f32 %v1787, %v1907
  %v1932 = vsub.f32 %v1788, %v1908
  %v1933 = vsub.f32 %v1789, %v1909
  %v1934 = vsub.f32 %v1790, %v1910
  %v1935 = vsub.f32 %v1791, %v1911
  %v1936 = vsub.f32 %v1792, %v1912
  %v1937 = vsub.f32 %v1793, %v1913
  %v1938 = vsub.f32 %v1794, %v1914
  %v1939 = vsub.f32 %v1795, %v1915
  %v1940 = vsub.f32 %v1796, %v1916
  %v1941 = vsub.f32 %v1797, %v1917
  %v1942 = vsub.f32 %v1798, %v1918
  %v1943 = vsub.f32 %v1799, %v1919
  %v1944 = vsub.f32 %v1800, %v1920
  %v1945 = vsub.f32 %v1801, %v1921
  %v1946 = vsub.f32 %v1802, %v1922
  %v1947 = vsub.f32 %v1803, %v1923
  %v1948 = vsub.f32 %v1804, %v1924
  %v1949 = vsub.f32 %v1805, %v1925
  %v1950 = vsel %vm730, %v1926, 0.0
  %v1951 = vsel %vm731, %v1927, 0.0
  %v1952 = vsel %vm732, %v1928, 0.0
  %v1953 = vsel %vm730, %v1929, 0.0
  %v1954 = vsel %vm731, %v1930, 0.0
  %v1955 = vsel %vm732, %v1931, 0.0
  %v1956 = vsel %vm730, %v1932, 0.0
  %v1957 = vsel %vm731, %v1933, 0.0
  %v1958 = vsel %vm732, %v1934, 0.0
  %v1959 = vsel %vm730, %v1935, 0.0
  %v1960 = vsel %vm731, %v1936, 0.0
  %v1961 = vsel %vm732, %v1937, 0.0
  %v1962 = vsel %vm730, %v1938, 0.0
  %v1963 = vsel %vm731, %v1939, 0.0
  %v1964 = vsel %vm732, %v1940, 0.0
  %v1965 = vsel %vm730, %v1941, 0.0
  %v1966 = vsel %vm731, %v1942, 0.0
  %v1967 = vsel %vm732, %v1943, 0.0
  %v1968 = vsel %vm730, %v1944, 0.0
  %v1969 = vsel %vm731, %v1945, 0.0
  %v1970 = vsel %vm732, %v1946, 0.0
  %v1971 = vsel %vm730, %v1947, 0.0
  %v1972 = vsel %vm731, %v1948, 0.0
  %v1973 = vsel %vm732, %v1949, 0.0
  %v1974 = vsel %vm68, %v1950, 0.0
  %1975 = vadd.xlane.f32.xlu0 %v1974
  %v1976 = vpop.xlane.xlu0 %1975
  %v1977 = vsel %vm68, %v1951, 0.0
  %1978 = vadd.xlane.f32.xlu0 %v1977
  %v1979 = vpop.xlane.xlu0 %1978
  %v1980 = vsel %vm75, %v1952, 0.0
  %1981 = vadd.xlane.f32.xlu0 %v1980
  %v1982 = vpop.xlane.xlu0 %1981
  %v1983 = vsel %vm68, %v1953, 0.0
  %1984 = vadd.xlane.f32.xlu0 %v1983
  %v1985 = vpop.xlane.xlu0 %1984
  %v1986 = vsel %vm68, %v1954, 0.0
  %1987 = vadd.xlane.f32.xlu0 %v1986
  %v1988 = vpop.xlane.xlu0 %1987
  %v1989 = vsel %vm75, %v1955, 0.0
  %1990 = vadd.xlane.f32.xlu0 %v1989
  %v1991 = vpop.xlane.xlu0 %1990
  %v1992 = vsel %vm68, %v1956, 0.0
  %1993 = vadd.xlane.f32.xlu0 %v1992
  %v1994 = vpop.xlane.xlu0 %1993
  %v1995 = vsel %vm68, %v1957, 0.0
  %1996 = vadd.xlane.f32.xlu0 %v1995
  %v1997 = vpop.xlane.xlu0 %1996
  %v1998 = vsel %vm75, %v1958, 0.0
  %1999 = vadd.xlane.f32.xlu0 %v1998
  %v2000 = vpop.xlane.xlu0 %1999
  %v2001 = vsel %vm68, %v1959, 0.0
  %2002 = vadd.xlane.f32.xlu0 %v2001
  %v2003 = vpop.xlane.xlu0 %2002
  %v2004 = vsel %vm68, %v1960, 0.0
  %2005 = vadd.xlane.f32.xlu0 %v2004
  %v2006 = vpop.xlane.xlu0 %2005
  %v2007 = vsel %vm75, %v1961, 0.0
  %2008 = vadd.xlane.f32.xlu0 %v2007
  %v2009 = vpop.xlane.xlu0 %2008
  %v2010 = vsel %vm68, %v1962, 0.0
  %2011 = vadd.xlane.f32.xlu0 %v2010
  %v2012 = vpop.xlane.xlu0 %2011
  %v2013 = vsel %vm68, %v1963, 0.0
  %2014 = vadd.xlane.f32.xlu0 %v2013
  %v2015 = vpop.xlane.xlu0 %2014
  %v2016 = vsel %vm75, %v1964, 0.0
  %2017 = vadd.xlane.f32.xlu0 %v2016
  %v2018 = vpop.xlane.xlu0 %2017
  %v2019 = vsel %vm68, %v1965, 0.0
  %2020 = vadd.xlane.f32.xlu0 %v2019
  %v2021 = vpop.xlane.xlu0 %2020
  %v2022 = vsel %vm68, %v1966, 0.0
  %2023 = vadd.xlane.f32.xlu0 %v2022
  %v2024 = vpop.xlane.xlu0 %2023
  %v2025 = vsel %vm75, %v1967, 0.0
  %2026 = vadd.xlane.f32.xlu0 %v2025
  %v2027 = vpop.xlane.xlu0 %2026
  %v2028 = vsel %vm68, %v1968, 0.0
  %2029 = vadd.xlane.f32.xlu0 %v2028
  %v2030 = vpop.xlane.xlu0 %2029
  %v2031 = vsel %vm68, %v1969, 0.0
  %2032 = vadd.xlane.f32.xlu0 %v2031
  %v2033 = vpop.xlane.xlu0 %2032
  %v2034 = vsel %vm75, %v1970, 0.0
  %2035 = vadd.xlane.f32.xlu0 %v2034
  %v2036 = vpop.xlane.xlu0 %2035
  %v2037 = vsel %vm68, %v1971, 0.0
  %2038 = vadd.xlane.f32.xlu0 %v2037
  %v2039 = vpop.xlane.xlu0 %2038
  %v2040 = vsel %vm68, %v1972, 0.0
  %2041 = vadd.xlane.f32.xlu0 %v2040
  %v2042 = vpop.xlane.xlu0 %2041
  %v2043 = vsel %vm75, %v1973, 0.0
  %2044 = vadd.xlane.f32.xlu0 %v2043
  %v2045 = vpop.xlane.xlu0 %2044
  %v2047 = vcombine.high %v39, %v39
  %v2049 = vunpack.c.l.s4 1966171168
  %v2050 = vunpack.c.0.s8 %v2049
  %v2051 = vlaneseq
  %v2052 = vshrl.u32 %v2051, 7
  %v2053 = vsub.s32 %v2050, %v2052
  %v2054 = vrot.slane %v39, %v2053
  %v2056 = vunpack.c.l.s4 1966171168
  %v2057 = vunpack.c.0.s8 %v2056
  %v2058 = vlaneseq
  %v2059 = vshrl.u32 %v2058, 7
  %v2060 = vsub.s32 %v2057, %v2059
  %v2061 = vrot.slane %v2047, %v2060
  %v2062 = vcombine.high %v2054, %v2054
  %v2063 = vcombine.high %v2061, %v2061
  %v2065 = vunpack.c.l.s4 1966171168
  %v2066 = vunpack.c.0.s8 %v2065
  %v2067 = vlaneseq
  %v2068 = vshrl.u32 %v2067, 7
  %v2069 = vsub.s32 %v2066, %v2068
  %v2070 = vrot.slane %v2054, %v2069
  %v2072 = vunpack.c.l.s4 1966171168
  %v2073 = vunpack.c.0.s8 %v2072
  %v2074 = vlaneseq
  %v2075 = vshrl.u32 %v2074, 7
  %v2076 = vsub.s32 %v2073, %v2075
  %v2077 = vrot.slane %v2061, %v2076
  %v2079 = vunpack.c.l.s4 1966171168
  %v2080 = vunpack.c.0.s8 %v2079
  %v2081 = vlaneseq
  %v2082 = vshrl.u32 %v2081, 7
  %v2083 = vsub.s32 %v2080, %v2082
  %v2084 = vrot.slane %v2062, %v2083
  %v2086 = vunpack.c.l.s4 1966171168
  %v2087 = vunpack.c.0.s8 %v2086
  %v2088 = vlaneseq
  %v2089 = vshrl.u32 %v2088, 7
  %v2090 = vsub.s32 %v2087, %v2089
  %v2091 = vrot.slane %v2063, %v2090
  %v2092 = vcombine.high %v2070, %v2070
  %v2093 = vcombine.high %v2077, %v2077
  %v2094 = vcombine.high %v2084, %v2084
  %v2095 = vcombine.high %v2091, %v2091
  %v2096 = vlaneseq
  %v2097 = vshrl.u32 %v2096, 7
  %v2098 = vsub.s32 0, %v2097
  %v2099 = vrot.slane %v2070, %v2098
  %v2100 = vlaneseq
  %v2101 = vshrl.u32 %v2100, 7
  %v2102 = vsub.s32 0, %v2101
  %v2103 = vrot.slane %v2084, %v2102
  %v2104 = vlaneseq
  %v2105 = vshrl.u32 %v2104, 7
  %v2106 = vsub.s32 0, %v2105
  %v2107 = vrot.slane %v2092, %v2106
  %v2108 = vlaneseq
  %v2109 = vshrl.u32 %v2108, 7
  %v2110 = vsub.s32 0, %v2109
  %v2111 = vrot.slane %v2094, %v2110
  %v2112 = vlaneseq
  %v2113 = vshrl.u32 %v2112, 7
  %v2114 = vsub.s32 0, %v2113
  %v2115 = vrot.slane %v2077, %v2114
  %v2116 = vlaneseq
  %v2117 = vshrl.u32 %v2116, 7
  %v2118 = vsub.s32 0, %v2117
  %v2119 = vrot.slane %v2091, %v2118
  %v2120 = vlaneseq
  %v2121 = vshrl.u32 %v2120, 7
  %v2122 = vsub.s32 0, %v2121
  %v2123 = vrot.slane %v2093, %v2122
  %v2124 = vlaneseq
  %v2125 = vshrl.u32 %v2124, 7
  %v2126 = vsub.s32 0, %v2125
  %v2127 = vrot.slane %v2095, %v2126
  %v2136 = vmul.f32 %v1950, %v2099
  %v2137 = vmul.f32 %v1951, %v2099
  %v2138 = vmul.f32 %v1952, %v2099
  %v2139 = vmul.f32 %v1953, %v2103
  %v2140 = vmul.f32 %v1954, %v2103
  %v2141 = vmul.f32 %v1955, %v2103
  %v2142 = vmul.f32 %v1956, %v2107
  %v2143 = vmul.f32 %v1957, %v2107
  %v2144 = vmul.f32 %v1958, %v2107
  %v2145 = vmul.f32 %v1959, %v2111
  %v2146 = vmul.f32 %v1960, %v2111
  %v2147 = vmul.f32 %v1961, %v2111
  %v2148 = vmul.f32 %v1962, %v2115
  %v2149 = vmul.f32 %v1963, %v2115
  %v2150 = vmul.f32 %v1964, %v2115
  %v2151 = vmul.f32 %v1965, %v2119
  %v2152 = vmul.f32 %v1966, %v2119
  %v2153 = vmul.f32 %v1967, %v2119
  %v2154 = vmul.f32 %v1968, %v2123
  %v2155 = vmul.f32 %v1969, %v2123
  %v2156 = vmul.f32 %v1970, %v2123
  %v2157 = vmul.f32 %v1971, %v2127
  %v2158 = vmul.f32 %v1972, %v2127
  %v2159 = vmul.f32 %v1973, %v2127
  %v2160 = vsel %vm68, %v2136, 0.0
  %2161 = vadd.xlane.f32.xlu0 %v2160
  %v2162 = vpop.xlane.xlu0 %2161
  %v2163 = vsel %vm68, %v2137, 0.0
  %2164 = vadd.xlane.f32.xlu0 %v2163
  %v2165 = vpop.xlane.xlu0 %2164
  %v2166 = vsel %vm75, %v2138, 0.0
  %2167 = vadd.xlane.f32.xlu0 %v2166
  %v2168 = vpop.xlane.xlu0 %2167
  %v2169 = vsel %vm68, %v2139, 0.0
  %2170 = vadd.xlane.f32.xlu0 %v2169
  %v2171 = vpop.xlane.xlu0 %2170
  %v2172 = vsel %vm68, %v2140, 0.0
  %2173 = vadd.xlane.f32.xlu0 %v2172
  %v2174 = vpop.xlane.xlu0 %2173
  %v2175 = vsel %vm75, %v2141, 0.0
  %2176 = vadd.xlane.f32.xlu0 %v2175
  %v2177 = vpop.xlane.xlu0 %2176
  %v2178 = vsel %vm68, %v2142, 0.0
  %2179 = vadd.xlane.f32.xlu0 %v2178
  %v2180 = vpop.xlane.xlu0 %2179
  %v2181 = vsel %vm68, %v2143, 0.0
  %2182 = vadd.xlane.f32.xlu0 %v2181
  %v2183 = vpop.xlane.xlu0 %2182
  %v2184 = vsel %vm75, %v2144, 0.0
  %2185 = vadd.xlane.f32.xlu0 %v2184
  %v2186 = vpop.xlane.xlu0 %2185
  %v2187 = vsel %vm68, %v2145, 0.0
  %2188 = vadd.xlane.f32.xlu0 %v2187
  %v2189 = vpop.xlane.xlu0 %2188
  %v2190 = vsel %vm68, %v2146, 0.0
  %2191 = vadd.xlane.f32.xlu0 %v2190
  %v2192 = vpop.xlane.xlu0 %2191
  %v2193 = vsel %vm75, %v2147, 0.0
  %2194 = vadd.xlane.f32.xlu0 %v2193
  %v2195 = vpop.xlane.xlu0 %2194
  %v2196 = vsel %vm68, %v2148, 0.0
  %2197 = vadd.xlane.f32.xlu0 %v2196
  %v2198 = vpop.xlane.xlu0 %2197
  %v2199 = vsel %vm68, %v2149, 0.0
  %2200 = vadd.xlane.f32.xlu0 %v2199
  %v2201 = vpop.xlane.xlu0 %2200
  %v2202 = vsel %vm75, %v2150, 0.0
  %2203 = vadd.xlane.f32.xlu0 %v2202
  %v2204 = vpop.xlane.xlu0 %2203
  %v2205 = vsel %vm68, %v2151, 0.0
  %2206 = vadd.xlane.f32.xlu0 %v2205
  %v2207 = vpop.xlane.xlu0 %2206
  %v2208 = vsel %vm68, %v2152, 0.0
  %2209 = vadd.xlane.f32.xlu0 %v2208
  %v2210 = vpop.xlane.xlu0 %2209
  %v2211 = vsel %vm75, %v2153, 0.0
  %2212 = vadd.xlane.f32.xlu0 %v2211
  %v2213 = vpop.xlane.xlu0 %2212
  %v2214 = vsel %vm68, %v2154, 0.0
  %2215 = vadd.xlane.f32.xlu0 %v2214
  %v2216 = vpop.xlane.xlu0 %2215
  %v2217 = vsel %vm68, %v2155, 0.0
  %2218 = vadd.xlane.f32.xlu0 %v2217
  %v2219 = vpop.xlane.xlu0 %2218
  %v2220 = vsel %vm75, %v2156, 0.0
  %2221 = vadd.xlane.f32.xlu0 %v2220
  %v2222 = vpop.xlane.xlu0 %2221
  %v2223 = vsel %vm68, %v2157, 0.0
  %2224 = vadd.xlane.f32.xlu0 %v2223
  %v2225 = vpop.xlane.xlu0 %2224
  %v2226 = vsel %vm68, %v2158, 0.0
  %2227 = vadd.xlane.f32.xlu0 %v2226
  %v2228 = vpop.xlane.xlu0 %2227
  %v2229 = vsel %vm75, %v2159, 0.0
  %2230 = vadd.xlane.f32.xlu0 %v2229
  %v2231 = vpop.xlane.xlu0 %2230
  %v2232 = vrcp.pop %v1976
  %v2233 = vmul.f32 %v2162, %v2232
  %v2234 = vrcp.pop %v1979
  %v2235 = vmul.f32 %v2165, %v2234
  %v2236 = vrcp.pop %v1982
  %v2237 = vmul.f32 %v2168, %v2236
  %v2238 = vrcp.pop %v1985
  %v2239 = vmul.f32 %v2171, %v2238
  %v2240 = vrcp.pop %v1988
  %v2241 = vmul.f32 %v2174, %v2240
  %v2242 = vrcp.pop %v1991
  %v2243 = vmul.f32 %v2177, %v2242
  %v2244 = vrcp.pop %v1994
  %v2245 = vmul.f32 %v2180, %v2244
  %v2246 = vrcp.pop %v1997
  %v2247 = vmul.f32 %v2183, %v2246
  %v2248 = vrcp.pop %v2000
  %v2249 = vmul.f32 %v2186, %v2248
  %v2250 = vrcp.pop %v2003
  %v2251 = vmul.f32 %v2189, %v2250
  %v2252 = vrcp.pop %v2006
  %v2253 = vmul.f32 %v2192, %v2252
  %v2254 = vrcp.pop %v2009
  %v2255 = vmul.f32 %v2195, %v2254
  %v2256 = vrcp.pop %v2012
  %v2257 = vmul.f32 %v2198, %v2256
  %v2258 = vrcp.pop %v2015
  %v2259 = vmul.f32 %v2201, %v2258
  %v2260 = vrcp.pop %v2018
  %v2261 = vmul.f32 %v2204, %v2260
  %v2262 = vrcp.pop %v2021
  %v2263 = vmul.f32 %v2207, %v2262
  %v2264 = vrcp.pop %v2024
  %v2265 = vmul.f32 %v2210, %v2264
  %v2266 = vrcp.pop %v2027
  %v2267 = vmul.f32 %v2213, %v2266
  %v2268 = vrcp.pop %v2030
  %v2269 = vmul.f32 %v2216, %v2268
  %v2270 = vrcp.pop %v2033
  %v2271 = vmul.f32 %v2219, %v2270
  %v2272 = vrcp.pop %v2036
  %v2273 = vmul.f32 %v2222, %v2272
  %v2274 = vrcp.pop %v2039
  %v2275 = vmul.f32 %v2225, %v2274
  %v2276 = vrcp.pop %v2042
  %v2277 = vmul.f32 %v2228, %v2276
  %v2278 = vrcp.pop %v2045
  %v2279 = vmul.f32 %v2231, %v2278
  %v2280 = vadd.f32 %v1734, %v2233
  %v2281 = vadd.f32 %v1736, %v2235
  %v2282 = vadd.f32 %v1738, %v2237
  %v2283 = vadd.f32 %v1740, %v2239
  %v2284 = vadd.f32 %v1742, %v2241
  %v2285 = vadd.f32 %v1744, %v2243
  %v2286 = vadd.f32 %v1746, %v2245
  %v2287 = vadd.f32 %v1748, %v2247
  %v2288 = vadd.f32 %v1750, %v2249
  %v2289 = vadd.f32 %v1752, %v2251
  %v2290 = vadd.f32 %v1754, %v2253
  %v2291 = vadd.f32 %v1756, %v2255
  %v2292 = vadd.f32 %v1758, %v2257
  %v2293 = vadd.f32 %v1760, %v2259
  %v2294 = vadd.f32 %v1762, %v2261
  %v2295 = vadd.f32 %v1764, %v2263
  %v2296 = vadd.f32 %v1766, %v2265
  %v2297 = vadd.f32 %v1768, %v2267
  %v2298 = vadd.f32 %v1770, %v2269
  %v2299 = vadd.f32 %v1772, %v2271
  %v2300 = vadd.f32 %v1774, %v2273
  %v2301 = vadd.f32 %v1776, %v2275
  %v2302 = vadd.f32 %v1778, %v2277
  %v2303 = vadd.f32 %v1780, %v2279
  %v2304 = vmul.f32 %v2280, 0.5
  %v2305 = vmul.f32 %v2281, 0.5
  %v2306 = vmul.f32 %v2282, 0.5
  %v2307 = vmul.f32 %v2283, 0.5
  %v2308 = vmul.f32 %v2284, 0.5
  %v2309 = vmul.f32 %v2285, 0.5
  %v2310 = vmul.f32 %v2286, 0.5
  %v2311 = vmul.f32 %v2287, 0.5
  %v2312 = vmul.f32 %v2288, 0.5
  %v2313 = vmul.f32 %v2289, 0.5
  %v2314 = vmul.f32 %v2290, 0.5
  %v2315 = vmul.f32 %v2291, 0.5
  %v2316 = vmul.f32 %v2292, 0.5
  %v2317 = vmul.f32 %v2293, 0.5
  %v2318 = vmul.f32 %v2294, 0.5
  %v2319 = vmul.f32 %v2295, 0.5
  %v2320 = vmul.f32 %v2296, 0.5
  %v2321 = vmul.f32 %v2297, 0.5
  %v2322 = vmul.f32 %v2298, 0.5
  %v2323 = vmul.f32 %v2299, 0.5
  %v2324 = vmul.f32 %v2300, 0.5
  %v2325 = vmul.f32 %v2301, 0.5
  %v2326 = vmul.f32 %v2302, 0.5
  %v2327 = vmul.f32 %v2303, 0.5
  %v2352 = vlaneseq
  %v2353 = vshrl.u32 %v2352, 7
  %v2354 = vsub.s32 %v25, %v2353
  %v2355 = vrot.slane %v2304, %v2354
  %v2356 = vlaneseq
  %v2357 = vshrl.u32 %v2356, 7
  %v2358 = vsub.s32 %v1139, %v2357
  %v2359 = vrot.slane %v2305, %v2358
  %v2360 = vsel %vm1144, %v2359, %v2355
  %v2361 = vlaneseq
  %v2362 = vshrl.u32 %v2361, 7
  %v2363 = vsub.s32 %v1146, %v2362
  %v2364 = vrot.slane %v2306, %v2363
  %v2365 = vsel %vm1151, %v2364, %v2360
  %v2366 = vlaneseq
  %v2367 = vshrl.u32 %v2366, 7
  %v2368 = vsub.s32 %v25, %v2367
  %v2369 = vrot.slane %v2307, %v2368
  %v2370 = vlaneseq
  %v2371 = vshrl.u32 %v2370, 7
  %v2372 = vsub.s32 %v1139, %v2371
  %v2373 = vrot.slane %v2308, %v2372
  %v2374 = vsel %vm1144, %v2373, %v2369
  %v2375 = vlaneseq
  %v2376 = vshrl.u32 %v2375, 7
  %v2377 = vsub.s32 %v1146, %v2376
  %v2378 = vrot.slane %v2309, %v2377
  %v2379 = vsel %vm1151, %v2378, %v2374
  %v2380 = vlaneseq
  %v2381 = vshrl.u32 %v2380, 7
  %v2382 = vsub.s32 %v25, %v2381
  %v2383 = vrot.slane %v2310, %v2382
  %v2384 = vlaneseq
  %v2385 = vshrl.u32 %v2384, 7
  %v2386 = vsub.s32 %v1139, %v2385
  %v2387 = vrot.slane %v2311, %v2386
  %v2388 = vsel %vm1144, %v2387, %v2383
  %v2389 = vlaneseq
  %v2390 = vshrl.u32 %v2389, 7
  %v2391 = vsub.s32 %v1146, %v2390
  %v2392 = vrot.slane %v2312, %v2391
  %v2393 = vsel %vm1151, %v2392, %v2388
  %v2394 = vlaneseq
  %v2395 = vshrl.u32 %v2394, 7
  %v2396 = vsub.s32 %v25, %v2395
  %v2397 = vrot.slane %v2313, %v2396
  %v2398 = vlaneseq
  %v2399 = vshrl.u32 %v2398, 7
  %v2400 = vsub.s32 %v1139, %v2399
  %v2401 = vrot.slane %v2314, %v2400
  %v2402 = vsel %vm1144, %v2401, %v2397
  %v2403 = vlaneseq
  %v2404 = vshrl.u32 %v2403, 7
  %v2405 = vsub.s32 %v1146, %v2404
  %v2406 = vrot.slane %v2315, %v2405
  %v2407 = vsel %vm1151, %v2406, %v2402
  %v2408 = vlaneseq
  %v2409 = vshrl.u32 %v2408, 7
  %v2410 = vsub.s32 %v25, %v2409
  %v2411 = vrot.slane %v2316, %v2410
  %v2412 = vlaneseq
  %v2413 = vshrl.u32 %v2412, 7
  %v2414 = vsub.s32 %v1139, %v2413
  %v2415 = vrot.slane %v2317, %v2414
  %v2416 = vsel %vm1144, %v2415, %v2411
  %v2417 = vlaneseq
  %v2418 = vshrl.u32 %v2417, 7
  %v2419 = vsub.s32 %v1146, %v2418
  %v2420 = vrot.slane %v2318, %v2419
  %v2421 = vsel %vm1151, %v2420, %v2416
  %v2422 = vlaneseq
  %v2423 = vshrl.u32 %v2422, 7
  %v2424 = vsub.s32 %v25, %v2423
  %v2425 = vrot.slane %v2319, %v2424
  %v2426 = vlaneseq
  %v2427 = vshrl.u32 %v2426, 7
  %v2428 = vsub.s32 %v1139, %v2427
  %v2429 = vrot.slane %v2320, %v2428
  %v2430 = vsel %vm1144, %v2429, %v2425
  %v2431 = vlaneseq
  %v2432 = vshrl.u32 %v2431, 7
  %v2433 = vsub.s32 %v1146, %v2432
  %v2434 = vrot.slane %v2321, %v2433
  %v2435 = vsel %vm1151, %v2434, %v2430
  %v2436 = vlaneseq
  %v2437 = vshrl.u32 %v2436, 7
  %v2438 = vsub.s32 %v25, %v2437
  %v2439 = vrot.slane %v2322, %v2438
  %v2440 = vlaneseq
  %v2441 = vshrl.u32 %v2440, 7
  %v2442 = vsub.s32 %v1139, %v2441
  %v2443 = vrot.slane %v2323, %v2442
  %v2444 = vsel %vm1144, %v2443, %v2439
  %v2445 = vlaneseq
  %v2446 = vshrl.u32 %v2445, 7
  %v2447 = vsub.s32 %v1146, %v2446
  %v2448 = vrot.slane %v2324, %v2447
  %v2449 = vsel %vm1151, %v2448, %v2444
  %v2450 = vlaneseq
  %v2451 = vshrl.u32 %v2450, 7
  %v2452 = vsub.s32 %v25, %v2451
  %v2453 = vrot.slane %v2325, %v2452
  %v2454 = vlaneseq
  %v2455 = vshrl.u32 %v2454, 7
  %v2456 = vsub.s32 %v1139, %v2455
  %v2457 = vrot.slane %v2326, %v2456
  %v2458 = vsel %vm1144, %v2457, %v2453
  %v2459 = vlaneseq
  %v2460 = vshrl.u32 %v2459, 7
  %v2461 = vsub.s32 %v1146, %v2460
  %v2462 = vrot.slane %v2327, %v2461
  %v2463 = vsel %vm1151, %v2462, %v2458
  %v2464 = vsel %vm1251, %v2379, %v2365
  %v2465 = vsel %vm1253, %v2393, %v2464
  %v2466 = vsel %vm1255, %v2407, %v2465
  %v2467 = vsel %vm1257, %v2421, %v2466
  %v2468 = vsel %vm1259, %v2435, %v2467
  %v2469 = vsel %vm1261, %v2449, %v2468
  %v2470 = vsel %vm1263, %v2463, %v2469
  %2472 = vst.msk [vmem:[%s5 + $0x8] sm:$0xff] %vm68, %v2470
  %s2473 = scalar_lea.vmem %s3, 384
  %v2474 = vld [vmem:[%s2473] sm:$0xff]
  %v2475 = vld [vmem:[%s2473 + $0x8] sm:$0xff]
  %v2476 = vld [vmem:[%s2473 + $0x10] sm:$0x7f]
  %v2477 = vld [vmem:[%s2473 + $0x18] sm:$0xff]
  %v2478 = vld [vmem:[%s2473 + $0x20] sm:$0xff]
  %v2479 = vld [vmem:[%s2473 + $0x28] sm:$0x7f]
  %v2480 = vld [vmem:[%s2473 + $0x30] sm:$0xff]
  %v2481 = vld [vmem:[%s2473 + $0x38] sm:$0xff]
  %v2482 = vld [vmem:[%s2473 + $0x40] sm:$0x7f]
  %v2483 = vld [vmem:[%s2473 + $0x48] sm:$0xff]
  %v2484 = vld [vmem:[%s2473 + $0x50] sm:$0xff]
  %v2485 = vld [vmem:[%s2473 + $0x58] sm:$0x7f]
  %v2486 = vld [vmem:[%s2473 + $0x60] sm:$0xff]
  %v2487 = vld [vmem:[%s2473 + $0x68] sm:$0xff]
  %v2488 = vld [vmem:[%s2473 + $0x70] sm:$0x7f]
  %v2489 = vld [vmem:[%s2473 + $0x78] sm:$0xff]
  %v2490 = vld [vmem:[%s2473 + $0x80] sm:$0xff]
  %v2491 = vld [vmem:[%s2473 + $0x88] sm:$0x7f]
  %v2492 = vld [vmem:[%s2473 + $0x90] sm:$0xff]
  %v2493 = vld [vmem:[%s2473 + $0x98] sm:$0xff]
  %v2494 = vld [vmem:[%s2473 + $0xa0] sm:$0x7f]
  %v2495 = vsel %vm68, %v2474, inf
  %2496 = vmin.xlane.f32.xlu0 %v2495
  %v2497 = vpop.xlane.xlu0 %2496
  %v2498 = vsel %vm68, %v2475, inf
  %2499 = vmin.xlane.f32.xlu0 %v2498
  %v2500 = vpop.xlane.xlu0 %2499
  %v2501 = vsel %vm75, %v2476, inf
  %2502 = vmin.xlane.f32.xlu0 %v2501
  %v2503 = vpop.xlane.xlu0 %2502
  %v2504 = vsel %vm68, %v2477, inf
  %2505 = vmin.xlane.f32.xlu0 %v2504
  %v2506 = vpop.xlane.xlu0 %2505
  %v2507 = vsel %vm68, %v2478, inf
  %2508 = vmin.xlane.f32.xlu0 %v2507
  %v2509 = vpop.xlane.xlu0 %2508
  %v2510 = vsel %vm75, %v2479, inf
  %2511 = vmin.xlane.f32.xlu0 %v2510
  %v2512 = vpop.xlane.xlu0 %2511
  %v2513 = vsel %vm68, %v2480, inf
  %2514 = vmin.xlane.f32.xlu0 %v2513
  %v2515 = vpop.xlane.xlu0 %2514
  %v2516 = vsel %vm68, %v2481, inf
  %2517 = vmin.xlane.f32.xlu0 %v2516
  %v2518 = vpop.xlane.xlu0 %2517
  %v2519 = vsel %vm75, %v2482, inf
  %2520 = vmin.xlane.f32.xlu0 %v2519
  %v2521 = vpop.xlane.xlu0 %2520
  %v2522 = vsel %vm68, %v2483, inf
  %2523 = vmin.xlane.f32.xlu0 %v2522
  %v2524 = vpop.xlane.xlu0 %2523
  %v2525 = vsel %vm68, %v2484, inf
  %2526 = vmin.xlane.f32.xlu0 %v2525
  %v2527 = vpop.xlane.xlu0 %2526
  %v2528 = vsel %vm75, %v2485, inf
  %2529 = vmin.xlane.f32.xlu0 %v2528
  %v2530 = vpop.xlane.xlu0 %2529
  %v2531 = vsel %vm68, %v2486, inf
  %2532 = vmin.xlane.f32.xlu0 %v2531
  %v2533 = vpop.xlane.xlu0 %2532
  %v2534 = vsel %vm68, %v2487, inf
  %2535 = vmin.xlane.f32.xlu0 %v2534
  %v2536 = vpop.xlane.xlu0 %2535
  %v2537 = vsel %vm75, %v2488, inf
  %2538 = vmin.xlane.f32.xlu0 %v2537
  %v2539 = vpop.xlane.xlu0 %2538
  %v2540 = vsel %vm68, %v2489, inf
  %2541 = vmin.xlane.f32.xlu0 %v2540
  %v2542 = vpop.xlane.xlu0 %2541
  %v2543 = vsel %vm68, %v2490, inf
  %2544 = vmin.xlane.f32.xlu0 %v2543
  %v2545 = vpop.xlane.xlu0 %2544
  %v2546 = vsel %vm75, %v2491, inf
  %2547 = vmin.xlane.f32.xlu0 %v2546
  %v2548 = vpop.xlane.xlu0 %2547
  %v2549 = vsel %vm68, %v2492, inf
  %2550 = vmin.xlane.f32.xlu0 %v2549
  %v2551 = vpop.xlane.xlu0 %2550
  %v2552 = vsel %vm68, %v2493, inf
  %2553 = vmin.xlane.f32.xlu0 %v2552
  %v2554 = vpop.xlane.xlu0 %2553
  %v2555 = vsel %vm75, %v2494, inf
  %2556 = vmin.xlane.f32.xlu0 %v2555
  %v2557 = vpop.xlane.xlu0 %2556
  %vm2558 = vcmp.gt.f32.partialorder %v2497, 0.0
  %vm2559 = vcmp.gt.f32.partialorder %v2500, 0.0
  %vm2560 = vcmp.gt.f32.partialorder %v2503, 0.0
  %vm2561 = vcmp.gt.f32.partialorder %v2506, 0.0
  %vm2562 = vcmp.gt.f32.partialorder %v2509, 0.0
  %vm2563 = vcmp.gt.f32.partialorder %v2512, 0.0
  %vm2564 = vcmp.gt.f32.partialorder %v2515, 0.0
  %vm2565 = vcmp.gt.f32.partialorder %v2518, 0.0
  %vm2566 = vcmp.gt.f32.partialorder %v2521, 0.0
  %vm2567 = vcmp.gt.f32.partialorder %v2524, 0.0
  %vm2568 = vcmp.gt.f32.partialorder %v2527, 0.0
  %vm2569 = vcmp.gt.f32.partialorder %v2530, 0.0
  %vm2570 = vcmp.gt.f32.partialorder %v2533, 0.0
  %vm2571 = vcmp.gt.f32.partialorder %v2536, 0.0
  %vm2572 = vcmp.gt.f32.partialorder %v2539, 0.0
  %vm2573 = vcmp.gt.f32.partialorder %v2542, 0.0
  %vm2574 = vcmp.gt.f32.partialorder %v2545, 0.0
  %vm2575 = vcmp.gt.f32.partialorder %v2548, 0.0
  %vm2576 = vcmp.gt.f32.partialorder %v2551, 0.0
  %vm2577 = vcmp.gt.f32.partialorder %v2554, 0.0
  %vm2578 = vcmp.gt.f32.partialorder %v2557, 0.0
  %v2579 = vsel %vm2558, 0.0, %v2497
  %v2580 = vsel %vm2559, 0.0, %v2500
  %v2581 = vsel %vm2560, 0.0, %v2503
  %v2582 = vsel %vm2561, 0.0, %v2506
  %v2583 = vsel %vm2562, 0.0, %v2509
  %v2584 = vsel %vm2563, 0.0, %v2512
  %v2585 = vsel %vm2564, 0.0, %v2515
  %v2586 = vsel %vm2565, 0.0, %v2518
  %v2587 = vsel %vm2566, 0.0, %v2521
  %v2588 = vsel %vm2567, 0.0, %v2524
  %v2589 = vsel %vm2568, 0.0, %v2527
  %v2590 = vsel %vm2569, 0.0, %v2530
  %v2591 = vsel %vm2570, 0.0, %v2533
  %v2592 = vsel %vm2571, 0.0, %v2536
  %v2593 = vsel %vm2572, 0.0, %v2539
  %v2594 = vsel %vm2573, 0.0, %v2542
  %v2595 = vsel %vm2574, 0.0, %v2545
  %v2596 = vsel %vm2575, 0.0, %v2548
  %v2597 = vsel %vm2576, 0.0, %v2551
  %v2598 = vsel %vm2577, 0.0, %v2554
  %v2599 = vsel %vm2578, 0.0, %v2557
  %v2600 = vsub.f32 %v2474, %v2579
  %v2601 = vsub.f32 %v2475, %v2580
  %v2602 = vsub.f32 %v2476, %v2581
  %v2603 = vsub.f32 %v2477, %v2582
  %v2604 = vsub.f32 %v2478, %v2583
  %v2605 = vsub.f32 %v2479, %v2584
  %v2606 = vsub.f32 %v2480, %v2585
  %v2607 = vsub.f32 %v2481, %v2586
  %v2608 = vsub.f32 %v2482, %v2587
  %v2609 = vsub.f32 %v2483, %v2588
  %v2610 = vsub.f32 %v2484, %v2589
  %v2611 = vsub.f32 %v2485, %v2590
  %v2612 = vsub.f32 %v2486, %v2591
  %v2613 = vsub.f32 %v2487, %v2592
  %v2614 = vsub.f32 %v2488, %v2593
  %v2615 = vsub.f32 %v2489, %v2594
  %v2616 = vsub.f32 %v2490, %v2595
  %v2617 = vsub.f32 %v2491, %v2596
  %v2618 = vsub.f32 %v2492, %v2597
  %v2619 = vsub.f32 %v2493, %v2598
  %v2620 = vsub.f32 %v2494, %v2599
  %v2621 = vcombine.high %v729, %v729
  %v2623 = vunpack.c.l.s4 1966171168
  %v2624 = vunpack.c.0.s8 %v2623
  %v2625 = vlaneseq
  %v2626 = vshrl.u32 %v2625, 7
  %v2627 = vsub.s32 %v2624, %v2626
  %v2628 = vrot.slane %v729, %v2627
  %v2630 = vunpack.c.l.s4 1966171168
  %v2631 = vunpack.c.0.s8 %v2630
  %v2632 = vlaneseq
  %v2633 = vshrl.u32 %v2632, 7
  %v2634 = vsub.s32 %v2631, %v2633
  %v2635 = vrot.slane %v2621, %v2634
  %v2636 = vcombine.high %v2628, %v2628
  %v2637 = vcombine.high %v2635, %v2635
  %v2639 = vunpack.c.l.s4 1966171168
  %v2640 = vunpack.c.0.s8 %v2639
  %v2641 = vlaneseq
  %v2642 = vshrl.u32 %v2641, 7
  %v2643 = vsub.s32 %v2640, %v2642
  %v2644 = vrot.slane %v2628, %v2643
  %v2646 = vunpack.c.l.s4 1966171168
  %v2647 = vunpack.c.0.s8 %v2646
  %v2648 = vlaneseq
  %v2649 = vshrl.u32 %v2648, 7
  %v2650 = vsub.s32 %v2647, %v2649
  %v2651 = vrot.slane %v2635, %v2650
  %v2653 = vunpack.c.l.s4 1966171168
  %v2654 = vunpack.c.0.s8 %v2653
  %v2655 = vlaneseq
  %v2656 = vshrl.u32 %v2655, 7
  %v2657 = vsub.s32 %v2654, %v2656
  %v2658 = vrot.slane %v2636, %v2657
  %v2660 = vunpack.c.l.s4 1966171168
  %v2661 = vunpack.c.0.s8 %v2660
  %v2662 = vlaneseq
  %v2663 = vshrl.u32 %v2662, 7
  %v2664 = vsub.s32 %v2661, %v2663
  %v2665 = vrot.slane %v2637, %v2664
  %v2666 = vcombine.high %v2644, %v2644
  %v2667 = vcombine.high %v2651, %v2651
  %v2668 = vcombine.high %v2658, %v2658
  %vm2669 = vcmp.ne.s32.totalorder %v2644, 0
  %vm2670 = vcmp.ne.s32.totalorder %v2658, 0
  %vm2671 = vcmp.ne.s32.totalorder %v2666, 0
  %vm2672 = vcmp.ne.s32.totalorder %v2668, 0
  %vm2673 = vcmp.ne.s32.totalorder %v2651, 0
  %vm2674 = vcmp.ne.s32.totalorder %v2665, 0
  %vm2675 = vcmp.ne.s32.totalorder %v2667, 0
  %v2676 = vsel %vm2669, 1, 0
  %v2677 = vsel %vm2670, 1, 0
  %v2678 = vsel %vm2671, 1, 0
  %v2679 = vsel %vm2672, 1, 0
  %v2680 = vsel %vm2673, 1, 0
  %v2681 = vsel %vm2674, 1, 0
  %v2682 = vsel %vm2675, 1, 0
  %v2683 = vlaneseq
  %v2684 = vshrl.u32 %v2683, 7
  %v2685 = vsub.s32 0, %v2684
  %v2686 = vrot.slane %v2676, %v2685
  %v2687 = vlaneseq
  %v2688 = vshrl.u32 %v2687, 7
  %v2689 = vsub.s32 0, %v2688
  %v2690 = vrot.slane %v2677, %v2689
  %v2691 = vlaneseq
  %v2692 = vshrl.u32 %v2691, 7
  %v2693 = vsub.s32 0, %v2692
  %v2694 = vrot.slane %v2678, %v2693
  %v2695 = vlaneseq
  %v2696 = vshrl.u32 %v2695, 7
  %v2697 = vsub.s32 0, %v2696
  %v2698 = vrot.slane %v2679, %v2697
  %v2699 = vlaneseq
  %v2700 = vshrl.u32 %v2699, 7
  %v2701 = vsub.s32 0, %v2700
  %v2702 = vrot.slane %v2680, %v2701
  %v2703 = vlaneseq
  %v2704 = vshrl.u32 %v2703, 7
  %v2705 = vsub.s32 0, %v2704
  %v2706 = vrot.slane %v2681, %v2705
  %v2707 = vlaneseq
  %v2708 = vshrl.u32 %v2707, 7
  %v2709 = vsub.s32 0, %v2708
  %v2710 = vrot.slane %v2682, %v2709
  %vm2711 = vcmp.eq.s32.totalorder %v2686, 1
  %vm2712 = vcmp.eq.s32.totalorder %v2690, 1
  %vm2713 = vcmp.eq.s32.totalorder %v2694, 1
  %vm2714 = vcmp.eq.s32.totalorder %v2698, 1
  %vm2715 = vcmp.eq.s32.totalorder %v2702, 1
  %vm2716 = vcmp.eq.s32.totalorder %v2706, 1
  %vm2717 = vcmp.eq.s32.totalorder %v2710, 1
  %v2718 = vsel %vm2711, %v2600, 0.0
  %v2719 = vsel %vm2711, %v2601, 0.0
  %v2720 = vsel %vm2711, %v2602, 0.0
  %v2721 = vsel %vm2712, %v2603, 0.0
  %v2722 = vsel %vm2712, %v2604, 0.0
  %v2723 = vsel %vm2712, %v2605, 0.0
  %v2724 = vsel %vm2713, %v2606, 0.0
  %v2725 = vsel %vm2713, %v2607, 0.0
  %v2726 = vsel %vm2713, %v2608, 0.0
  %v2727 = vsel %vm2714, %v2609, 0.0
  %v2728 = vsel %vm2714, %v2610, 0.0
  %v2729 = vsel %vm2714, %v2611, 0.0
  %v2730 = vsel %vm2715, %v2612, 0.0
  %v2731 = vsel %vm2715, %v2613, 0.0
  %v2732 = vsel %vm2715, %v2614, 0.0
  %v2733 = vsel %vm2716, %v2615, 0.0
  %v2734 = vsel %vm2716, %v2616, 0.0
  %v2735 = vsel %vm2716, %v2617, 0.0
  %v2736 = vsel %vm2717, %v2618, 0.0
  %v2737 = vsel %vm2717, %v2619, 0.0
  %v2738 = vsel %vm2717, %v2620, 0.0
  %v2739 = vsel %vm68, %v2718, 0.0
  %2740 = vadd.xlane.f32.xlu0 %v2739
  %v2741 = vpop.xlane.xlu0 %2740
  %v2742 = vsel %vm68, %v2719, 0.0
  %2743 = vadd.xlane.f32.xlu0 %v2742
  %v2744 = vpop.xlane.xlu0 %2743
  %v2745 = vsel %vm75, %v2720, 0.0
  %2746 = vadd.xlane.f32.xlu0 %v2745
  %v2747 = vpop.xlane.xlu0 %2746
  %v2748 = vsel %vm68, %v2721, 0.0
  %2749 = vadd.xlane.f32.xlu0 %v2748
  %v2750 = vpop.xlane.xlu0 %2749
  %v2751 = vsel %vm68, %v2722, 0.0
  %2752 = vadd.xlane.f32.xlu0 %v2751
  %v2753 = vpop.xlane.xlu0 %2752
  %v2754 = vsel %vm75, %v2723, 0.0
  %2755 = vadd.xlane.f32.xlu0 %v2754
  %v2756 = vpop.xlane.xlu0 %2755
  %v2757 = vsel %vm68, %v2724, 0.0
  %2758 = vadd.xlane.f32.xlu0 %v2757
  %v2759 = vpop.xlane.xlu0 %2758
  %v2760 = vsel %vm68, %v2725, 0.0
  %2761 = vadd.xlane.f32.xlu0 %v2760
  %v2762 = vpop.xlane.xlu0 %2761
  %v2763 = vsel %vm75, %v2726, 0.0
  %2764 = vadd.xlane.f32.xlu0 %v2763
  %v2765 = vpop.xlane.xlu0 %2764
  %v2766 = vsel %vm68, %v2727, 0.0
  %2767 = vadd.xlane.f32.xlu0 %v2766
  %v2768 = vpop.xlane.xlu0 %2767
  %v2769 = vsel %vm68, %v2728, 0.0
  %2770 = vadd.xlane.f32.xlu0 %v2769
  %v2771 = vpop.xlane.xlu0 %2770
  %v2772 = vsel %vm75, %v2729, 0.0
  %2773 = vadd.xlane.f32.xlu0 %v2772
  %v2774 = vpop.xlane.xlu0 %2773
  %v2775 = vsel %vm68, %v2730, 0.0
  %2776 = vadd.xlane.f32.xlu0 %v2775
  %v2777 = vpop.xlane.xlu0 %2776
  %v2778 = vsel %vm68, %v2731, 0.0
  %2779 = vadd.xlane.f32.xlu0 %v2778
  %v2780 = vpop.xlane.xlu0 %2779
  %v2781 = vsel %vm75, %v2732, 0.0
  %2782 = vadd.xlane.f32.xlu0 %v2781
  %v2783 = vpop.xlane.xlu0 %2782
  %v2784 = vsel %vm68, %v2733, 0.0
  %2785 = vadd.xlane.f32.xlu0 %v2784
  %v2786 = vpop.xlane.xlu0 %2785
  %v2787 = vsel %vm68, %v2734, 0.0
  %2788 = vadd.xlane.f32.xlu0 %v2787
  %v2789 = vpop.xlane.xlu0 %2788
  %v2790 = vsel %vm75, %v2735, 0.0
  %2791 = vadd.xlane.f32.xlu0 %v2790
  %v2792 = vpop.xlane.xlu0 %2791
  %v2793 = vsel %vm68, %v2736, 0.0
  %2794 = vadd.xlane.f32.xlu0 %v2793
  %v2795 = vpop.xlane.xlu0 %2794
  %v2796 = vsel %vm68, %v2737, 0.0
  %2797 = vadd.xlane.f32.xlu0 %v2796
  %v2798 = vpop.xlane.xlu0 %2797
  %v2799 = vsel %vm75, %v2738, 0.0
  %2800 = vadd.xlane.f32.xlu0 %v2799
  %v2801 = vpop.xlane.xlu0 %2800
  %v2802 = vmul.f32 %v2718, %v41
  %v2803 = vmul.f32 %v2719, %v42
  %v2804 = vmul.f32 %v2720, %v43
  %v2805 = vmul.f32 %v2721, %v41
  %v2806 = vmul.f32 %v2722, %v42
  %v2807 = vmul.f32 %v2723, %v43
  %v2808 = vmul.f32 %v2724, %v41
  %v2809 = vmul.f32 %v2725, %v42
  %v2810 = vmul.f32 %v2726, %v43
  %v2811 = vmul.f32 %v2727, %v41
  %v2812 = vmul.f32 %v2728, %v42
  %v2813 = vmul.f32 %v2729, %v43
  %v2814 = vmul.f32 %v2730, %v41
  %v2815 = vmul.f32 %v2731, %v42
  %v2816 = vmul.f32 %v2732, %v43
  %v2817 = vmul.f32 %v2733, %v41
  %v2818 = vmul.f32 %v2734, %v42
  %v2819 = vmul.f32 %v2735, %v43
  %v2820 = vmul.f32 %v2736, %v41
  %v2821 = vmul.f32 %v2737, %v42
  %v2822 = vmul.f32 %v2738, %v43
  %v2823 = vsel %vm68, %v2802, 0.0
  %2824 = vadd.xlane.f32.xlu0 %v2823
  %v2825 = vpop.xlane.xlu0 %2824
  %v2826 = vsel %vm68, %v2803, 0.0
  %2827 = vadd.xlane.f32.xlu0 %v2826
  %v2828 = vpop.xlane.xlu0 %2827
  %v2829 = vsel %vm75, %v2804, 0.0
  %2830 = vadd.xlane.f32.xlu0 %v2829
  %v2831 = vpop.xlane.xlu0 %2830
  %v2832 = vsel %vm68, %v2805, 0.0
  %2833 = vadd.xlane.f32.xlu0 %v2832
  %v2834 = vpop.xlane.xlu0 %2833
  %v2835 = vsel %vm68, %v2806, 0.0
  %2836 = vadd.xlane.f32.xlu0 %v2835
  %v2837 = vpop.xlane.xlu0 %2836
  %v2838 = vsel %vm75, %v2807, 0.0
  %2839 = vadd.xlane.f32.xlu0 %v2838
  %v2840 = vpop.xlane.xlu0 %2839
  %v2841 = vsel %vm68, %v2808, 0.0
  %2842 = vadd.xlane.f32.xlu0 %v2841
  %v2843 = vpop.xlane.xlu0 %2842
  %v2844 = vsel %vm68, %v2809, 0.0
  %2845 = vadd.xlane.f32.xlu0 %v2844
  %v2846 = vpop.xlane.xlu0 %2845
  %v2847 = vsel %vm75, %v2810, 0.0
  %2848 = vadd.xlane.f32.xlu0 %v2847
  %v2849 = vpop.xlane.xlu0 %2848
  %v2850 = vsel %vm68, %v2811, 0.0
  %2851 = vadd.xlane.f32.xlu0 %v2850
  %v2852 = vpop.xlane.xlu0 %2851
  %v2853 = vsel %vm68, %v2812, 0.0
  %2854 = vadd.xlane.f32.xlu0 %v2853
  %v2855 = vpop.xlane.xlu0 %2854
  %v2856 = vsel %vm75, %v2813, 0.0
  %2857 = vadd.xlane.f32.xlu0 %v2856
  %v2858 = vpop.xlane.xlu0 %2857
  %v2859 = vsel %vm68, %v2814, 0.0
  %2860 = vadd.xlane.f32.xlu0 %v2859
  %v2861 = vpop.xlane.xlu0 %2860
  %v2862 = vsel %vm68, %v2815, 0.0
  %2863 = vadd.xlane.f32.xlu0 %v2862
  %v2864 = vpop.xlane.xlu0 %2863
  %v2865 = vsel %vm75, %v2816, 0.0
  %2866 = vadd.xlane.f32.xlu0 %v2865
  %v2867 = vpop.xlane.xlu0 %2866
  %v2868 = vsel %vm68, %v2817, 0.0
  %2869 = vadd.xlane.f32.xlu0 %v2868
  %v2870 = vpop.xlane.xlu0 %2869
  %v2871 = vsel %vm68, %v2818, 0.0
  %2872 = vadd.xlane.f32.xlu0 %v2871
  %v2873 = vpop.xlane.xlu0 %2872
  %v2874 = vsel %vm75, %v2819, 0.0
  %2875 = vadd.xlane.f32.xlu0 %v2874
  %v2876 = vpop.xlane.xlu0 %2875
  %v2877 = vsel %vm68, %v2820, 0.0
  %2878 = vadd.xlane.f32.xlu0 %v2877
  %v2879 = vpop.xlane.xlu0 %2878
  %v2880 = vsel %vm68, %v2821, 0.0
  %2881 = vadd.xlane.f32.xlu0 %v2880
  %v2882 = vpop.xlane.xlu0 %2881
  %v2883 = vsel %vm75, %v2822, 0.0
  %2884 = vadd.xlane.f32.xlu0 %v2883
  %v2885 = vpop.xlane.xlu0 %2884
  %v2886 = vrcp.pop %v2741
  %v2887 = vmul.f32 %v2825, %v2886
  %v2888 = vrcp.pop %v2744
  %v2889 = vmul.f32 %v2828, %v2888
  %v2890 = vrcp.pop %v2747
  %v2891 = vmul.f32 %v2831, %v2890
  %v2892 = vrcp.pop %v2750
  %v2893 = vmul.f32 %v2834, %v2892
  %v2894 = vrcp.pop %v2753
  %v2895 = vmul.f32 %v2837, %v2894
  %v2896 = vrcp.pop %v2756
  %v2897 = vmul.f32 %v2840, %v2896
  %v2898 = vrcp.pop %v2759
  %v2899 = vmul.f32 %v2843, %v2898
  %v2900 = vrcp.pop %v2762
  %v2901 = vmul.f32 %v2846, %v2900
  %v2902 = vrcp.pop %v2765
  %v2903 = vmul.f32 %v2849, %v2902
  %v2904 = vrcp.pop %v2768
  %v2905 = vmul.f32 %v2852, %v2904
  %v2906 = vrcp.pop %v2771
  %v2907 = vmul.f32 %v2855, %v2906
  %v2908 = vrcp.pop %v2774
  %v2909 = vmul.f32 %v2858, %v2908
  %v2910 = vrcp.pop %v2777
  %v2911 = vmul.f32 %v2861, %v2910
  %v2912 = vrcp.pop %v2780
  %v2913 = vmul.f32 %v2864, %v2912
  %v2914 = vrcp.pop %v2783
  %v2915 = vmul.f32 %v2867, %v2914
  %v2916 = vrcp.pop %v2786
  %v2917 = vmul.f32 %v2870, %v2916
  %v2918 = vrcp.pop %v2789
  %v2919 = vmul.f32 %v2873, %v2918
  %v2920 = vrcp.pop %v2792
  %v2921 = vmul.f32 %v2876, %v2920
  %v2922 = vrcp.pop %v2795
  %v2923 = vmul.f32 %v2879, %v2922
  %v2924 = vrcp.pop %v2798
  %v2925 = vmul.f32 %v2882, %v2924
  %v2926 = vrcp.pop %v2801
  %v2927 = vmul.f32 %v2885, %v2926
  %s2928 = scalar_lea.vmem %s4, 384
  %v2929 = vld [vmem:[%s2928] sm:$0xff]
  %v2930 = vld [vmem:[%s2928 + $0x8] sm:$0xff]
  %v2931 = vld [vmem:[%s2928 + $0x10] sm:$0x7f]
  %v2932 = vld [vmem:[%s2928 + $0x18] sm:$0xff]
  %v2933 = vld [vmem:[%s2928 + $0x20] sm:$0xff]
  %v2934 = vld [vmem:[%s2928 + $0x28] sm:$0x7f]
  %v2935 = vld [vmem:[%s2928 + $0x30] sm:$0xff]
  %v2936 = vld [vmem:[%s2928 + $0x38] sm:$0xff]
  %v2937 = vld [vmem:[%s2928 + $0x40] sm:$0x7f]
  %v2938 = vld [vmem:[%s2928 + $0x48] sm:$0xff]
  %v2939 = vld [vmem:[%s2928 + $0x50] sm:$0xff]
  %v2940 = vld [vmem:[%s2928 + $0x58] sm:$0x7f]
  %v2941 = vld [vmem:[%s2928 + $0x60] sm:$0xff]
  %v2942 = vld [vmem:[%s2928 + $0x68] sm:$0xff]
  %v2943 = vld [vmem:[%s2928 + $0x70] sm:$0x7f]
  %v2944 = vld [vmem:[%s2928 + $0x78] sm:$0xff]
  %v2945 = vld [vmem:[%s2928 + $0x80] sm:$0xff]
  %v2946 = vld [vmem:[%s2928 + $0x88] sm:$0x7f]
  %v2947 = vld [vmem:[%s2928 + $0x90] sm:$0xff]
  %v2948 = vld [vmem:[%s2928 + $0x98] sm:$0xff]
  %v2949 = vld [vmem:[%s2928 + $0xa0] sm:$0x7f]
  %v2950 = vsel %vm68, %v2929, inf
  %2951 = vmin.xlane.f32.xlu0 %v2950
  %v2952 = vpop.xlane.xlu0 %2951
  %v2953 = vsel %vm68, %v2930, inf
  %2954 = vmin.xlane.f32.xlu0 %v2953
  %v2955 = vpop.xlane.xlu0 %2954
  %v2956 = vsel %vm75, %v2931, inf
  %2957 = vmin.xlane.f32.xlu0 %v2956
  %v2958 = vpop.xlane.xlu0 %2957
  %v2959 = vsel %vm68, %v2932, inf
  %2960 = vmin.xlane.f32.xlu0 %v2959
  %v2961 = vpop.xlane.xlu0 %2960
  %v2962 = vsel %vm68, %v2933, inf
  %2963 = vmin.xlane.f32.xlu0 %v2962
  %v2964 = vpop.xlane.xlu0 %2963
  %v2965 = vsel %vm75, %v2934, inf
  %2966 = vmin.xlane.f32.xlu0 %v2965
  %v2967 = vpop.xlane.xlu0 %2966
  %v2968 = vsel %vm68, %v2935, inf
  %2969 = vmin.xlane.f32.xlu0 %v2968
  %v2970 = vpop.xlane.xlu0 %2969
  %v2971 = vsel %vm68, %v2936, inf
  %2972 = vmin.xlane.f32.xlu0 %v2971
  %v2973 = vpop.xlane.xlu0 %2972
  %v2974 = vsel %vm75, %v2937, inf
  %2975 = vmin.xlane.f32.xlu0 %v2974
  %v2976 = vpop.xlane.xlu0 %2975
  %v2977 = vsel %vm68, %v2938, inf
  %2978 = vmin.xlane.f32.xlu0 %v2977
  %v2979 = vpop.xlane.xlu0 %2978
  %v2980 = vsel %vm68, %v2939, inf
  %2981 = vmin.xlane.f32.xlu0 %v2980
  %v2982 = vpop.xlane.xlu0 %2981
  %v2983 = vsel %vm75, %v2940, inf
  %2984 = vmin.xlane.f32.xlu0 %v2983
  %v2985 = vpop.xlane.xlu0 %2984
  %v2986 = vsel %vm68, %v2941, inf
  %2987 = vmin.xlane.f32.xlu0 %v2986
  %v2988 = vpop.xlane.xlu0 %2987
  %v2989 = vsel %vm68, %v2942, inf
  %2990 = vmin.xlane.f32.xlu0 %v2989
  %v2991 = vpop.xlane.xlu0 %2990
  %v2992 = vsel %vm75, %v2943, inf
  %2993 = vmin.xlane.f32.xlu0 %v2992
  %v2994 = vpop.xlane.xlu0 %2993
  %v2995 = vsel %vm68, %v2944, inf
  %2996 = vmin.xlane.f32.xlu0 %v2995
  %v2997 = vpop.xlane.xlu0 %2996
  %v2998 = vsel %vm68, %v2945, inf
  %2999 = vmin.xlane.f32.xlu0 %v2998
  %v3000 = vpop.xlane.xlu0 %2999
  %v3001 = vsel %vm75, %v2946, inf
  %3002 = vmin.xlane.f32.xlu0 %v3001
  %v3003 = vpop.xlane.xlu0 %3002
  %v3004 = vsel %vm68, %v2947, inf
  %3005 = vmin.xlane.f32.xlu0 %v3004
  %v3006 = vpop.xlane.xlu0 %3005
  %v3007 = vsel %vm68, %v2948, inf
  %3008 = vmin.xlane.f32.xlu0 %v3007
  %v3009 = vpop.xlane.xlu0 %3008
  %v3010 = vsel %vm75, %v2949, inf
  %3011 = vmin.xlane.f32.xlu0 %v3010
  %v3012 = vpop.xlane.xlu0 %3011
  %vm3013 = vcmp.gt.f32.partialorder %v2952, 0.0
  %vm3014 = vcmp.gt.f32.partialorder %v2955, 0.0
  %vm3015 = vcmp.gt.f32.partialorder %v2958, 0.0
  %vm3016 = vcmp.gt.f32.partialorder %v2961, 0.0
  %vm3017 = vcmp.gt.f32.partialorder %v2964, 0.0
  %vm3018 = vcmp.gt.f32.partialorder %v2967, 0.0
  %vm3019 = vcmp.gt.f32.partialorder %v2970, 0.0
  %vm3020 = vcmp.gt.f32.partialorder %v2973, 0.0
  %vm3021 = vcmp.gt.f32.partialorder %v2976, 0.0
  %vm3022 = vcmp.gt.f32.partialorder %v2979, 0.0
  %vm3023 = vcmp.gt.f32.partialorder %v2982, 0.0
  %vm3024 = vcmp.gt.f32.partialorder %v2985, 0.0
  %vm3025 = vcmp.gt.f32.partialorder %v2988, 0.0
  %vm3026 = vcmp.gt.f32.partialorder %v2991, 0.0
  %vm3027 = vcmp.gt.f32.partialorder %v2994, 0.0
  %vm3028 = vcmp.gt.f32.partialorder %v2997, 0.0
  %vm3029 = vcmp.gt.f32.partialorder %v3000, 0.0
  %vm3030 = vcmp.gt.f32.partialorder %v3003, 0.0
  %vm3031 = vcmp.gt.f32.partialorder %v3006, 0.0
  %vm3032 = vcmp.gt.f32.partialorder %v3009, 0.0
  %vm3033 = vcmp.gt.f32.partialorder %v3012, 0.0
  %v3034 = vsel %vm3013, 0.0, %v2952
  %v3035 = vsel %vm3014, 0.0, %v2955
  %v3036 = vsel %vm3015, 0.0, %v2958
  %v3037 = vsel %vm3016, 0.0, %v2961
  %v3038 = vsel %vm3017, 0.0, %v2964
  %v3039 = vsel %vm3018, 0.0, %v2967
  %v3040 = vsel %vm3019, 0.0, %v2970
  %v3041 = vsel %vm3020, 0.0, %v2973
  %v3042 = vsel %vm3021, 0.0, %v2976
  %v3043 = vsel %vm3022, 0.0, %v2979
  %v3044 = vsel %vm3023, 0.0, %v2982
  %v3045 = vsel %vm3024, 0.0, %v2985
  %v3046 = vsel %vm3025, 0.0, %v2988
  %v3047 = vsel %vm3026, 0.0, %v2991
  %v3048 = vsel %vm3027, 0.0, %v2994
  %v3049 = vsel %vm3028, 0.0, %v2997
  %v3050 = vsel %vm3029, 0.0, %v3000
  %v3051 = vsel %vm3030, 0.0, %v3003
  %v3052 = vsel %vm3031, 0.0, %v3006
  %v3053 = vsel %vm3032, 0.0, %v3009
  %v3054 = vsel %vm3033, 0.0, %v3012
  %v3055 = vsub.f32 %v2929, %v3034
  %v3056 = vsub.f32 %v2930, %v3035
  %v3057 = vsub.f32 %v2931, %v3036
  %v3058 = vsub.f32 %v2932, %v3037
  %v3059 = vsub.f32 %v2933, %v3038
  %v3060 = vsub.f32 %v2934, %v3039
  %v3061 = vsub.f32 %v2935, %v3040
  %v3062 = vsub.f32 %v2936, %v3041
  %v3063 = vsub.f32 %v2937, %v3042
  %v3064 = vsub.f32 %v2938, %v3043
  %v3065 = vsub.f32 %v2939, %v3044
  %v3066 = vsub.f32 %v2940, %v3045
  %v3067 = vsub.f32 %v2941, %v3046
  %v3068 = vsub.f32 %v2942, %v3047
  %v3069 = vsub.f32 %v2943, %v3048
  %v3070 = vsub.f32 %v2944, %v3049
  %v3071 = vsub.f32 %v2945, %v3050
  %v3072 = vsub.f32 %v2946, %v3051
  %v3073 = vsub.f32 %v2947, %v3052
  %v3074 = vsub.f32 %v2948, %v3053
  %v3075 = vsub.f32 %v2949, %v3054
  %v3076 = vsel %vm730, %v3055, 0.0
  %v3077 = vsel %vm731, %v3056, 0.0
  %v3078 = vsel %vm732, %v3057, 0.0
  %v3079 = vsel %vm730, %v3058, 0.0
  %v3080 = vsel %vm731, %v3059, 0.0
  %v3081 = vsel %vm732, %v3060, 0.0
  %v3082 = vsel %vm730, %v3061, 0.0
  %v3083 = vsel %vm731, %v3062, 0.0
  %v3084 = vsel %vm732, %v3063, 0.0
  %v3085 = vsel %vm730, %v3064, 0.0
  %v3086 = vsel %vm731, %v3065, 0.0
  %v3087 = vsel %vm732, %v3066, 0.0
  %v3088 = vsel %vm730, %v3067, 0.0
  %v3089 = vsel %vm731, %v3068, 0.0
  %v3090 = vsel %vm732, %v3069, 0.0
  %v3091 = vsel %vm730, %v3070, 0.0
  %v3092 = vsel %vm731, %v3071, 0.0
  %v3093 = vsel %vm732, %v3072, 0.0
  %v3094 = vsel %vm730, %v3073, 0.0
  %v3095 = vsel %vm731, %v3074, 0.0
  %v3096 = vsel %vm732, %v3075, 0.0
  %v3097 = vsel %vm68, %v3076, 0.0
  %3098 = vadd.xlane.f32.xlu0 %v3097
  %v3099 = vpop.xlane.xlu0 %3098
  %v3100 = vsel %vm68, %v3077, 0.0
  %3101 = vadd.xlane.f32.xlu0 %v3100
  %v3102 = vpop.xlane.xlu0 %3101
  %v3103 = vsel %vm75, %v3078, 0.0
  %3104 = vadd.xlane.f32.xlu0 %v3103
  %v3105 = vpop.xlane.xlu0 %3104
  %v3106 = vsel %vm68, %v3079, 0.0
  %3107 = vadd.xlane.f32.xlu0 %v3106
  %v3108 = vpop.xlane.xlu0 %3107
  %v3109 = vsel %vm68, %v3080, 0.0
  %3110 = vadd.xlane.f32.xlu0 %v3109
  %v3111 = vpop.xlane.xlu0 %3110
  %v3112 = vsel %vm75, %v3081, 0.0
  %3113 = vadd.xlane.f32.xlu0 %v3112
  %v3114 = vpop.xlane.xlu0 %3113
  %v3115 = vsel %vm68, %v3082, 0.0
  %3116 = vadd.xlane.f32.xlu0 %v3115
  %v3117 = vpop.xlane.xlu0 %3116
  %v3118 = vsel %vm68, %v3083, 0.0
  %3119 = vadd.xlane.f32.xlu0 %v3118
  %v3120 = vpop.xlane.xlu0 %3119
  %v3121 = vsel %vm75, %v3084, 0.0
  %3122 = vadd.xlane.f32.xlu0 %v3121
  %v3123 = vpop.xlane.xlu0 %3122
  %v3124 = vsel %vm68, %v3085, 0.0
  %3125 = vadd.xlane.f32.xlu0 %v3124
  %v3126 = vpop.xlane.xlu0 %3125
  %v3127 = vsel %vm68, %v3086, 0.0
  %3128 = vadd.xlane.f32.xlu0 %v3127
  %v3129 = vpop.xlane.xlu0 %3128
  %v3130 = vsel %vm75, %v3087, 0.0
  %3131 = vadd.xlane.f32.xlu0 %v3130
  %v3132 = vpop.xlane.xlu0 %3131
  %v3133 = vsel %vm68, %v3088, 0.0
  %3134 = vadd.xlane.f32.xlu0 %v3133
  %v3135 = vpop.xlane.xlu0 %3134
  %v3136 = vsel %vm68, %v3089, 0.0
  %3137 = vadd.xlane.f32.xlu0 %v3136
  %v3138 = vpop.xlane.xlu0 %3137
  %v3139 = vsel %vm75, %v3090, 0.0
  %3140 = vadd.xlane.f32.xlu0 %v3139
  %v3141 = vpop.xlane.xlu0 %3140
  %v3142 = vsel %vm68, %v3091, 0.0
  %3143 = vadd.xlane.f32.xlu0 %v3142
  %v3144 = vpop.xlane.xlu0 %3143
  %v3145 = vsel %vm68, %v3092, 0.0
  %3146 = vadd.xlane.f32.xlu0 %v3145
  %v3147 = vpop.xlane.xlu0 %3146
  %v3148 = vsel %vm75, %v3093, 0.0
  %3149 = vadd.xlane.f32.xlu0 %v3148
  %v3150 = vpop.xlane.xlu0 %3149
  %v3151 = vsel %vm68, %v3094, 0.0
  %3152 = vadd.xlane.f32.xlu0 %v3151
  %v3153 = vpop.xlane.xlu0 %3152
  %v3154 = vsel %vm68, %v3095, 0.0
  %3155 = vadd.xlane.f32.xlu0 %v3154
  %v3156 = vpop.xlane.xlu0 %3155
  %v3157 = vsel %vm75, %v3096, 0.0
  %3158 = vadd.xlane.f32.xlu0 %v3157
  %v3159 = vpop.xlane.xlu0 %3158
  %v3161 = vcombine.high %v40, %v40
  %v3163 = vunpack.c.l.s4 1966171168
  %v3164 = vunpack.c.0.s8 %v3163
  %v3165 = vlaneseq
  %v3166 = vshrl.u32 %v3165, 7
  %v3167 = vsub.s32 %v3164, %v3166
  %v3168 = vrot.slane %v40, %v3167
  %v3170 = vunpack.c.l.s4 1966171168
  %v3171 = vunpack.c.0.s8 %v3170
  %v3172 = vlaneseq
  %v3173 = vshrl.u32 %v3172, 7
  %v3174 = vsub.s32 %v3171, %v3173
  %v3175 = vrot.slane %v3161, %v3174
  %v3176 = vcombine.high %v3168, %v3168
  %v3177 = vcombine.high %v3175, %v3175
  %v3179 = vunpack.c.l.s4 1966171168
  %v3180 = vunpack.c.0.s8 %v3179
  %v3181 = vlaneseq
  %v3182 = vshrl.u32 %v3181, 7
  %v3183 = vsub.s32 %v3180, %v3182
  %v3184 = vrot.slane %v3168, %v3183
  %v3186 = vunpack.c.l.s4 1966171168
  %v3187 = vunpack.c.0.s8 %v3186
  %v3188 = vlaneseq
  %v3189 = vshrl.u32 %v3188, 7
  %v3190 = vsub.s32 %v3187, %v3189
  %v3191 = vrot.slane %v3175, %v3190
  %v3193 = vunpack.c.l.s4 1966171168
  %v3194 = vunpack.c.0.s8 %v3193
  %v3195 = vlaneseq
  %v3196 = vshrl.u32 %v3195, 7
  %v3197 = vsub.s32 %v3194, %v3196
  %v3198 = vrot.slane %v3176, %v3197
  %v3200 = vunpack.c.l.s4 1966171168
  %v3201 = vunpack.c.0.s8 %v3200
  %v3202 = vlaneseq
  %v3203 = vshrl.u32 %v3202, 7
  %v3204 = vsub.s32 %v3201, %v3203
  %v3205 = vrot.slane %v3177, %v3204
  %v3206 = vcombine.high %v3184, %v3184
  %v3207 = vcombine.high %v3191, %v3191
  %v3208 = vcombine.high %v3198, %v3198
  %v3209 = vlaneseq
  %v3210 = vshrl.u32 %v3209, 7
  %v3211 = vsub.s32 0, %v3210
  %v3212 = vrot.slane %v3184, %v3211
  %v3213 = vlaneseq
  %v3214 = vshrl.u32 %v3213, 7
  %v3215 = vsub.s32 0, %v3214
  %v3216 = vrot.slane %v3198, %v3215
  %v3217 = vlaneseq
  %v3218 = vshrl.u32 %v3217, 7
  %v3219 = vsub.s32 0, %v3218
  %v3220 = vrot.slane %v3206, %v3219
  %v3221 = vlaneseq
  %v3222 = vshrl.u32 %v3221, 7
  %v3223 = vsub.s32 0, %v3222
  %v3224 = vrot.slane %v3208, %v3223
  %v3225 = vlaneseq
  %v3226 = vshrl.u32 %v3225, 7
  %v3227 = vsub.s32 0, %v3226
  %v3228 = vrot.slane %v3191, %v3227
  %v3229 = vlaneseq
  %v3230 = vshrl.u32 %v3229, 7
  %v3231 = vsub.s32 0, %v3230
  %v3232 = vrot.slane %v3205, %v3231
  %v3233 = vlaneseq
  %v3234 = vshrl.u32 %v3233, 7
  %v3235 = vsub.s32 0, %v3234
  %v3236 = vrot.slane %v3207, %v3235
  %v3244 = vmul.f32 %v3076, %v3212
  %v3245 = vmul.f32 %v3077, %v3212
  %v3246 = vmul.f32 %v3078, %v3212
  %v3247 = vmul.f32 %v3079, %v3216
  %v3248 = vmul.f32 %v3080, %v3216
  %v3249 = vmul.f32 %v3081, %v3216
  %v3250 = vmul.f32 %v3082, %v3220
  %v3251 = vmul.f32 %v3083, %v3220
  %v3252 = vmul.f32 %v3084, %v3220
  %v3253 = vmul.f32 %v3085, %v3224
  %v3254 = vmul.f32 %v3086, %v3224
  %v3255 = vmul.f32 %v3087, %v3224
  %v3256 = vmul.f32 %v3088, %v3228
  %v3257 = vmul.f32 %v3089, %v3228
  %v3258 = vmul.f32 %v3090, %v3228
  %v3259 = vmul.f32 %v3091, %v3232
  %v3260 = vmul.f32 %v3092, %v3232
  %v3261 = vmul.f32 %v3093, %v3232
  %v3262 = vmul.f32 %v3094, %v3236
  %v3263 = vmul.f32 %v3095, %v3236
  %v3264 = vmul.f32 %v3096, %v3236
  %v3265 = vsel %vm68, %v3244, 0.0
  %3266 = vadd.xlane.f32.xlu0 %v3265
  %v3267 = vpop.xlane.xlu0 %3266
  %v3268 = vsel %vm68, %v3245, 0.0
  %3269 = vadd.xlane.f32.xlu0 %v3268
  %v3270 = vpop.xlane.xlu0 %3269
  %v3271 = vsel %vm75, %v3246, 0.0
  %3272 = vadd.xlane.f32.xlu0 %v3271
  %v3273 = vpop.xlane.xlu0 %3272
  %v3274 = vsel %vm68, %v3247, 0.0
  %3275 = vadd.xlane.f32.xlu0 %v3274
  %v3276 = vpop.xlane.xlu0 %3275
  %v3277 = vsel %vm68, %v3248, 0.0
  %3278 = vadd.xlane.f32.xlu0 %v3277
  %v3279 = vpop.xlane.xlu0 %3278
  %v3280 = vsel %vm75, %v3249, 0.0
  %3281 = vadd.xlane.f32.xlu0 %v3280
  %v3282 = vpop.xlane.xlu0 %3281
  %v3283 = vsel %vm68, %v3250, 0.0
  %3284 = vadd.xlane.f32.xlu0 %v3283
  %v3285 = vpop.xlane.xlu0 %3284
  %v3286 = vsel %vm68, %v3251, 0.0
  %3287 = vadd.xlane.f32.xlu0 %v3286
  %v3288 = vpop.xlane.xlu0 %3287
  %v3289 = vsel %vm75, %v3252, 0.0
  %3290 = vadd.xlane.f32.xlu0 %v3289
  %v3291 = vpop.xlane.xlu0 %3290
  %v3292 = vsel %vm68, %v3253, 0.0
  %3293 = vadd.xlane.f32.xlu0 %v3292
  %v3294 = vpop.xlane.xlu0 %3293
  %v3295 = vsel %vm68, %v3254, 0.0
  %3296 = vadd.xlane.f32.xlu0 %v3295
  %v3297 = vpop.xlane.xlu0 %3296
  %v3298 = vsel %vm75, %v3255, 0.0
  %3299 = vadd.xlane.f32.xlu0 %v3298
  %v3300 = vpop.xlane.xlu0 %3299
  %v3301 = vsel %vm68, %v3256, 0.0
  %3302 = vadd.xlane.f32.xlu0 %v3301
  %v3303 = vpop.xlane.xlu0 %3302
  %v3304 = vsel %vm68, %v3257, 0.0
  %3305 = vadd.xlane.f32.xlu0 %v3304
  %v3306 = vpop.xlane.xlu0 %3305
  %v3307 = vsel %vm75, %v3258, 0.0
  %3308 = vadd.xlane.f32.xlu0 %v3307
  %v3309 = vpop.xlane.xlu0 %3308
  %v3310 = vsel %vm68, %v3259, 0.0
  %3311 = vadd.xlane.f32.xlu0 %v3310
  %v3312 = vpop.xlane.xlu0 %3311
  %v3313 = vsel %vm68, %v3260, 0.0
  %3314 = vadd.xlane.f32.xlu0 %v3313
  %v3315 = vpop.xlane.xlu0 %3314
  %v3316 = vsel %vm75, %v3261, 0.0
  %3317 = vadd.xlane.f32.xlu0 %v3316
  %v3318 = vpop.xlane.xlu0 %3317
  %v3319 = vsel %vm68, %v3262, 0.0
  %3320 = vadd.xlane.f32.xlu0 %v3319
  %v3321 = vpop.xlane.xlu0 %3320
  %v3322 = vsel %vm68, %v3263, 0.0
  %3323 = vadd.xlane.f32.xlu0 %v3322
  %v3324 = vpop.xlane.xlu0 %3323
  %v3325 = vsel %vm75, %v3264, 0.0
  %3326 = vadd.xlane.f32.xlu0 %v3325
  %v3327 = vpop.xlane.xlu0 %3326
  %v3328 = vrcp.pop %v3099
  %v3329 = vmul.f32 %v3267, %v3328
  %v3330 = vrcp.pop %v3102
  %v3331 = vmul.f32 %v3270, %v3330
  %v3332 = vrcp.pop %v3105
  %v3333 = vmul.f32 %v3273, %v3332
  %v3334 = vrcp.pop %v3108
  %v3335 = vmul.f32 %v3276, %v3334
  %v3336 = vrcp.pop %v3111
  %v3337 = vmul.f32 %v3279, %v3336
  %v3338 = vrcp.pop %v3114
  %v3339 = vmul.f32 %v3282, %v3338
  %v3340 = vrcp.pop %v3117
  %v3341 = vmul.f32 %v3285, %v3340
  %v3342 = vrcp.pop %v3120
  %v3343 = vmul.f32 %v3288, %v3342
  %v3344 = vrcp.pop %v3123
  %v3345 = vmul.f32 %v3291, %v3344
  %v3346 = vrcp.pop %v3126
  %v3347 = vmul.f32 %v3294, %v3346
  %v3348 = vrcp.pop %v3129
  %v3349 = vmul.f32 %v3297, %v3348
  %v3350 = vrcp.pop %v3132
  %v3351 = vmul.f32 %v3300, %v3350
  %v3352 = vrcp.pop %v3135
  %v3353 = vmul.f32 %v3303, %v3352
  %v3354 = vrcp.pop %v3138
  %v3355 = vmul.f32 %v3306, %v3354
  %v3356 = vrcp.pop %v3141
  %v3357 = vmul.f32 %v3309, %v3356
  %v3358 = vrcp.pop %v3144
  %v3359 = vmul.f32 %v3312, %v3358
  %v3360 = vrcp.pop %v3147
  %v3361 = vmul.f32 %v3315, %v3360
  %v3362 = vrcp.pop %v3150
  %v3363 = vmul.f32 %v3318, %v3362
  %v3364 = vrcp.pop %v3153
  %v3365 = vmul.f32 %v3321, %v3364
  %v3366 = vrcp.pop %v3156
  %v3367 = vmul.f32 %v3324, %v3366
  %v3368 = vrcp.pop %v3159
  %v3369 = vmul.f32 %v3327, %v3368
  %v3370 = vadd.f32 %v2887, %v3329
  %v3371 = vadd.f32 %v2889, %v3331
  %v3372 = vadd.f32 %v2891, %v3333
  %v3373 = vadd.f32 %v2893, %v3335
  %v3374 = vadd.f32 %v2895, %v3337
  %v3375 = vadd.f32 %v2897, %v3339
  %v3376 = vadd.f32 %v2899, %v3341
  %v3377 = vadd.f32 %v2901, %v3343
  %v3378 = vadd.f32 %v2903, %v3345
  %v3379 = vadd.f32 %v2905, %v3347
  %v3380 = vadd.f32 %v2907, %v3349
  %v3381 = vadd.f32 %v2909, %v3351
  %v3382 = vadd.f32 %v2911, %v3353
  %v3383 = vadd.f32 %v2913, %v3355
  %v3384 = vadd.f32 %v2915, %v3357
  %v3385 = vadd.f32 %v2917, %v3359
  %v3386 = vadd.f32 %v2919, %v3361
  %v3387 = vadd.f32 %v2921, %v3363
  %v3388 = vadd.f32 %v2923, %v3365
  %v3389 = vadd.f32 %v2925, %v3367
  %v3390 = vadd.f32 %v2927, %v3369
  %v3391 = vmul.f32 %v3370, 0.5
  %v3392 = vmul.f32 %v3371, 0.5
  %v3393 = vmul.f32 %v3372, 0.5
  %v3394 = vmul.f32 %v3373, 0.5
  %v3395 = vmul.f32 %v3374, 0.5
  %v3396 = vmul.f32 %v3375, 0.5
  %v3397 = vmul.f32 %v3376, 0.5
  %v3398 = vmul.f32 %v3377, 0.5
  %v3399 = vmul.f32 %v3378, 0.5
  %v3400 = vmul.f32 %v3379, 0.5
  %v3401 = vmul.f32 %v3380, 0.5
  %v3402 = vmul.f32 %v3381, 0.5
  %v3403 = vmul.f32 %v3382, 0.5
  %v3404 = vmul.f32 %v3383, 0.5
  %v3405 = vmul.f32 %v3384, 0.5
  %v3406 = vmul.f32 %v3385, 0.5
  %v3407 = vmul.f32 %v3386, 0.5
  %v3408 = vmul.f32 %v3387, 0.5
  %v3409 = vmul.f32 %v3388, 0.5
  %v3410 = vmul.f32 %v3389, 0.5
  %v3411 = vmul.f32 %v3390, 0.5
  %v3433 = vlaneseq
  %v3434 = vshrl.u32 %v3433, 7
  %v3435 = vsub.s32 %v25, %v3434
  %v3436 = vrot.slane %v3391, %v3435
  %v3437 = vlaneseq
  %v3438 = vshrl.u32 %v3437, 7
  %v3439 = vsub.s32 %v1139, %v3438
  %v3440 = vrot.slane %v3392, %v3439
  %v3441 = vsel %vm1144, %v3440, %v3436
  %v3442 = vlaneseq
  %v3443 = vshrl.u32 %v3442, 7
  %v3444 = vsub.s32 %v1146, %v3443
  %v3445 = vrot.slane %v3393, %v3444
  %v3446 = vsel %vm1151, %v3445, %v3441
  %v3447 = vlaneseq
  %v3448 = vshrl.u32 %v3447, 7
  %v3449 = vsub.s32 %v25, %v3448
  %v3450 = vrot.slane %v3394, %v3449
  %v3451 = vlaneseq
  %v3452 = vshrl.u32 %v3451, 7
  %v3453 = vsub.s32 %v1139, %v3452
  %v3454 = vrot.slane %v3395, %v3453
  %v3455 = vsel %vm1144, %v3454, %v3450
  %v3456 = vlaneseq
  %v3457 = vshrl.u32 %v3456, 7
  %v3458 = vsub.s32 %v1146, %v3457
  %v3459 = vrot.slane %v3396, %v3458
  %v3460 = vsel %vm1151, %v3459, %v3455
  %v3461 = vlaneseq
  %v3462 = vshrl.u32 %v3461, 7
  %v3463 = vsub.s32 %v25, %v3462
  %v3464 = vrot.slane %v3397, %v3463
  %v3465 = vlaneseq
  %v3466 = vshrl.u32 %v3465, 7
  %v3467 = vsub.s32 %v1139, %v3466
  %v3468 = vrot.slane %v3398, %v3467
  %v3469 = vsel %vm1144, %v3468, %v3464
  %v3470 = vlaneseq
  %v3471 = vshrl.u32 %v3470, 7
  %v3472 = vsub.s32 %v1146, %v3471
  %v3473 = vrot.slane %v3399, %v3472
  %v3474 = vsel %vm1151, %v3473, %v3469
  %v3475 = vlaneseq
  %v3476 = vshrl.u32 %v3475, 7
  %v3477 = vsub.s32 %v25, %v3476
  %v3478 = vrot.slane %v3400, %v3477
  %v3479 = vlaneseq
  %v3480 = vshrl.u32 %v3479, 7
  %v3481 = vsub.s32 %v1139, %v3480
  %v3482 = vrot.slane %v3401, %v3481
  %v3483 = vsel %vm1144, %v3482, %v3478
  %v3484 = vlaneseq
  %v3485 = vshrl.u32 %v3484, 7
  %v3486 = vsub.s32 %v1146, %v3485
  %v3487 = vrot.slane %v3402, %v3486
  %v3488 = vsel %vm1151, %v3487, %v3483
  %v3489 = vlaneseq
  %v3490 = vshrl.u32 %v3489, 7
  %v3491 = vsub.s32 %v25, %v3490
  %v3492 = vrot.slane %v3403, %v3491
  %v3493 = vlaneseq
  %v3494 = vshrl.u32 %v3493, 7
  %v3495 = vsub.s32 %v1139, %v3494
  %v3496 = vrot.slane %v3404, %v3495
  %v3497 = vsel %vm1144, %v3496, %v3492
  %v3498 = vlaneseq
  %v3499 = vshrl.u32 %v3498, 7
  %v3500 = vsub.s32 %v1146, %v3499
  %v3501 = vrot.slane %v3405, %v3500
  %v3502 = vsel %vm1151, %v3501, %v3497
  %v3503 = vlaneseq
  %v3504 = vshrl.u32 %v3503, 7
  %v3505 = vsub.s32 %v25, %v3504
  %v3506 = vrot.slane %v3406, %v3505
  %v3507 = vlaneseq
  %v3508 = vshrl.u32 %v3507, 7
  %v3509 = vsub.s32 %v1139, %v3508
  %v3510 = vrot.slane %v3407, %v3509
  %v3511 = vsel %vm1144, %v3510, %v3506
  %v3512 = vlaneseq
  %v3513 = vshrl.u32 %v3512, 7
  %v3514 = vsub.s32 %v1146, %v3513
  %v3515 = vrot.slane %v3408, %v3514
  %v3516 = vsel %vm1151, %v3515, %v3511
  %v3517 = vlaneseq
  %v3518 = vshrl.u32 %v3517, 7
  %v3519 = vsub.s32 %v25, %v3518
  %v3520 = vrot.slane %v3409, %v3519
  %v3521 = vlaneseq
  %v3522 = vshrl.u32 %v3521, 7
  %v3523 = vsub.s32 %v1139, %v3522
  %v3524 = vrot.slane %v3410, %v3523
  %v3525 = vsel %vm1144, %v3524, %v3520
  %v3526 = vlaneseq
  %v3527 = vshrl.u32 %v3526, 7
  %v3528 = vsub.s32 %v1146, %v3527
  %v3529 = vrot.slane %v3411, %v3528
  %v3530 = vsel %vm1151, %v3529, %v3525
  %v3531 = vsel %vm1251, %v3460, %v3446
  %v3532 = vsel %vm1253, %v3474, %v3531
  %v3533 = vsel %vm1255, %v3488, %v3532
  %v3534 = vsel %vm1257, %v3502, %v3533
  %v3535 = vsel %vm1259, %v3516, %v3534
  %v3536 = vsel %vm1261, %v3530, %v3535
  %3538 = vst.msk [vmem:[%s5 + $0x10] sm:$0x7f] %vm75, %v3536
  // Predicated region
  $region22: #{mygat2_forward.1} parent=0 // pred_check
    _
  $region23: #{mygat2_forward.1} parent=0 // pred_check_branch
    %3540 = sbr.rel (0) target = $region25
  $region24: #{mygat2_forward.1} parent=0 // pred_region
    _
  $region25: #{mygat2_forward.1} parent=0 // pred_fallthru
    _
  // Predicated region
  $region26: #{mygat2_forward.1} parent=0 // pred_check
    _
  $region27: #{mygat2_forward.1} parent=0 // pred_check_branch
    %3542 = sbr.rel (0) target = $region29
  $region28: #{mygat2_forward.1} parent=0 // pred_region
    _
  $region29: #{mygat2_forward.1} parent=0 // pred_fallthru
    _

</llo_original>
